<compile_context>
chip_gen: v6e
topology: v6e:2x2x1
jax: 0.10.0
libtpu: 0.0.40
codegen_flags: <defaults>
</compile_context>

<pallas_src>
import functools

import jax
import jax.numpy as jnp
from jax.experimental import pallas as pl
from jax.experimental.pallas import tpu as pltpu

EPS = 1e-5          # nn.BatchNorm2d default
LANE = 128          # lane-dense channel padding


def _round_up(x, m):
    return (x + m - 1) // m * m


def _default_vmem_limit():
    # Derive the scoped-VMEM budget from the actual chip (v5e/v6e: 128 MiB,
    # v7x: 64 MiB per TC); fall back to a conservative constant.
    try:
        cap = int(pltpu.get_tpu_info().vmem_capacity_bytes)
        return min(max(int(cap * 0.75), 32 * 1024 * 1024), 112 * 1024 * 1024)
    except Exception:
        return 48 * 1024 * 1024


VMEM_LIMIT = _default_vmem_limit()


def _vec(v, cp):
    """(C,) parameter -> lane-dense f32 (1, cp)."""
    v = v.astype(jnp.float32).reshape(1, -1)
    return jnp.pad(v, ((0, 0), (0, cp - v.shape[1])))


# ----------------------------------------------------------------------------
# Kernel 1: conv1 (k x k, folded taps) + optional folded 1x1 projection
#           shortcut + per-image partial BN statistics.
# ----------------------------------------------------------------------------
def _conv1_proj_kernel(*refs, k, ho, wo, proj, r0, c0):
    if proj:
        (x_ref, w_ref, ws_ref,
         y_ref, s_ref, q_ref, ysc_ref, ssc_ref, qsc_ref) = refs
    else:
        x_ref, w_ref, y_ref, s_ref, q_ref = refs

    # im2col-in-VMEM: k*k lane-aligned shifted slabs -> one wide-K MXU matmul.
    taps = [x_ref[0, dh:dh + ho, dw:dw + wo, :]
            for dh in range(k) for dw in range(k)]
    lhs = jnp.concatenate(taps, axis=-1).reshape(ho * wo, -1)
    acc = jnp.dot(lhs, w_ref[...], preferred_element_type=jnp.float32)

    y_ref[...] = acc[None].astype(y_ref.dtype)
    s_ref[...] = jnp.sum(acc, axis=0, keepdims=True)[None]          # partial
    q_ref[...] = jnp.sum(acc * acc, axis=0, keepdims=True)[None]    # partial

    if proj:
        # 1x1 projection shortcut on the same input block; the relevant tap /
        # phase channel group is selected by zero rows in ws (no lane slicing).
        xs = x_ref[0, r0:r0 + ho, c0:c0 + wo, :].reshape(ho * wo, -1)
        accs = jnp.dot(xs, ws_ref[...], preferred_element_type=jnp.float32)
        ysc_ref[...] = accs[None].astype(ysc_ref.dtype)
        ssc_ref[...] = jnp.sum(accs, axis=0, keepdims=True)[None]
        qsc_ref[...] = jnp.sum(accs * accs, axis=0, keepdims=True)[None]


def conv1_shortcut(x_in, w1_mat, ws_mat, *, k, ho, wo, cp, r0, c0):
    n, hp, wp, cin_pad = x_in.shape
    hw = ho * wo
    proj = ws_mat is not None

    row_out = pl.BlockSpec((1, hw, cp), lambda i: (i, 0, 0))
    stat_out = pl.BlockSpec((1, 1, cp), lambda i: (i, 0, 0))
    in_specs = [pl.BlockSpec((1, hp, wp, cin_pad), lambda i: (i, 0, 0, 0)),
                pl.BlockSpec((k * k * cin_pad, cp), lambda i: (0, 0))]
    inputs = [x_in, w1_mat]
    out_shape = [jax.ShapeDtypeStruct((n, hw, cp), jnp.bfloat16),
                 jax.ShapeDtypeStruct((n, 1, cp), jnp.float32),
                 jax.ShapeDtypeStruct((n, 1, cp), jnp.float32)]
    out_specs = [row_out, stat_out, stat_out]
    if proj:
        in_specs.append(pl.BlockSpec((cin_pad, cp), lambda i: (0, 0)))
        inputs.append(ws_mat)
        out_shape += [jax.ShapeDtypeStruct((n, hw, cp), jnp.bfloat16),
                      jax.ShapeDtypeStruct((n, 1, cp), jnp.float32),
                      jax.ShapeDtypeStruct((n, 1, cp), jnp.float32)]
        out_specs += [row_out, stat_out, stat_out]

    kernel = functools.partial(_conv1_proj_kernel, k=k, ho=ho, wo=wo,
                               proj=proj, r0=r0, c0=c0)
    flops = 2 * n * hw * (k * k * cin_pad) * cp
    if proj:
        flops += 2 * n * hw * cin_pad * cp
    outs = pl.pallas_call(
        kernel,
        out_shape=tuple(out_shape),
        grid=(n,),
        in_specs=in_specs,
        out_specs=tuple(out_specs),
        compiler_params=pltpu.CompilerParams(
            dimension_semantics=("parallel",),       # partial stats -> megacore OK
            vmem_limit_bytes=VMEM_LIMIT),
        cost_estimate=pl.CostEstimate(
            flops=flops, transcendentals=0,
            bytes_accessed=int(x_in.size * 2 + w1_mat.size * 2
                               + n * hw * cp * 2 * (2 if proj else 1))),
    )(*inputs)

    if proj:
        y1, s1, q1, ysc, ssc, qsc = outs
        return ((y1, (jnp.sum(s1, axis=0), jnp.sum(q1, axis=0))),
                (ysc, (jnp.sum(ssc, axis=0), jnp.sum(qsc, axis=0))))
    y1, s1, q1 = outs
    return (y1, (jnp.sum(s1, axis=0), jnp.sum(q1, axis=0))), None


# ----------------------------------------------------------------------------
# Kernel 2: conv2 (3x3, stride 1, pad 1) with BN1+ReLU fused onto its input,
#           plus per-image partial BN2 statistics.
# ----------------------------------------------------------------------------
def _conv2_bn1_kernel(y1_ref, s1_ref, q1_ref, g1_ref, b1_ref, w_ref,
                      y2_ref, s2_ref, q2_ref, xpad_ref, *, ho, wo, inv_m):
    cp = y2_ref.shape[-1]

    # BN1 affine from global batch statistics (sum / sumsq reduced by XLA).
    mean = s1_ref[...] * inv_m
    var = jnp.maximum(q1_ref[...] * inv_m - mean * mean, 0.0)
    scale = jax.lax.rsqrt(var + EPS) * g1_ref[...]
    shift = b1_ref[...] - mean * scale
    v = jnp.maximum(y1_ref[0].astype(jnp.float32) * scale + shift, 0.0)

    # Zero-bordered VMEM scratch provides conv2's spatial padding in-kernel
    # (border re-zeroed every step -> safe under "parallel"/megacore split).
    zr = jnp.zeros((1, wo + 2, cp), xpad_ref.dtype)
    zc = jnp.zeros((ho + 2, 1, cp), xpad_ref.dtype)
    xpad_ref[0:1, :, :] = zr
    xpad_ref[ho + 1:ho + 2, :, :] = zr
    xpad_ref[:, 0:1, :] = zc
    xpad_ref[:, wo + 1:wo + 2, :] = zc
    xpad_ref[1:1 + ho, 1:1 + wo, :] = v.reshape(ho, wo, cp).astype(xpad_ref.dtype)

    # im2col-in-VMEM: 9 lane-aligned shifted slabs -> one (ho*wo, 9*cp) LHS.
    taps = [xpad_ref[dh:dh + ho, dw:dw + wo, :]
            for dh in range(3) for dw in range(3)]
    lhs = jnp.concatenate(taps, axis=-1).reshape(ho * wo, 9 * cp)
    acc = jnp.dot(lhs, w_ref[...], preferred_element_type=jnp.float32)

    y2_ref[...] = acc[None].astype(y2_ref.dtype)
    s2_ref[...] = jnp.sum(acc, axis=0, keepdims=True)[None]
    q2_ref[...] = jnp.sum(acc * acc, axis=0, keepdims=True)[None]


def conv2_fused_bn1(y1, stats1, g1, b1, w2_mat, *, n, ho, wo, cp, m_total):
    hw = ho * wo
    vec = pl.BlockSpec((1, cp), lambda i: (0, 0))
    kernel = functools.partial(_conv2_bn1_kernel, ho=ho, wo=wo,
                               inv_m=1.0 / float(m_total))
    y2, s2p, q2p = pl.pallas_call(
        kernel,
        out_shape=(jax.ShapeDtypeStruct((n, hw, cp), jnp.bfloat16),
                   jax.ShapeDtypeStruct((n, 1, cp), jnp.float32),
                   jax.ShapeDtypeStruct((n, 1, cp), jnp.float32)),
        grid=(n,),
        in_specs=[pl.BlockSpec((1, hw, cp), lambda i: (i, 0, 0)),
                  vec, vec, vec, vec,
                  pl.BlockSpec((9 * cp, cp), lambda i: (0, 0))],
        out_specs=(pl.BlockSpec((1, hw, cp), lambda i: (i, 0, 0)),
                   pl.BlockSpec((1, 1, cp), lambda i: (i, 0, 0)),
                   pl.BlockSpec((1, 1, cp), lambda i: (i, 0, 0))),
        scratch_shapes=[pltpu.VMEM((ho + 2, wo + 2, cp), jnp.bfloat16)],
        compiler_params=pltpu.CompilerParams(
            dimension_semantics=("parallel",),
            vmem_limit_bytes=VMEM_LIMIT),
        cost_estimate=pl.CostEstimate(
            flops=2 * n * hw * 9 * cp * cp, transcendentals=2 * n * cp,
            bytes_accessed=int(2 * n * hw * cp * 2 + 9 * cp * cp * 2
                               + 2 * n * cp * 4)),
    )(y1, stats1[0], stats1[1], g1, b1, w2_mat)
    return y2, (jnp.sum(s2p, axis=0), jnp.sum(q2p, axis=0))


# ----------------------------------------------------------------------------
# Kernel 3: BN2 + residual (identity, or BN of the 1x1 projection) + ReLU.
# ----------------------------------------------------------------------------
def _bn_residual_relu_kernel(*refs, inv_m, res_mode):
    if res_mode == "proj":
        (y_ref, s_ref, q_ref, g_ref, b_ref,
         r_ref, rs_ref, rq_ref, rg_ref, rb_ref, o_ref) = refs
    elif res_mode == "identity":
        y_ref, s_ref, q_ref, g_ref, b_ref, r_ref, o_ref = refs
    else:
        y_ref, s_ref, q_ref, g_ref, b_ref, o_ref = refs

    def affine(s_r, q_r, g_r, b_r):
        mean = s_r[...] * inv_m
        var = jnp.maximum(q_r[...] * inv_m - mean * mean, 0.0)
        scale = jax.lax.rsqrt(var + EPS) * g_r[...]
        return scale, b_r[...] - mean * scale

    sc, sh = affine(s_ref, q_ref, g_ref, b_ref)
    out = y_ref[0].astype(jnp.float32) * sc + sh
    if res_mode == "proj":
        sc2, sh2 = affine(rs_ref, rq_ref, rg_ref, rb_ref)
        out = out + r_ref[0].astype(jnp.float32) * sc2 + sh2
    elif res_mode == "identity":
        out = out + r_ref[0].astype(jnp.float32)
    o_ref[...] = jnp.maximum(out, 0.0)[None].astype(o_ref.dtype)


def bn2_residual_relu(y2, stats2, g2, b2, *, n, hw, cp, m_total,
                      res=None, res_stats=None, res_gamma=None, res_beta=None):
    row = pl.BlockSpec((1, hw, cp), lambda i: (i, 0, 0))
    vec = pl.BlockSpec((1, cp), lambda i: (0, 0))
    inputs = [y2, stats2[0], stats2[1], g2, b2]
    specs = [row, vec, vec, vec, vec]
    if res is not None and res_stats is not None:
        res_mode = "proj"
        inputs += [res, res_stats[0], res_stats[1], res_gamma, res_beta]
        specs += [row, vec, vec, vec, vec]
    elif res is not None:
        res_mode = "identity"
        inputs += [res]
        specs += [row]
    else:
        res_mode = "none"

    kernel = functools.partial(_bn_residual_relu_kernel,
                               inv_m=1.0 / float(m_total), res_mode=res_mode)
    return pl.pallas_call(
        kernel,
        out_shape=jax.ShapeDtypeStruct((n, hw, cp), jnp.float32),
        grid=(n,),
        in_specs=specs,
        out_specs=row,
        compiler_params=pltpu.CompilerParams(
            dimension_semantics=("parallel",),
            vmem_limit_bytes=VMEM_LIMIT),
    )(*inputs)


# ----------------------------------------------------------------------------
# BasicBlock forward (NCHW in, NCHW out) — matches the PyTorch module
# (training-mode BatchNorm statistics).
# ----------------------------------------------------------------------------
def basic_block_forward(x_nchw, params, *, stride):
    x = jnp.transpose(x_nchw, (0, 2, 3, 1)).astype(jnp.float32)   # NCHW -> NHWC
    n, h, w_sp, in_planes = x.shape
    planes = params["w1"].shape[0]
    cp = _round_up(planes, LANE)
    k, s, p = 3, stride, 1
    ho = (h + 2 * p - k) // s + 1
    wo = (w_sp + 2 * p - k) // s + 1
    m_total = n * ho * wo
    has_proj = (s != 1) or (in_planes != planes)

    # ---- conv1 operands (spatial pad; space-to-depth when stride > 1) -------
    xp = jnp.pad(x, ((0, 0), (p, p), (p, p), (0, 0)))
    w1 = jnp.transpose(params["w1"], (2, 3, 1, 0))                # (k,k,cin,cout)
    if s > 1:
        # stride-s kxk conv == stride-1 kp x kp conv on a space-to-depth input
        # with s*s*cin channels and zero-padded, phase-rearranged weights.
        kp = -(-k // s)
        th, tw = s * (ho + kp - 1), s * (wo + kp - 1)
        xp = jnp.pad(xp, ((0, 0), (0, th - xp.shape[1]),
                          (0, tw - xp.shape[2]), (0, 0)))
        x_in = xp.reshape(n, th // s, s, tw // s, s, in_planes)
        x_in = x_in.transpose(0, 1, 3, 2, 4, 5)
        x_in = x_in.reshape(n, th // s, tw // s, s * s * in_planes)
        rows = []
        for a in range(kp):
            cols = []
            for b in range(kp):
                taps = []
                for ph in range(s):
                    for pw in range(s):
                        dh, dw = s * a + ph, s * b + pw
                        taps.append(w1[dh, dw] if (dh < k and dw < k)
                                    else jnp.zeros_like(w1[0, 0]))
                cols.append(jnp.concatenate(taps, axis=0))        # (s*s*cin, cout)
            rows.append(jnp.stack(cols, axis=0))
        w1_eff, k_eff, cin_eff = jnp.stack(rows, axis=0), kp, s * s * in_planes
        r0 = c0 = 0
        proj_ch0 = (s + 1) * in_planes      # phase (1,1): x[s*a, s*b] with pad=1
    else:
        x_in, w1_eff, k_eff, cin_eff = xp, w1, k, in_planes
        r0 = c0 = p                          # centre tap: x[a, b]
        proj_ch0 = 0

    cin_pad = _round_up(cin_eff, LANE)       # lane-aligned per-tap K blocks
    x_in = jnp.pad(x_in, ((0, 0), (0, 0), (0, 0),
                          (0, cin_pad - cin_eff))).astype(jnp.bfloat16)
    w1_mat = jnp.pad(w1_eff, ((0, 0), (0, 0), (0, cin_pad - cin_eff),
                              (0, cp - planes)))
    w1_mat = w1_mat.reshape(k_eff * k_eff * cin_pad, cp).astype(jnp.bfloat16)

    ws_mat = None
    if has_proj:
        ws2d = params["ws"][:, :, 0, 0].T.astype(jnp.float32)     # (cin, planes)
        ws_mat = jnp.zeros((cin_pad, cp), jnp.float32)
        ws_mat = ws_mat.at[proj_ch0:proj_ch0 + in_planes, :planes].set(ws2d)
        ws_mat = ws_mat.astype(jnp.bfloat16)

    # ---- kernel 1: conv1 (+ folded 1x1 projection shortcut) + partial stats -
    (y1, st1), proj_out = conv1_shortcut(x_in, w1_mat, ws_mat, k=k_eff, ho=ho,
                                         wo=wo, cp=cp, r0=r0, c0=c0)

    # ---- kernel 2: conv2 with fused BN1+ReLU on its input + partial stats ---
    w2 = jnp.transpose(params["w2"], (2, 3, 1, 0))
    w2_mat = jnp.pad(w2, ((0, 0), (0, 0), (0, cp - planes), (0, cp - planes)))
    w2_mat = w2_mat.reshape(9 * cp, cp).astype(jnp.bfloat16)
    y2, st2 = conv2_fused_bn1(y1, st1, _vec(params["g1"], cp),
                              _vec(params["b1"], cp), w2_mat,
                              n=n, ho=ho, wo=wo, cp=cp, m_total=m_total)

    # ---- kernel 3: BN2 + residual (+ BN of projection) + ReLU ---------------
    if has_proj:
        ysc, stsc = proj_out
        out = bn2_residual_relu(y2, st2, _vec(params["g2"], cp),
                                _vec(params["b2"], cp),
                                n=n, hw=ho * wo, cp=cp, m_total=m_total,
                                res=ysc, res_stats=stsc,
                                res_gamma=_vec(params["gs"], cp),
                                res_beta=_vec(params["bs"], cp))
    else:
        res = jnp.pad(x.reshape(n, h * w_sp, in_planes),
                      ((0, 0), (0, 0), (0, cp - in_planes)))       # identity, f32
        out = bn2_residual_relu(y2, st2, _vec(params["g2"], cp),
                                _vec(params["b2"], cp),
                                n=n, hw=ho * wo, cp=cp, m_total=m_total, res=res)

    out = out.reshape(n, ho, wo, cp)[:, :, :, :planes]
    return jnp.transpose(out, (0, 3, 1, 2))                       # NHWC -> NCHW


# ----------------------------------------------------------------------------
# Pure-JAX reference (f32) of the PyTorch module's forward.
# ----------------------------------------------------------------------------
def _reference_forward(x_nchw, params, *, stride):
    def conv(x, w, s, p):
        return jax.lax.conv_general_dilated(
            x, w, (s, s), [(p, p), (p, p)],
            dimension_numbers=("NCHW", "OIHW", "NCHW"))

    def bn(y, g, b):
        mean = jnp.mean(y, axis=(0, 2, 3), keepdims=True)
        var = jnp.var(y, axis=(0, 2, 3), keepdims=True)
        return ((y - mean) * jax.lax.rsqrt(var + EPS)
                * g.reshape(1, -1, 1, 1) + b.reshape(1, -1, 1, 1))

    in_planes = x_nchw.shape[1]
    planes = params["w1"].shape[0]
    out = jax.nn.relu(bn(conv(x_nchw, params["w1"], stride, 1),
                         params["g1"], params["b1"]))
    out = bn(conv(out, params["w2"], 1, 1), params["g2"], params["b2"])
    if stride != 1 or in_planes != planes:
        sc = bn(conv(x_nchw, params["ws"], stride, 0),
                params["gs"], params["bs"])
    else:
        sc = x_nchw
    return jax.nn.relu(out + sc)


# ----------------------------------------------------------------------------
if __name__ == "__main__":
    in_planes, planes, stride = 4, 8, 2
    N, H, W = 2, 16, 16

    key = jax.random.PRNGKey(0)
    ks = jax.random.split(key, 10)
    x = jax.random.normal(ks[0], (N, in_planes, H, W), jnp.float32)

    params = {
        # conv1: Conv2d(in_planes, planes, 3, stride, pad=1, bias=False) + BN
        "w1": 0.1 * jax.random.normal(ks[1], (planes, in_planes, 3, 3), jnp.float32),
        "g1": 1.0 + 0.1 * jax.random.normal(ks[2], (planes,), jnp.float32),
        "b1": 0.1 * jax.random.normal(ks[3], (planes,), jnp.float32),
        # conv2: Conv2d(planes, planes, 3, 1, pad=1, bias=False) + BN
        "w2": 0.1 * jax.random.normal(ks[4], (planes, planes, 3, 3), jnp.float32),
        "g2": 1.0 + 0.1 * jax.random.normal(ks[5], (planes,), jnp.float32),
        "b2": 0.1 * jax.random.normal(ks[6], (planes,), jnp.float32),
        # shortcut: Conv2d(in_planes, planes, 1, stride, bias=False) + BN
        "ws": 0.1 * jax.random.normal(ks[7], (planes, in_planes, 1, 1), jnp.float32),
        "gs": 1.0 + 0.1 * jax.random.normal(ks[8], (planes,), jnp.float32),
        "bs": 0.1 * jax.random.normal(ks[9], (planes,), jnp.float32),
    }

    fwd = jax.jit(functools.partial(basic_block_forward, stride=stride))
    out = fwd(x, params)
    jax.block_until_ready(out)

    assert out.shape == (N, planes, H // stride, W // stride), out.shape
    assert out.dtype == jnp.float32

    ref = _reference_forward(x, params, stride=stride)
    max_err = float(jnp.max(jnp.abs(out - ref)))
    mean_err = float(jnp.mean(jnp.abs(out - ref)))
    assert max_err < 0.3 and mean_err < 0.05, (max_err, mean_err)   # bf16 MXU tol

    print("KERNEL_OK")
</pallas_src>

<mosaic_0001>
module attributes {stable_mosaic.version = 11 : i64} {
  func.func @_conv1_proj_kernel(%arg0: i32, %arg1: memref<1x9x9x128xbf16, #tpu.memory_space<vmem>>, %arg2: memref<512x128xbf16, #tpu.memory_space<vmem>>, %arg3: memref<128x128xbf16, #tpu.memory_space<vmem>>, %arg4: memref<1x64x128xbf16, #tpu.memory_space<vmem>>, %arg5: memref<1x1x128xf32, #tpu.memory_space<vmem>>, %arg6: memref<1x1x128xf32, #tpu.memory_space<vmem>>, %arg7: memref<1x64x128xbf16, #tpu.memory_space<vmem>>, %arg8: memref<1x1x128xf32, #tpu.memory_space<vmem>>, %arg9: memref<1x1x128xf32, #tpu.memory_space<vmem>>) attributes {dimension_semantics = [#tpu.dimension_semantics<parallel>], iteration_bounds = array<i64: 2>, scalar_prefetch = 0 : i64, scratch_operands = 0 : i64, tpu.core_type = #tpu.core_type<tc>, window_params = [{transform_indices = @transform_0, window_bounds = array<i64: 1, 9, 9, 128>}, {pipeline_mode = #tpu.pipeline_mode<synchronous>, transform_indices = @transform_1, window_bounds = array<i64: 512, 128>}, {pipeline_mode = #tpu.pipeline_mode<synchronous>, transform_indices = @transform_2, window_bounds = array<i64: 128, 128>}, {transform_indices = @transform_3, window_bounds = array<i64: 1, 64, 128>}, {transform_indices = @transform_4, window_bounds = array<i64: 1, 1, 128>}, {transform_indices = @transform_5, window_bounds = array<i64: 1, 1, 128>}, {transform_indices = @transform_6, window_bounds = array<i64: 1, 64, 128>}, {transform_indices = @transform_7, window_bounds = array<i64: 1, 1, 128>}, {transform_indices = @transform_8, window_bounds = array<i64: 1, 1, 128>}]} {
    %c0 = arith.constant 0 : index
    %c0_0 = arith.constant 0 : index
    %c0_1 = arith.constant 0 : index
    %c0_2 = arith.constant 0 : index
    %0 = vector.load %arg1[%c0, %c0_0, %c0_1, %c0_2] : memref<1x9x9x128xbf16, #tpu.memory_space<vmem>>, vector<1x8x8x128xbf16>
    %1 = vector.shape_cast %0 : vector<1x8x8x128xbf16> to vector<8x8x128xbf16>
    %c0_3 = arith.constant 0 : index
    %c0_4 = arith.constant 0 : index
    %c1 = arith.constant 1 : index
    %c0_5 = arith.constant 0 : index
    %2 = vector.load %arg1[%c0_3, %c0_4, %c1, %c0_5] : memref<1x9x9x128xbf16, #tpu.memory_space<vmem>>, vector<1x8x8x128xbf16>
    %3 = vector.shape_cast %2 : vector<1x8x8x128xbf16> to vector<8x8x128xbf16>
    %c0_6 = arith.constant 0 : index
    %c1_7 = arith.constant 1 : index
    %c0_8 = arith.constant 0 : index
    %c0_9 = arith.constant 0 : index
    %4 = vector.load %arg1[%c0_6, %c1_7, %c0_8, %c0_9] : memref<1x9x9x128xbf16, #tpu.memory_space<vmem>>, vector<1x8x8x128xbf16>
    %5 = vector.shape_cast %4 : vector<1x8x8x128xbf16> to vector<8x8x128xbf16>
    %c0_10 = arith.constant 0 : index
    %c1_11 = arith.constant 1 : index
    %c1_12 = arith.constant 1 : index
    %c0_13 = arith.constant 0 : index
    %6 = vector.load %arg1[%c0_10, %c1_11, %c1_12, %c0_13] : memref<1x9x9x128xbf16, #tpu.memory_space<vmem>>, vector<1x8x8x128xbf16>
    %7 = vector.shape_cast %6 : vector<1x8x8x128xbf16> to vector<8x8x128xbf16>
    %8 = tpu.concatenate %1, %3, %5, %7 in 2 : vector<8x8x128xbf16>, vector<8x8x128xbf16>, vector<8x8x128xbf16>, vector<8x8x128xbf16> -> vector<8x8x512xbf16>
    %9 = vector.shape_cast %8 : vector<8x8x512xbf16> to vector<64x512xbf16>
    %c0_14 = arith.constant 0 : index
    %c0_15 = arith.constant 0 : index
    %10 = vector.load %arg2[%c0_14, %c0_15] : memref<512x128xbf16, #tpu.memory_space<vmem>>, vector<512x128xbf16>
    %cst = arith.constant dense<0.000000e+00> : vector<64x128xf32>
    %11 = tpu.matmul %9, %10, %cst {dimension_numbers = #tpu.dot_dimension_numbers<[1], [0], [0], [1], [0, 0, 1, 1], [], []>} : vector<64x512xbf16>, vector<512x128xbf16>, vector<64x128xf32> -> vector<64x128xf32>
    %12 = vector.shape_cast %11 : vector<64x128xf32> to vector<1x64x128xf32>
    %13 = arith.truncf %12 : vector<1x64x128xf32> to vector<1x64x128xbf16>
    %c0_16 = arith.constant 0 : index
    %c0_17 = arith.constant 0 : index
    %c0_18 = arith.constant 0 : index
    %14 = vector.load %arg4[%c0_16, %c0_17, %c0_18] : memref<1x64x128xbf16, #tpu.memory_space<vmem>>, vector<1x64x128xbf16>
    tpu.vector_store %arg4[%c0_16, %c0_17, %c0_18], %13 {strides = array<i32>} : memref<1x64x128xbf16, #tpu.memory_space<vmem>>, vector<1x64x128xbf16>,
    %cst_19 = arith.constant dense<0.000000e+00> : vector<128xf32>
    %15 = vector.multi_reduction <add>, %11, %cst_19 [0] : vector<64x128xf32> to vector<128xf32>
    %16 = vector.shape_cast %15 : vector<128xf32> to vector<1x128xf32>
    %17 = vector.shape_cast %16 : vector<1x128xf32> to vector<1x1x128xf32>
    %c0_20 = arith.constant 0 : index
    %c0_21 = arith.constant 0 : index
    %c0_22 = arith.constant 0 : index
    %18 = vector.load %arg5[%c0_20, %c0_21, %c0_22] : memref<1x1x128xf32, #tpu.memory_space<vmem>>, vector<1x1x128xf32>
    tpu.vector_store %arg5[%c0_20, %c0_21, %c0_22], %17 {strides = array<i32>} : memref<1x1x128xf32, #tpu.memory_space<vmem>>, vector<1x1x128xf32>,
    %19 = arith.mulf %11, %11 : vector<64x128xf32>
    %cst_23 = arith.constant dense<0.000000e+00> : vector<128xf32>
    %20 = vector.multi_reduction <add>, %19, %cst_23 [0] : vector<64x128xf32> to vector<128xf32>
    %21 = vector.shape_cast %20 : vector<128xf32> to vector<1x128xf32>
    %22 = vector.shape_cast %21 : vector<1x128xf32> to vector<1x1x128xf32>
    %c0_24 = arith.constant 0 : index
    %c0_25 = arith.constant 0 : index
    %c0_26 = arith.constant 0 : index
    %23 = vector.load %arg6[%c0_24, %c0_25, %c0_26] : memref<1x1x128xf32, #tpu.memory_space<vmem>>, vector<1x1x128xf32>
    tpu.vector_store %arg6[%c0_24, %c0_25, %c0_26], %22 {strides = array<i32>} : memref<1x1x128xf32, #tpu.memory_space<vmem>>, vector<1x1x128xf32>,
    %c0_27 = arith.constant 0 : index
    %c0_28 = arith.constant 0 : index
    %c0_29 = arith.constant 0 : index
    %c0_30 = arith.constant 0 : index
    %24 = vector.load %arg1[%c0_27, %c0_28, %c0_29, %c0_30] : memref<1x9x9x128xbf16, #tpu.memory_space<vmem>>, vector<1x8x8x128xbf16>
    %25 = vector.shape_cast %24 : vector<1x8x8x128xbf16> to vector<8x8x128xbf16>
    %26 = vector.shape_cast %25 : vector<8x8x128xbf16> to vector<64x128xbf16>
    %c0_31 = arith.constant 0 : index
    %c0_32 = arith.constant 0 : index
    %27 = vector.load %arg3[%c0_31, %c0_32] : memref<128x128xbf16, #tpu.memory_space<vmem>>, vector<128x128xbf16>
    %cst_33 = arith.constant dense<0.000000e+00> : vector<64x128xf32>
    %28 = tpu.matmul %26, %27, %cst_33 {dimension_numbers = #tpu.dot_dimension_numbers<[1], [0], [0], [1], [0, 0, 1, 1], [], []>} : vector<64x128xbf16>, vector<128x128xbf16>, vector<64x128xf32> -> vector<64x128xf32>
    %29 = vector.shape_cast %28 : vector<64x128xf32> to vector<1x64x128xf32>
    %30 = arith.truncf %29 : vector<1x64x128xf32> to vector<1x64x128xbf16>
    %c0_34 = arith.constant 0 : index
    %c0_35 = arith.constant 0 : index
    %c0_36 = arith.constant 0 : index
    %31 = vector.load %arg7[%c0_34, %c0_35, %c0_36] : memref<1x64x128xbf16, #tpu.memory_space<vmem>>, vector<1x64x128xbf16>
    tpu.vector_store %arg7[%c0_34, %c0_35, %c0_36], %30 {strides = array<i32>} : memref<1x64x128xbf16, #tpu.memory_space<vmem>>, vector<1x64x128xbf16>,
    %cst_37 = arith.constant dense<0.000000e+00> : vector<128xf32>
    %32 = vector.multi_reduction <add>, %28, %cst_37 [0] : vector<64x128xf32> to vector<128xf32>
    %33 = vector.shape_cast %32 : vector<128xf32> to vector<1x128xf32>
    %34 = vector.shape_cast %33 : vector<1x128xf32> to vector<1x1x128xf32>
    %c0_38 = arith.constant 0 : index
    %c0_39 = arith.constant 0 : index
    %c0_40 = arith.constant 0 : index
    %35 = vector.load %arg8[%c0_38, %c0_39, %c0_40] : memref<1x1x128xf32, #tpu.memory_space<vmem>>, vector<1x1x128xf32>
    tpu.vector_store %arg8[%c0_38, %c0_39, %c0_40], %34 {strides = array<i32>} : memref<1x1x128xf32, #tpu.memory_space<vmem>>, vector<1x1x128xf32>,
    %36 = arith.mulf %28, %28 : vector<64x128xf32>
    %cst_41 = arith.constant dense<0.000000e+00> : vector<128xf32>
    %37 = vector.multi_reduction <add>, %36, %cst_41 [0] : vector<64x128xf32> to vector<128xf32>
    %38 = vector.shape_cast %37 : vector<128xf32> to vector<1x128xf32>
    %39 = vector.shape_cast %38 : vector<1x128xf32> to vector<1x1x128xf32>
    %c0_42 = arith.constant 0 : index
    %c0_43 = arith.constant 0 : index
    %c0_44 = arith.constant 0 : index
    %40 = vector.load %arg9[%c0_42, %c0_43, %c0_44] : memref<1x1x128xf32, #tpu.memory_space<vmem>>, vector<1x1x128xf32>
    tpu.vector_store %arg9[%c0_42, %c0_43, %c0_44], %39 {strides = array<i32>} : memref<1x1x128xf32, #tpu.memory_space<vmem>>, vector<1x1x128xf32>,
    return
  }
  func.func @transform_0(%arg0: i32) -> (i32, i32, i32, i32) {
    %c0_i32 = arith.constant 0 : i32
    %c0_i32_0 = arith.constant 0 : i32
    %c0_i32_1 = arith.constant 0 : i32
    %c0_i32_2 = arith.constant 0 : i32
    return %arg0, %c0_i32, %c0_i32_0, %c0_i32_1 : i32, i32, i32, i32
  }
  func.func @transform_1(%arg0: i32) -> (i32, i32) {
    %c0_i32 = arith.constant 0 : i32
    %c0_i32_0 = arith.constant 0 : i32
    %c0_i32_1 = arith.constant 0 : i32
    return %c0_i32, %c0_i32_0 : i32, i32
  }
  func.func @transform_2(%arg0: i32) -> (i32, i32) {
    %c0_i32 = arith.constant 0 : i32
    %c0_i32_0 = arith.constant 0 : i32
    %c0_i32_1 = arith.constant 0 : i32
    return %c0_i32, %c0_i32_0 : i32, i32
  }
  func.func @transform_3(%arg0: i32) -> (i32, i32, i32) {
    %c0_i32 = arith.constant 0 : i32
    %c0_i32_0 = arith.constant 0 : i32
    %c0_i32_1 = arith.constant 0 : i32
    return %arg0, %c0_i32, %c0_i32_0 : i32, i32, i32
  }
  func.func @transform_4(%arg0: i32) -> (i32, i32, i32) {
    %c0_i32 = arith.constant 0 : i32
    %c0_i32_0 = arith.constant 0 : i32
    %c0_i32_1 = arith.constant 0 : i32
    return %arg0, %c0_i32, %c0_i32_0 : i32, i32, i32
  }
  func.func @transform_5(%arg0: i32) -> (i32, i32, i32) {
    %c0_i32 = arith.constant 0 : i32
    %c0_i32_0 = arith.constant 0 : i32
    %c0_i32_1 = arith.constant 0 : i32
    return %arg0, %c0_i32, %c0_i32_0 : i32, i32, i32
  }
  func.func @transform_6(%arg0: i32) -> (i32, i32, i32) {
    %c0_i32 = arith.constant 0 : i32
    %c0_i32_0 = arith.constant 0 : i32
    %c0_i32_1 = arith.constant 0 : i32
    return %arg0, %c0_i32, %c0_i32_0 : i32, i32, i32
  }
  func.func @transform_7(%arg0: i32) -> (i32, i32, i32) {
    %c0_i32 = arith.constant 0 : i32
    %c0_i32_0 = arith.constant 0 : i32
    %c0_i32_1 = arith.constant 0 : i32
    return %arg0, %c0_i32, %c0_i32_0 : i32, i32, i32
  }
  func.func @transform_8(%arg0: i32) -> (i32, i32, i32) {
    %c0_i32 = arith.constant 0 : i32
    %c0_i32_0 = arith.constant 0 : i32
    %c0_i32_1 = arith.constant 0 : i32
    return %arg0, %c0_i32, %c0_i32_0 : i32, i32, i32
  }
}

module attributes {stable_mosaic.version = 11 : i64} {
  func.func @_conv2_bn1_kernel(%arg0: i32, %arg1: memref<1x64x128xbf16, #tpu.memory_space<vmem>>, %arg2: memref<1x128xf32, #tpu.memory_space<vmem>>, %arg3: memref<1x128xf32, #tpu.memory_space<vmem>>, %arg4: memref<1x128xf32, #tpu.memory_space<vmem>>, %arg5: memref<1x128xf32, #tpu.memory_space<vmem>>, %arg6: memref<1152x128xbf16, #tpu.memory_space<vmem>>, %arg7: memref<1x64x128xbf16, #tpu.memory_space<vmem>>, %arg8: memref<1x1x128xf32, #tpu.memory_space<vmem>>, %arg9: memref<1x1x128xf32, #tpu.memory_space<vmem>>, %arg10: memref<10x10x128xbf16, #tpu.memory_space<vmem>>) attributes {dimension_semantics = [#tpu.dimension_semantics<parallel>], iteration_bounds = array<i64: 2>, scalar_prefetch = 0 : i64, scratch_operands = 1 : i64, tpu.core_type = #tpu.core_type<tc>, window_params = [{transform_indices = @transform_0, window_bounds = array<i64: 1, 64, 128>}, {pipeline_mode = #tpu.pipeline_mode<synchronous>, transform_indices = @transform_1, window_bounds = array<i64: 1, 128>}, {pipeline_mode = #tpu.pipeline_mode<synchronous>, transform_indices = @transform_2, window_bounds = array<i64: 1, 128>}, {pipeline_mode = #tpu.pipeline_mode<synchronous>, transform_indices = @transform_3, window_bounds = array<i64: 1, 128>}, {pipeline_mode = #tpu.pipeline_mode<synchronous>, transform_indices = @transform_4, window_bounds = array<i64: 1, 128>}, {pipeline_mode = #tpu.pipeline_mode<synchronous>, transform_indices = @transform_5, window_bounds = array<i64: 1152, 128>}, {transform_indices = @transform_6, window_bounds = array<i64: 1, 64, 128>}, {transform_indices = @transform_7, window_bounds = array<i64: 1, 1, 128>}, {transform_indices = @transform_8, window_bounds = array<i64: 1, 1, 128>}]} {
    %c0 = arith.constant 0 : index
    %c0_0 = arith.constant 0 : index
    %0 = vector.load %arg2[%c0, %c0_0] : memref<1x128xf32, #tpu.memory_space<vmem>>, vector<1x128xf32>
    %cst = arith.constant 7.812500e-03 : f32
    %1 = vector.broadcast %cst : f32 to vector<1x128xf32>
    %2 = arith.mulf %0, %1 : vector<1x128xf32>
    %c0_1 = arith.constant 0 : index
    %c0_2 = arith.constant 0 : index
    %3 = vector.load %arg3[%c0_1, %c0_2] : memref<1x128xf32, #tpu.memory_space<vmem>>, vector<1x128xf32>
    %cst_3 = arith.constant 7.812500e-03 : f32
    %4 = vector.broadcast %cst_3 : f32 to vector<1x128xf32>
    %5 = arith.mulf %3, %4 : vector<1x128xf32>
    %6 = arith.mulf %2, %2 : vector<1x128xf32>
    %7 = arith.subf %5, %6 : vector<1x128xf32>
    %cst_4 = arith.constant 0.000000e+00 : f32
    %8 = vector.broadcast %cst_4 : f32 to vector<1x128xf32>
    %9 = arith.maximumf %7, %8 : vector<1x128xf32>
    %cst_5 = arith.constant 9.99999974E-6 : f32
    %10 = vector.broadcast %cst_5 : f32 to vector<1x128xf32>
    %11 = arith.addf %9, %10 : vector<1x128xf32>
    %12 = math.rsqrt %11 : vector<1x128xf32>
    %c0_6 = arith.constant 0 : index
    %c0_7 = arith.constant 0 : index
    %13 = vector.load %arg4[%c0_6, %c0_7] : memref<1x128xf32, #tpu.memory_space<vmem>>, vector<1x128xf32>
    %14 = arith.mulf %12, %13 : vector<1x128xf32>
    %c0_8 = arith.constant 0 : index
    %c0_9 = arith.constant 0 : index
    %15 = vector.load %arg5[%c0_8, %c0_9] : memref<1x128xf32, #tpu.memory_space<vmem>>, vector<1x128xf32>
    %16 = arith.mulf %2, %14 : vector<1x128xf32>
    %17 = arith.subf %15, %16 : vector<1x128xf32>
    %c0_10 = arith.constant 0 : index
    %c0_11 = arith.constant 0 : index
    %c0_12 = arith.constant 0 : index
    %18 = vector.load %arg1[%c0_10, %c0_11, %c0_12] : memref<1x64x128xbf16, #tpu.memory_space<vmem>>, vector<1x64x128xbf16>
    %19 = vector.shape_cast %18 : vector<1x64x128xbf16> to vector<64x128xbf16>
    %20 = arith.extf %19 : vector<64x128xbf16> to vector<64x128xf32>
    %21 = vector.broadcast %14 : vector<1x128xf32> to vector<64x128xf32>
    %22 = arith.mulf %20, %21 : vector<64x128xf32>
    %23 = vector.broadcast %17 : vector<1x128xf32> to vector<64x128xf32>
    %24 = arith.addf %22, %23 : vector<64x128xf32>
    %cst_13 = arith.constant 0.000000e+00 : f32
    %25 = vector.broadcast %cst_13 : f32 to vector<64x128xf32>
    %26 = arith.maximumf %24, %25 : vector<64x128xf32>
    %cst_14 = arith.constant 0.000000e+00 : bf16
    %27 = vector.broadcast %cst_14 : bf16 to vector<1x10x128xbf16>
    %cst_15 = arith.constant 0.000000e+00 : bf16
    %28 = vector.broadcast %cst_15 : bf16 to vector<10x1x128xbf16>
    %c0_16 = arith.constant 0 : index
    %c0_17 = arith.constant 0 : index
    %c0_18 = arith.constant 0 : index
    %29 = vector.load %arg10[%c0_16, %c0_17, %c0_18] : memref<10x10x128xbf16, #tpu.memory_space<vmem>>, vector<1x10x128xbf16>
    tpu.vector_store %arg10[%c0_16, %c0_17, %c0_18], %27 {strides = array<i32>} : memref<10x10x128xbf16, #tpu.memory_space<vmem>>, vector<1x10x128xbf16>,
    %c9 = arith.constant 9 : index
    %c0_19 = arith.constant 0 : index
    %c0_20 = arith.constant 0 : index
    %30 = vector.load %arg10[%c9, %c0_19, %c0_20] : memref<10x10x128xbf16, #tpu.memory_space<vmem>>, vector<1x10x128xbf16>
    tpu.vector_store %arg10[%c9, %c0_19, %c0_20], %27 {strides = array<i32>} : memref<10x10x128xbf16, #tpu.memory_space<vmem>>, vector<1x10x128xbf16>,
    %c0_21 = arith.constant 0 : index
    %c0_22 = arith.constant 0 : index
    %c0_23 = arith.constant 0 : index
    %31 = vector.load %arg10[%c0_21, %c0_22, %c0_23] : memref<10x10x128xbf16, #tpu.memory_space<vmem>>, vector<10x1x128xbf16>
    tpu.vector_store %arg10[%c0_21, %c0_22, %c0_23], %28 {strides = array<i32>} : memref<10x10x128xbf16, #tpu.memory_space<vmem>>, vector<10x1x128xbf16>,
    %c0_24 = arith.constant 0 : index
    %c9_25 = arith.constant 9 : index
    %c0_26 = arith.constant 0 : index
    %32 = vector.load %arg10[%c0_24, %c9_25, %c0_26] : memref<10x10x128xbf16, #tpu.memory_space<vmem>>, vector<10x1x128xbf16>
    tpu.vector_store %arg10[%c0_24, %c9_25, %c0_26], %28 {strides = array<i32>} : memref<10x10x128xbf16, #tpu.memory_space<vmem>>, vector<10x1x128xbf16>,
    %33 = vector.shape_cast %26 : vector<64x128xf32> to vector<8x8x128xf32>
    %34 = arith.truncf %33 : vector<8x8x128xf32> to vector<8x8x128xbf16>
    %c1 = arith.constant 1 : index
    %c1_27 = arith.constant 1 : index
    %c0_28 = arith.constant 0 : index
    %35 = vector.load %arg10[%c1, %c1_27, %c0_28] : memref<10x10x128xbf16, #tpu.memory_space<vmem>>, vector<8x8x128xbf16>
    tpu.vector_store %arg10[%c1, %c1_27, %c0_28], %34 {strides = array<i32>} : memref<10x10x128xbf16, #tpu.memory_space<vmem>>, vector<8x8x128xbf16>,
    %c0_29 = arith.constant 0 : index
    %c0_30 = arith.constant 0 : index
    %c0_31 = arith.constant 0 : index
    %36 = vector.load %arg10[%c0_29, %c0_30, %c0_31] : memref<10x10x128xbf16, #tpu.memory_space<vmem>>, vector<8x8x128xbf16>
    %c0_32 = arith.constant 0 : index
    %c1_33 = arith.constant 1 : index
    %c0_34 = arith.constant 0 : index
    %37 = vector.load %arg10[%c0_32, %c1_33, %c0_34] : memref<10x10x128xbf16, #tpu.memory_space<vmem>>, vector<8x8x128xbf16>
    %c0_35 = arith.constant 0 : index
    %c2 = arith.constant 2 : index
    %c0_36 = arith.constant 0 : index
    %38 = vector.load %arg10[%c0_35, %c2, %c0_36] : memref<10x10x128xbf16, #tpu.memory_space<vmem>>, vector<8x8x128xbf16>
    %c1_37 = arith.constant 1 : index
    %c0_38 = arith.constant 0 : index
    %c0_39 = arith.constant 0 : index
    %39 = vector.load %arg10[%c1_37, %c0_38, %c0_39] : memref<10x10x128xbf16, #tpu.memory_space<vmem>>, vector<8x8x128xbf16>
    %c1_40 = arith.constant 1 : index
    %c1_41 = arith.constant 1 : index
    %c0_42 = arith.constant 0 : index
    %40 = vector.load %arg10[%c1_40, %c1_41, %c0_42] : memref<10x10x128xbf16, #tpu.memory_space<vmem>>, vector<8x8x128xbf16>
    %c1_43 = arith.constant 1 : index
    %c2_44 = arith.constant 2 : index
    %c0_45 = arith.constant 0 : index
    %41 = vector.load %arg10[%c1_43, %c2_44, %c0_45] : memref<10x10x128xbf16, #tpu.memory_space<vmem>>, vector<8x8x128xbf16>
    %c2_46 = arith.constant 2 : index
    %c0_47 = arith.constant 0 : index
    %c0_48 = arith.constant 0 : index
    %42 = vector.load %arg10[%c2_46, %c0_47, %c0_48] : memref<10x10x128xbf16, #tpu.memory_space<vmem>>, vector<8x8x128xbf16>
    %c2_49 = arith.constant 2 : index
    %c1_50 = arith.constant 1 : index
    %c0_51 = arith.constant 0 : index
    %43 = vector.load %arg10[%c2_49, %c1_50, %c0_51] : memref<10x10x128xbf16, #tpu.memory_space<vmem>>, vector<8x8x128xbf16>
    %c2_52 = arith.constant 2 : index
    %c2_53 = arith.constant 2 : index
    %c0_54 = arith.constant 0 : index
    %44 = vector.load %arg10[%c2_52, %c2_53, %c0_54] : memref<10x10x128xbf16, #tpu.memory_space<vmem>>, vector<8x8x128xbf16>
    %45 = tpu.concatenate %36, %37, %38, %39, %40, %41, %42, %43, %44 in 2 : vector<8x8x128xbf16>, vector<8x8x128xbf16>, vector<8x8x128xbf16>, vector<8x8x128xbf16>, vector<8x8x128xbf16>, vector<8x8x128xbf16>, vector<8x8x128xbf16>, vector<8x8x128xbf16>, vector<8x8x128xbf16> -> vector<8x8x1152xbf16>
    %46 = vector.shape_cast %45 : vector<8x8x1152xbf16> to vector<64x1152xbf16>
    %c0_55 = arith.constant 0 : index
    %c0_56 = arith.constant 0 : index
    %47 = vector.load %arg6[%c0_55, %c0_56] : memref<1152x128xbf16, #tpu.memory_space<vmem>>, vector<1152x128xbf16>
    %cst_57 = arith.constant dense<0.000000e+00> : vector<64x128xf32>
    %48 = tpu.matmul %46, %47, %cst_57 {dimension_numbers = #tpu.dot_dimension_numbers<[1], [0], [0], [1], [0, 0, 1, 1], [], []>} : vector<64x1152xbf16>, vector<1152x128xbf16>, vector<64x128xf32> -> vector<64x128xf32>
    %49 = vector.shape_cast %48 : vector<64x128xf32> to vector<1x64x128xf32>
    %50 = arith.truncf %49 : vector<1x64x128xf32> to vector<1x64x128xbf16>
    %c0_58 = arith.constant 0 : index
    %c0_59 = arith.constant 0 : index
    %c0_60 = arith.constant 0 : index
    %51 = vector.load %arg7[%c0_58, %c0_59, %c0_60] : memref<1x64x128xbf16, #tpu.memory_space<vmem>>, vector<1x64x128xbf16>
    tpu.vector_store %arg7[%c0_58, %c0_59, %c0_60], %50 {strides = array<i32>} : memref<1x64x128xbf16, #tpu.memory_space<vmem>>, vector<1x64x128xbf16>,
    %cst_61 = arith.constant dense<0.000000e+00> : vector<128xf32>
    %52 = vector.multi_reduction <add>, %48, %cst_61 [0] : vector<64x128xf32> to vector<128xf32>
    %53 = vector.shape_cast %52 : vector<128xf32> to vector<1x128xf32>
    %54 = vector.shape_cast %53 : vector<1x128xf32> to vector<1x1x128xf32>
    %c0_62 = arith.constant 0 : index
    %c0_63 = arith.constant 0 : index
    %c0_64 = arith.constant 0 : index
    %55 = vector.load %arg8[%c0_62, %c0_63, %c0_64] : memref<1x1x128xf32, #tpu.memory_space<vmem>>, vector<1x1x128xf32>
    tpu.vector_store %arg8[%c0_62, %c0_63, %c0_64], %54 {strides = array<i32>} : memref<1x1x128xf32, #tpu.memory_space<vmem>>, vector<1x1x128xf32>,
    %56 = arith.mulf %48, %48 : vector<64x128xf32>
    %cst_65 = arith.constant dense<0.000000e+00> : vector<128xf32>
    %57 = vector.multi_reduction <add>, %56, %cst_65 [0] : vector<64x128xf32> to vector<128xf32>
    %58 = vector.shape_cast %57 : vector<128xf32> to vector<1x128xf32>
    %59 = vector.shape_cast %58 : vector<1x128xf32> to vector<1x1x128xf32>
    %c0_66 = arith.constant 0 : index
    %c0_67 = arith.constant 0 : index
    %c0_68 = arith.constant 0 : index
    %60 = vector.load %arg9[%c0_66, %c0_67, %c0_68] : memref<1x1x128xf32, #tpu.memory_space<vmem>>, vector<1x1x128xf32>
    tpu.vector_store %arg9[%c0_66, %c0_67, %c0_68], %59 {strides = array<i32>} : memref<1x1x128xf32, #tpu.memory_space<vmem>>, vector<1x1x128xf32>,
    return
  }
  func.func @transform_0(%arg0: i32) -> (i32, i32, i32) {
    %c0_i32 = arith.constant 0 : i32
    %c0_i32_0 = arith.constant 0 : i32
    %c0_i32_1 = arith.constant 0 : i32
    return %arg0, %c0_i32, %c0_i32_0 : i32, i32, i32
  }
  func.func @transform_1(%arg0: i32) -> (i32, i32) {
    %c0_i32 = arith.constant 0 : i32
    %c0_i32_0 = arith.constant 0 : i32
    %c0_i32_1 = arith.constant 0 : i32
    return %c0_i32, %c0_i32_0 : i32, i32
  }
  func.func @transform_2(%arg0: i32) -> (i32, i32) {
    %c0_i32 = arith.constant 0 : i32
    %c0_i32_0 = arith.constant 0 : i32
    %c0_i32_1 = arith.constant 0 : i32
    return %c0_i32, %c0_i32_0 : i32, i32
  }
  func.func @transform_3(%arg0: i32) -> (i32, i32) {
    %c0_i32 = arith.constant 0 : i32
    %c0_i32_0 = arith.constant 0 : i32
    %c0_i32_1 = arith.constant 0 : i32
    return %c0_i32, %c0_i32_0 : i32, i32
  }
  func.func @transform_4(%arg0: i32) -> (i32, i32) {
    %c0_i32 = arith.constant 0 : i32
    %c0_i32_0 = arith.constant 0 : i32
    %c0_i32_1 = arith.constant 0 : i32
    return %c0_i32, %c0_i32_0 : i32, i32
  }
  func.func @transform_5(%arg0: i32) -> (i32, i32) {
    %c0_i32 = arith.constant 0 : i32
    %c0_i32_0 = arith.constant 0 : i32
    %c0_i32_1 = arith.constant 0 : i32
    return %c0_i32, %c0_i32_0 : i32, i32
  }
  func.func @transform_6(%arg0: i32) -> (i32, i32, i32) {
    %c0_i32 = arith.constant 0 : i32
    %c0_i32_0 = arith.constant 0 : i32
    %c0_i32_1 = arith.constant 0 : i32
    return %arg0, %c0_i32, %c0_i32_0 : i32, i32, i32
  }
  func.func @transform_7(%arg0: i32) -> (i32, i32, i32) {
    %c0_i32 = arith.constant 0 : i32
    %c0_i32_0 = arith.constant 0 : i32
    %c0_i32_1 = arith.constant 0 : i32
    return %arg0, %c0_i32, %c0_i32_0 : i32, i32, i32
  }
  func.func @transform_8(%arg0: i32) -> (i32, i32, i32) {
    %c0_i32 = arith.constant 0 : i32
    %c0_i32_0 = arith.constant 0 : i32
    %c0_i32_1 = arith.constant 0 : i32
    return %arg0, %c0_i32, %c0_i32_0 : i32, i32, i32
  }
}

module attributes {stable_mosaic.version = 11 : i64} {
  func.func @_bn_residual_relu_kernel(%arg0: i32, %arg1: memref<1x64x128xbf16, #tpu.memory_space<vmem>>, %arg2: memref<1x128xf32, #tpu.memory_space<vmem>>, %arg3: memref<1x128xf32, #tpu.memory_space<vmem>>, %arg4: memref<1x128xf32, #tpu.memory_space<vmem>>, %arg5: memref<1x128xf32, #tpu.memory_space<vmem>>, %arg6: memref<1x64x128xbf16, #tpu.memory_space<vmem>>, %arg7: memref<1x128xf32, #tpu.memory_space<vmem>>, %arg8: memref<1x128xf32, #tpu.memory_space<vmem>>, %arg9: memref<1x128xf32, #tpu.memory_space<vmem>>, %arg10: memref<1x128xf32, #tpu.memory_space<vmem>>, %arg11: memref<1x64x128xf32, #tpu.memory_space<vmem>>) attributes {dimension_semantics = [#tpu.dimension_semantics<parallel>], iteration_bounds = array<i64: 2>, scalar_prefetch = 0 : i64, scratch_operands = 0 : i64, tpu.core_type = #tpu.core_type<tc>, window_params = [{transform_indices = @transform_0, window_bounds = array<i64: 1, 64, 128>}, {pipeline_mode = #tpu.pipeline_mode<synchronous>, transform_indices = @transform_1, window_bounds = array<i64: 1, 128>}, {pipeline_mode = #tpu.pipeline_mode<synchronous>, transform_indices = @transform_2, window_bounds = array<i64: 1, 128>}, {pipeline_mode = #tpu.pipeline_mode<synchronous>, transform_indices = @transform_3, window_bounds = array<i64: 1, 128>}, {pipeline_mode = #tpu.pipeline_mode<synchronous>, transform_indices = @transform_4, window_bounds = array<i64: 1, 128>}, {transform_indices = @transform_5, window_bounds = array<i64: 1, 64, 128>}, {pipeline_mode = #tpu.pipeline_mode<synchronous>, transform_indices = @transform_6, window_bounds = array<i64: 1, 128>}, {pipeline_mode = #tpu.pipeline_mode<synchronous>, transform_indices = @transform_7, window_bounds = array<i64: 1, 128>}, {pipeline_mode = #tpu.pipeline_mode<synchronous>, transform_indices = @transform_8, window_bounds = array<i64: 1, 128>}, {pipeline_mode = #tpu.pipeline_mode<synchronous>, transform_indices = @transform_9, window_bounds = array<i64: 1, 128>}, {transform_indices = @transform_10, window_bounds = array<i64: 1, 64, 128>}]} {
    %c0 = arith.constant 0 : index
    %c0_0 = arith.constant 0 : index
    %0 = vector.load %arg2[%c0, %c0_0] : memref<1x128xf32, #tpu.memory_space<vmem>>, vector<1x128xf32>
    %cst = arith.constant 7.812500e-03 : f32
    %1 = vector.broadcast %cst : f32 to vector<1x128xf32>
    %2 = arith.mulf %0, %1 : vector<1x128xf32>
    %c0_1 = arith.constant 0 : index
    %c0_2 = arith.constant 0 : index
    %3 = vector.load %arg3[%c0_1, %c0_2] : memref<1x128xf32, #tpu.memory_space<vmem>>, vector<1x128xf32>
    %cst_3 = arith.constant 7.812500e-03 : f32
    %4 = vector.broadcast %cst_3 : f32 to vector<1x128xf32>
    %5 = arith.mulf %3, %4 : vector<1x128xf32>
    %6 = arith.mulf %2, %2 : vector<1x128xf32>
    %7 = arith.subf %5, %6 : vector<1x128xf32>
    %cst_4 = arith.constant 0.000000e+00 : f32
    %8 = vector.broadcast %cst_4 : f32 to vector<1x128xf32>
    %9 = arith.maximumf %7, %8 : vector<1x128xf32>
    %cst_5 = arith.constant 9.99999974E-6 : f32
    %10 = vector.broadcast %cst_5 : f32 to vector<1x128xf32>
    %11 = arith.addf %9, %10 : vector<1x128xf32>
    %12 = math.rsqrt %11 : vector<1x128xf32>
    %c0_6 = arith.constant 0 : index
    %c0_7 = arith.constant 0 : index
    %13 = vector.load %arg4[%c0_6, %c0_7] : memref<1x128xf32, #tpu.memory_space<vmem>>, vector<1x128xf32>
    %14 = arith.mulf %12, %13 : vector<1x128xf32>
    %c0_8 = arith.constant 0 : index
    %c0_9 = arith.constant 0 : index
    %15 = vector.load %arg5[%c0_8, %c0_9] : memref<1x128xf32, #tpu.memory_space<vmem>>, vector<1x128xf32>
    %16 = arith.mulf %2, %14 : vector<1x128xf32>
    %17 = arith.subf %15, %16 : vector<1x128xf32>
    %c0_10 = arith.constant 0 : index
    %c0_11 = arith.constant 0 : index
    %c0_12 = arith.constant 0 : index
    %18 = vector.load %arg1[%c0_10, %c0_11, %c0_12] : memref<1x64x128xbf16, #tpu.memory_space<vmem>>, vector<1x64x128xbf16>
    %19 = vector.shape_cast %18 : vector<1x64x128xbf16> to vector<64x128xbf16>
    %20 = arith.extf %19 : vector<64x128xbf16> to vector<64x128xf32>
    %21 = vector.broadcast %14 : vector<1x128xf32> to vector<64x128xf32>
    %22 = arith.mulf %20, %21 : vector<64x128xf32>
    %23 = vector.broadcast %17 : vector<1x128xf32> to vector<64x128xf32>
    %24 = arith.addf %22, %23 : vector<64x128xf32>
    %c0_13 = arith.constant 0 : index
    %c0_14 = arith.constant 0 : index
    %25 = vector.load %arg7[%c0_13, %c0_14] : memref<1x128xf32, #tpu.memory_space<vmem>>, vector<1x128xf32>
    %cst_15 = arith.constant 7.812500e-03 : f32
    %26 = vector.broadcast %cst_15 : f32 to vector<1x128xf32>
    %27 = arith.mulf %25, %26 : vector<1x128xf32>
    %c0_16 = arith.constant 0 : index
    %c0_17 = arith.constant 0 : index
    %28 = vector.load %arg8[%c0_16, %c0_17] : memref<1x128xf32, #tpu.memory_space<vmem>>, vector<1x128xf32>
    %cst_18 = arith.constant 7.812500e-03 : f32
    %29 = vector.broadcast %cst_18 : f32 to vector<1x128xf32>
    %30 = arith.mulf %28, %29 : vector<1x128xf32>
    %31 = arith.mulf %27, %27 : vector<1x128xf32>
    %32 = arith.subf %30, %31 : vector<1x128xf32>
    %cst_19 = arith.constant 0.000000e+00 : f32
    %33 = vector.broadcast %cst_19 : f32 to vector<1x128xf32>
    %34 = arith.maximumf %32, %33 : vector<1x128xf32>
    %cst_20 = arith.constant 9.99999974E-6 : f32
    %35 = vector.broadcast %cst_20 : f32 to vector<1x128xf32>
    %36 = arith.addf %34, %35 : vector<1x128xf32>
    %37 = math.rsqrt %36 : vector<1x128xf32>
    %c0_21 = arith.constant 0 : index
    %c0_22 = arith.constant 0 : index
    %38 = vector.load %arg9[%c0_21, %c0_22] : memref<1x128xf32, #tpu.memory_space<vmem>>, vector<1x128xf32>
    %39 = arith.mulf %37, %38 : vector<1x128xf32>
    %c0_23 = arith.constant 0 : index
    %c0_24 = arith.constant 0 : index
    %40 = vector.load %arg10[%c0_23, %c0_24] : memref<1x128xf32, #tpu.memory_space<vmem>>, vector<1x128xf32>
    %41 = arith.mulf %27, %39 : vector<1x128xf32>
    %42 = arith.subf %40, %41 : vector<1x128xf32>
    %c0_25 = arith.constant 0 : index
    %c0_26 = arith.constant 0 : index
    %c0_27 = arith.constant 0 : index
    %43 = vector.load %arg6[%c0_25, %c0_26, %c0_27] : memref<1x64x128xbf16, #tpu.memory_space<vmem>>, vector<1x64x128xbf16>
    %44 = vector.shape_cast %43 : vector<1x64x128xbf16> to vector<64x128xbf16>
    %45 = arith.extf %44 : vector<64x128xbf16> to vector<64x128xf32>
    %46 = vector.broadcast %39 : vector<1x128xf32> to vector<64x128xf32>
    %47 = arith.mulf %45, %46 : vector<64x128xf32>
    %48 = arith.addf %24, %47 : vector<64x128xf32>
    %49 = vector.broadcast %42 : vector<1x128xf32> to vector<64x128xf32>
    %50 = arith.addf %48, %49 : vector<64x128xf32>
    %cst_28 = arith.constant 0.000000e+00 : f32
    %51 = vector.broadcast %cst_28 : f32 to vector<64x128xf32>
    %52 = arith.maximumf %50, %51 : vector<64x128xf32>
    %53 = vector.shape_cast %52 : vector<64x128xf32> to vector<1x64x128xf32>
    %c0_29 = arith.constant 0 : index
    %c0_30 = arith.constant 0 : index
    %c0_31 = arith.constant 0 : index
    %54 = vector.load %arg11[%c0_29, %c0_30, %c0_31] : memref<1x64x128xf32, #tpu.memory_space<vmem>>, vector<1x64x128xf32>
    tpu.vector_store %arg11[%c0_29, %c0_30, %c0_31], %53 {strides = array<i32>} : memref<1x64x128xf32, #tpu.memory_space<vmem>>, vector<1x64x128xf32>,
    return
  }
  func.func @transform_0(%arg0: i32) -> (i32, i32, i32) {
    %c0_i32 = arith.constant 0 : i32
    %c0_i32_0 = arith.constant 0 : i32
    %c0_i32_1 = arith.constant 0 : i32
    return %arg0, %c0_i32, %c0_i32_0 : i32, i32, i32
  }
  func.func @transform_1(%arg0: i32) -> (i32, i32) {
    %c0_i32 = arith.constant 0 : i32
    %c0_i32_0 = arith.constant 0 : i32
    %c0_i32_1 = arith.constant 0 : i32
    return %c0_i32, %c0_i32_0 : i32, i32
  }
  func.func @transform_2(%arg0: i32) -> (i32, i32) {
    %c0_i32 = arith.constant 0 : i32
    %c0_i32_0 = arith.constant 0 : i32
    %c0_i32_1 = arith.constant 0 : i32
    return %c0_i32, %c0_i32_0 : i32, i32
  }
  func.func @transform_3(%arg0: i32) -> (i32, i32) {
    %c0_i32 = arith.constant 0 : i32
    %c0_i32_0 = arith.constant 0 : i32
    %c0_i32_1 = arith.constant 0 : i32
    return %c0_i32, %c0_i32_0 : i32, i32
  }
  func.func @transform_4(%arg0: i32) -> (i32, i32) {
    %c0_i32 = arith.constant 0 : i32
    %c0_i32_0 = arith.constant 0 : i32
    %c0_i32_1 = arith.constant 0 : i32
    return %c0_i32, %c0_i32_0 : i32, i32
  }
  func.func @transform_5(%arg0: i32) -> (i32, i32, i32) {
    %c0_i32 = arith.constant 0 : i32
    %c0_i32_0 = arith.constant 0 : i32
    %c0_i32_1 = arith.constant 0 : i32
    return %arg0, %c0_i32, %c0_i32_0 : i32, i32, i32
  }
  func.func @transform_6(%arg0: i32) -> (i32, i32) {
    %c0_i32 = arith.constant 0 : i32
    %c0_i32_0 = arith.constant 0 : i32
    %c0_i32_1 = arith.constant 0 : i32
    return %c0_i32, %c0_i32_0 : i32, i32
  }
  func.func @transform_7(%arg0: i32) -> (i32, i32) {
    %c0_i32 = arith.constant 0 : i32
    %c0_i32_0 = arith.constant 0 : i32
    %c0_i32_1 = arith.constant 0 : i32
    return %c0_i32, %c0_i32_0 : i32, i32
  }
  func.func @transform_8(%arg0: i32) -> (i32, i32) {
    %c0_i32 = arith.constant 0 : i32
    %c0_i32_0 = arith.constant 0 : i32
    %c0_i32_1 = arith.constant 0 : i32
    return %c0_i32, %c0_i32_0 : i32, i32
  }
  func.func @transform_9(%arg0: i32) -> (i32, i32) {
    %c0_i32 = arith.constant 0 : i32
    %c0_i32_0 = arith.constant 0 : i32
    %c0_i32_1 = arith.constant 0 : i32
    return %c0_i32, %c0_i32_0 : i32, i32
  }
  func.func @transform_10(%arg0: i32) -> (i32, i32, i32) {
    %c0_i32 = arith.constant 0 : i32
    %c0_i32_0 = arith.constant 0 : i32
    %c0_i32_1 = arith.constant 0 : i32
    return %arg0, %c0_i32, %c0_i32_0 : i32, i32, i32
  }
}

</mosaic_0001>

<llo_original>
// kernel: basic_block_forward.5
$region0: #{basic_block_forward.5}
  #allocation0 [shape = 'u32[]', space=smem, size = 0x4, offset = 0x4, fixed_abs, tag = 'smem constant byte address 0x4 - core index']
  #allocation1 [shape = 'u32[144,128]{1,0:T(1,128)}', space=vmem, size = 0x12000, scoped, tag = 'internal scratch']
  %s0 = inlined_call_operand.vmem [shape: bf16[2,64,128], index: 0, kind: input, shape index: {}]
  %s1 = inlined_call_operand.vmem [shape: f32[1,128], index: 1, kind: input, shape index: {}]
  %s2 = inlined_call_operand.vmem [shape: f32[1,128], index: 2, kind: input, shape index: {}]
  %s3 = inlined_call_operand.vmem [shape: f32[1,128], index: 3, kind: input, shape index: {}]
  %s4 = inlined_call_operand.vmem [shape: f32[1,128], index: 4, kind: input, shape index: {}]
  %s5 = inlined_call_operand.vmem [shape: bf16[2,64,128], index: 5, kind: input, shape index: {}]
  %s6 = inlined_call_operand.vmem [shape: f32[1,128], index: 6, kind: input, shape index: {}]
  %s7 = inlined_call_operand.vmem [shape: f32[1,128], index: 7, kind: input, shape index: {}]
  %s8 = inlined_call_operand.vmem [shape: f32[1,128], index: 8, kind: input, shape index: {}]
  %s9 = inlined_call_operand.vmem [shape: f32[1,128], index: 9, kind: input, shape index: {}]
  %s10 = inlined_call_operand.vmem [shape: f32[2,64,128], index: 10, kind: output, shape index: {}]
  %s11 = sld [smem:[#allocation0]]
  $region73: #{basic_block_forward.5} parent=0
    _
  %s13 = ssub.s32 1, %s11
  %s14 = scalar_select 0, %s13, %s11
  loop: start=0, step=1, limit=4
  $region2: #{basic_block_forward.5} parent=0 // loop_pre_header
    _
  $region3: #{basic_block_forward.5} parent=0 // loop_header
    %s16 = sphi 0, %s20
    %p17 = scmp.ge.s32.totalorder %s16, 4
    %s26 = sphi 0, %s28
    %s29 = sphi 0, %s26
    %s30 = sphi 0, %s29
    %s46 = sphi 0, %s30
    %s50 = sphi 0, %s50
    %s52 = sphi 0, %s50
    %s53 = sphi 0, %s52
    %s67 = sphi 0, %s53
    %s71 = sphi 0, %s71
    %s73 = sphi 0, %s71
    %s74 = sphi 0, %s73
    %s88 = sphi 0, %s74
    %s92 = sphi 0, %s92
    %s94 = sphi 0, %s92
    %s95 = sphi 0, %s94
    %s109 = sphi 0, %s95
    %s113 = sphi 0, %s113
    %s115 = sphi 0, %s113
    %s116 = sphi 0, %s115
    %s130 = sphi 0, %s116
    %s136 = sphi 0, %s138
    %s139 = sphi 0, %s136
    %s140 = sphi 0, %s139
    %s156 = sphi 0, %s140
    %s160 = sphi 0, %s160
    %s162 = sphi 0, %s160
    %s163 = sphi 0, %s162
    %s177 = sphi 0, %s163
    %s181 = sphi 0, %s181
    %s183 = sphi 0, %s181
    %s184 = sphi 0, %s183
    %s198 = sphi 0, %s184
    %s202 = sphi 0, %s202
    %s204 = sphi 0, %s202
    %s205 = sphi 0, %s204
    %s219 = sphi 0, %s205
    %s223 = sphi 0, %s223
    %s225 = sphi 0, %s223
    %s226 = sphi 0, %s225
    %s240 = sphi 0, %s226
    %s246 = sphi 0, %s248
    %s249 = sphi 0, %s246
    %s250 = sphi 0, %s249
    %s266 = sphi 0, %s250
  $region4: #{basic_block_forward.5} parent=0 // loop_header_branch
    %19 = sbr.rel (%p17) target = $region8
  $region5: #{basic_block_forward.5} parent=0 // loop_body
    %s21 = ssub.s32 %s16, 1
    %s22 = ssub.s32 %s16, 2
    %s23 = sadd.s32 %s16, 1
    %s24 = ssub.s32 %s16, %s23
    %p25 = scmp.eq.s32.totalorder %s24, 0
    %s27 = sadd.s32 %s26, 1
    %s28 = scalar_select %p25, %s26, %s27
    %p31 = pneg %p25
    %p32 = scmp.eq.s32.totalorder %s16, 1
    %p33 = por %p31, %p32
    %p34 = scmp.ne.s32.totalorder %s26, %s29
    %p35 = scmp.eq.s32.totalorder %s16, 0
    %p36 = por %p34, %p35
    %p37 = scmp.ne.s32.totalorder %s26, %s29
    %p38 = scmp.eq.s32.totalorder %s21, 1
    %p39 = por %p37, %p38
    %p40 = scmp.ne.s32.totalorder %s29, %s30
    %p41 = scmp.eq.s32.totalorder %s21, 0
    %p42 = por %p40, %p41
    %p43 = scmp.ne.s32.totalorder %s29, %s30
    %p44 = scmp.eq.s32.totalorder %s22, 1
    %p45 = por %p43, %p44
    %p47 = scmp.ne.s32.totalorder %s30, %s46
    %p48 = scmp.eq.s32.totalorder %s22, 0
    %p49 = por %p47, %p48
    %s51 = sadd.s32 %s50, 1
    %p54 = scmp.eq.s32.totalorder %s16, 1
    %p55 = scmp.ne.s32.totalorder %s50, %s52
    %p56 = scmp.eq.s32.totalorder %s16, 0
    %p57 = por %p55, %p56
    %p58 = scmp.ne.s32.totalorder %s50, %s52
    %p59 = scmp.eq.s32.totalorder %s21, 1
    %p60 = por %p58, %p59
    %p61 = scmp.ne.s32.totalorder %s52, %s53
    %p62 = scmp.eq.s32.totalorder %s21, 0
    %p63 = por %p61, %p62
    %p64 = scmp.ne.s32.totalorder %s52, %s53
    %p65 = scmp.eq.s32.totalorder %s22, 1
    %p66 = por %p64, %p65
    %p68 = scmp.ne.s32.totalorder %s53, %s67
    %p69 = scmp.eq.s32.totalorder %s22, 0
    %p70 = por %p68, %p69
    %s72 = sadd.s32 %s71, 1
    %p75 = scmp.eq.s32.totalorder %s16, 1
    %p76 = scmp.ne.s32.totalorder %s71, %s73
    %p77 = scmp.eq.s32.totalorder %s16, 0
    %p78 = por %p76, %p77
    %p79 = scmp.ne.s32.totalorder %s71, %s73
    %p80 = scmp.eq.s32.totalorder %s21, 1
    %p81 = por %p79, %p80
    %p82 = scmp.ne.s32.totalorder %s73, %s74
    %p83 = scmp.eq.s32.totalorder %s21, 0
    %p84 = por %p82, %p83
    %p85 = scmp.ne.s32.totalorder %s73, %s74
    %p86 = scmp.eq.s32.totalorder %s22, 1
    %p87 = por %p85, %p86
    %p89 = scmp.ne.s32.totalorder %s74, %s88
    %p90 = scmp.eq.s32.totalorder %s22, 0
    %p91 = por %p89, %p90
    %s93 = sadd.s32 %s92, 1
    %p96 = scmp.eq.s32.totalorder %s16, 1
    %p97 = scmp.ne.s32.totalorder %s92, %s94
    %p98 = scmp.eq.s32.totalorder %s16, 0
    %p99 = por %p97, %p98
    %p100 = scmp.ne.s32.totalorder %s92, %s94
    %p101 = scmp.eq.s32.totalorder %s21, 1
    %p102 = por %p100, %p101
    %p103 = scmp.ne.s32.totalorder %s94, %s95
    %p104 = scmp.eq.s32.totalorder %s21, 0
    %p105 = por %p103, %p104
    %p106 = scmp.ne.s32.totalorder %s94, %s95
    %p107 = scmp.eq.s32.totalorder %s22, 1
    %p108 = por %p106, %p107
    %p110 = scmp.ne.s32.totalorder %s95, %s109
    %p111 = scmp.eq.s32.totalorder %s22, 0
    %p112 = por %p110, %p111
    %s114 = sadd.s32 %s113, 1
    %p117 = scmp.eq.s32.totalorder %s16, 1
    %p118 = scmp.ne.s32.totalorder %s113, %s115
    %p119 = scmp.eq.s32.totalorder %s16, 0
    %p120 = por %p118, %p119
    %p121 = scmp.ne.s32.totalorder %s113, %s115
    %p122 = scmp.eq.s32.totalorder %s21, 1
    %p123 = por %p121, %p122
    %p124 = scmp.ne.s32.totalorder %s115, %s116
    %p125 = scmp.eq.s32.totalorder %s21, 0
    %p126 = por %p124, %p125
    %p127 = scmp.ne.s32.totalorder %s115, %s116
    %p128 = scmp.eq.s32.totalorder %s22, 1
    %p129 = por %p127, %p128
    %p131 = scmp.ne.s32.totalorder %s116, %s130
    %p132 = scmp.eq.s32.totalorder %s22, 0
    %p133 = por %p131, %p132
    %s134 = ssub.s32 %s16, %s23
    %p135 = scmp.eq.s32.totalorder %s134, 0
    %s137 = sadd.s32 %s136, 1
    %s138 = scalar_select %p135, %s136, %s137
    %p141 = pneg %p135
    %p142 = scmp.eq.s32.totalorder %s16, 1
    %p143 = por %p141, %p142
    %p144 = scmp.ne.s32.totalorder %s136, %s139
    %p145 = scmp.eq.s32.totalorder %s16, 0
    %p146 = por %p144, %p145
    %p147 = scmp.ne.s32.totalorder %s136, %s139
    %p148 = scmp.eq.s32.totalorder %s21, 1
    %p149 = por %p147, %p148
    %p150 = scmp.ne.s32.totalorder %s139, %s140
    %p151 = scmp.eq.s32.totalorder %s21, 0
    %p152 = por %p150, %p151
    %p153 = scmp.ne.s32.totalorder %s139, %s140
    %p154 = scmp.eq.s32.totalorder %s22, 1
    %p155 = por %p153, %p154
    %p157 = scmp.ne.s32.totalorder %s140, %s156
    %p158 = scmp.eq.s32.totalorder %s22, 0
    %p159 = por %p157, %p158
    %s161 = sadd.s32 %s160, 1
    %p164 = scmp.eq.s32.totalorder %s16, 1
    %p165 = scmp.ne.s32.totalorder %s160, %s162
    %p166 = scmp.eq.s32.totalorder %s16, 0
    %p167 = por %p165, %p166
    %p168 = scmp.ne.s32.totalorder %s160, %s162
    %p169 = scmp.eq.s32.totalorder %s21, 1
    %p170 = por %p168, %p169
    %p171 = scmp.ne.s32.totalorder %s162, %s163
    %p172 = scmp.eq.s32.totalorder %s21, 0
    %p173 = por %p171, %p172
    %p174 = scmp.ne.s32.totalorder %s162, %s163
    %p175 = scmp.eq.s32.totalorder %s22, 1
    %p176 = por %p174, %p175
    %p178 = scmp.ne.s32.totalorder %s163, %s177
    %p179 = scmp.eq.s32.totalorder %s22, 0
    %p180 = por %p178, %p179
    %s182 = sadd.s32 %s181, 1
    %p185 = scmp.eq.s32.totalorder %s16, 1
    %p186 = scmp.ne.s32.totalorder %s181, %s183
    %p187 = scmp.eq.s32.totalorder %s16, 0
    %p188 = por %p186, %p187
    %p189 = scmp.ne.s32.totalorder %s181, %s183
    %p190 = scmp.eq.s32.totalorder %s21, 1
    %p191 = por %p189, %p190
    %p192 = scmp.ne.s32.totalorder %s183, %s184
    %p193 = scmp.eq.s32.totalorder %s21, 0
    %p194 = por %p192, %p193
    %p195 = scmp.ne.s32.totalorder %s183, %s184
    %p196 = scmp.eq.s32.totalorder %s22, 1
    %p197 = por %p195, %p196
    %p199 = scmp.ne.s32.totalorder %s184, %s198
    %p200 = scmp.eq.s32.totalorder %s22, 0
    %p201 = por %p199, %p200
    %s203 = sadd.s32 %s202, 1
    %p206 = scmp.eq.s32.totalorder %s16, 1
    %p207 = scmp.ne.s32.totalorder %s202, %s204
    %p208 = scmp.eq.s32.totalorder %s16, 0
    %p209 = por %p207, %p208
    %p210 = scmp.ne.s32.totalorder %s202, %s204
    %p211 = scmp.eq.s32.totalorder %s21, 1
    %p212 = por %p210, %p211
    %p213 = scmp.ne.s32.totalorder %s204, %s205
    %p214 = scmp.eq.s32.totalorder %s21, 0
    %p215 = por %p213, %p214
    %p216 = scmp.ne.s32.totalorder %s204, %s205
    %p217 = scmp.eq.s32.totalorder %s22, 1
    %p218 = por %p216, %p217
    %p220 = scmp.ne.s32.totalorder %s205, %s219
    %p221 = scmp.eq.s32.totalorder %s22, 0
    %p222 = por %p220, %p221
    %s224 = sadd.s32 %s223, 1
    %p227 = scmp.eq.s32.totalorder %s16, 1
    %p228 = scmp.ne.s32.totalorder %s223, %s225
    %p229 = scmp.eq.s32.totalorder %s16, 0
    %p230 = por %p228, %p229
    %p231 = scmp.ne.s32.totalorder %s223, %s225
    %p232 = scmp.eq.s32.totalorder %s21, 1
    %p233 = por %p231, %p232
    %p234 = scmp.ne.s32.totalorder %s225, %s226
    %p235 = scmp.eq.s32.totalorder %s21, 0
    %p236 = por %p234, %p235
    %p237 = scmp.ne.s32.totalorder %s225, %s226
    %p238 = scmp.eq.s32.totalorder %s22, 1
    %p239 = por %p237, %p238
    %p241 = scmp.ne.s32.totalorder %s226, %s240
    %p242 = scmp.eq.s32.totalorder %s22, 0
    %p243 = por %p241, %p242
    %s244 = ssub.s32 %s16, %s23
    %p245 = scmp.eq.s32.totalorder %s244, 0
    %s247 = sadd.s32 %s246, 1
    %s248 = scalar_select %p245, %s246, %s247
    %p251 = pneg %p245
    %p252 = scmp.eq.s32.totalorder %s16, 1
    %p253 = por %p251, %p252
    %p254 = scmp.ne.s32.totalorder %s246, %s249
    %p255 = scmp.eq.s32.totalorder %s16, 0
    %p256 = por %p254, %p255
    %p257 = scmp.ne.s32.totalorder %s246, %s249
    %p258 = scmp.eq.s32.totalorder %s21, 1
    %p259 = por %p257, %p258
    %p260 = scmp.ne.s32.totalorder %s249, %s250
    %p261 = scmp.eq.s32.totalorder %s21, 0
    %p262 = por %p260, %p261
    %p263 = scmp.ne.s32.totalorder %s249, %s250
    %p264 = scmp.eq.s32.totalorder %s22, 1
    %p265 = por %p263, %p264
    %p267 = scmp.ne.s32.totalorder %s250, %s266
    %p268 = scmp.eq.s32.totalorder %s22, 0
    %p269 = por %p267, %p268
    %p270 = scmp.le.s32.totalorder 1, %s16
    %p271 = scmp.lt.s32.totalorder %s16, 3
    %p272 = pnand %p270, %p271
    %p273 = pneg %p272
    // Predicated region
    $region9: #{basic_block_forward.5} parent=5 // pred_check
      _
    $region10: #{basic_block_forward.5} parent=5 // pred_check_branch
      %275 = sbr.rel (%p272) target = $region12
    $region11: #{basic_block_forward.5} parent=5 // pred_region
      %s276 = ssub.s32 %s16, 1
      // Predicated region
      $region13: #{basic_block_forward.5} parent=11 // pred_check
        %p277 = pneg %p63
      $region14: #{basic_block_forward.5} parent=11 // pred_check_branch
        %279 = sbr.rel (%p277) target = $region16
      $region15: #{basic_block_forward.5} parent=11 // pred_region
        _
      $region16: #{basic_block_forward.5} parent=11 // pred_fallthru
        _
      // Predicated region
      $region17: #{basic_block_forward.5} parent=11 // pred_check
        %p280 = pneg %p84
      $region18: #{basic_block_forward.5} parent=11 // pred_check_branch
        %282 = sbr.rel (%p280) target = $region20
      $region19: #{basic_block_forward.5} parent=11 // pred_region
        _
      $region20: #{basic_block_forward.5} parent=11 // pred_fallthru
        _
      // Predicated region
      $region21: #{basic_block_forward.5} parent=11 // pred_check
        %p283 = pneg %p105
      $region22: #{basic_block_forward.5} parent=11 // pred_check_branch
        %285 = sbr.rel (%p283) target = $region24
      $region23: #{basic_block_forward.5} parent=11 // pred_region
        _
      $region24: #{basic_block_forward.5} parent=11 // pred_fallthru
        _
      // Predicated region
      $region25: #{basic_block_forward.5} parent=11 // pred_check
        %p286 = pneg %p126
      $region26: #{basic_block_forward.5} parent=11 // pred_check_branch
        %288 = sbr.rel (%p286) target = $region28
      $region27: #{basic_block_forward.5} parent=11 // pred_region
        _
      $region28: #{basic_block_forward.5} parent=11 // pred_fallthru
        _
      // Predicated region
      $region29: #{basic_block_forward.5} parent=11 // pred_check
        %p289 = pneg %p173
      $region30: #{basic_block_forward.5} parent=11 // pred_check_branch
        %291 = sbr.rel (%p289) target = $region32
      $region31: #{basic_block_forward.5} parent=11 // pred_region
        _
      $region32: #{basic_block_forward.5} parent=11 // pred_fallthru
        _
      // Predicated region
      $region33: #{basic_block_forward.5} parent=11 // pred_check
        %p292 = pneg %p194
      $region34: #{basic_block_forward.5} parent=11 // pred_check_branch
        %294 = sbr.rel (%p292) target = $region36
      $region35: #{basic_block_forward.5} parent=11 // pred_region
        _
      $region36: #{basic_block_forward.5} parent=11 // pred_fallthru
        _
      // Predicated region
      $region37: #{basic_block_forward.5} parent=11 // pred_check
        %p295 = pneg %p215
      $region38: #{basic_block_forward.5} parent=11 // pred_check_branch
        %297 = sbr.rel (%p295) target = $region40
      $region39: #{basic_block_forward.5} parent=11 // pred_region
        _
      $region40: #{basic_block_forward.5} parent=11 // pred_fallthru
        _
      // Predicated region
      $region41: #{basic_block_forward.5} parent=11 // pred_check
        %p298 = pneg %p236
      $region42: #{basic_block_forward.5} parent=11 // pred_check_branch
        %300 = sbr.rel (%p298) target = $region44
      $region43: #{basic_block_forward.5} parent=11 // pred_region
        _
      $region44: #{basic_block_forward.5} parent=11 // pred_fallthru
        _
    $region12: #{basic_block_forward.5} parent=5 // pred_fallthru
      _
    %p301 = scmp.lt.s32.totalorder %s16, 2
    // Predicated region
    $region45: #{basic_block_forward.5} parent=5 // pred_check
      %p302 = pneg %p301
    $region46: #{basic_block_forward.5} parent=5 // pred_check_branch
      %304 = sbr.rel (%p302) target = $region48
    $region47: #{basic_block_forward.5} parent=5 // pred_region
      // Predicated region
      $region49: #{basic_block_forward.5} parent=47 // pred_check
        %p305 = pneg %p36
      $region50: #{basic_block_forward.5} parent=47 // pred_check_branch
        %307 = sbr.rel (%p305) target = $region52
      $region51: #{basic_block_forward.5} parent=47 // pred_region
        %p308 = scmp.lt.s32.totalorder %s16, 1
        %s309 = scalar_select %p308, %s16, 1
        %s310 = smul.addr %s309, 8
        %s311 = smul.addr %s310, 4
        %s312 = scalar_lea.vmem %s0, %s311
      $region52: #{basic_block_forward.5} parent=47 // pred_fallthru
        _
      // Predicated region
      $region53: #{basic_block_forward.5} parent=47 // pred_check
        %p313 = pneg %p146
      $region54: #{basic_block_forward.5} parent=47 // pred_check_branch
        %315 = sbr.rel (%p313) target = $region56
      $region55: #{basic_block_forward.5} parent=47 // pred_region
        %p316 = scmp.lt.s32.totalorder %s16, 1
        %s317 = scalar_select %p316, %s16, 1
        %s318 = smul.addr %s317, 8
        %s319 = smul.addr %s318, 4
        %s320 = scalar_lea.vmem %s5, %s319
      $region56: #{basic_block_forward.5} parent=47 // pred_fallthru
        _
    $region48: #{basic_block_forward.5} parent=5 // pred_fallthru
      _
    %p321 = scmp.le.s32.totalorder 1, %s16
    %p322 = scmp.lt.s32.totalorder %s16, 3
    %p323 = pnand %p321, %p322
    %p324 = pneg %p323
    // Predicated region
    $region57: #{basic_block_forward.5} parent=5 // pred_check
      _
    $region58: #{basic_block_forward.5} parent=5 // pred_check_branch
      %326 = sbr.rel (%p323) target = $region60
    $region59: #{basic_block_forward.5} parent=5 // pred_region
      %s327 = ssub.s32 %s16, 1
      %p328 = scmp.lt.s32.totalorder %s21, 1
      %s329 = scalar_select %p328, %s21, 1
      %s330 = smul.addr %s329, 8
      %s331 = smul.addr %s330, 4
      %s332 = scalar_lea.vmem %s0, %s331
      %p333 = pneg %p42
      %p334 = pneg %p39
      %p335 = pneg %p63
      %p336 = pneg %p60
      %p337 = pneg %p84
      %p338 = pneg %p81
      %p339 = pneg %p105
      %p340 = pneg %p102
      %p341 = pneg %p126
      %p342 = pneg %p123
      %p343 = scmp.lt.s32.totalorder %s21, 1
      %s344 = scalar_select %p343, %s21, 1
      %s345 = smul.addr %s344, 8
      %s346 = smul.addr %s345, 4
      %s347 = scalar_lea.vmem %s5, %s346
      %p348 = pneg %p152
      %p349 = pneg %p149
      %p350 = pneg %p173
      %p351 = pneg %p170
      %p352 = pneg %p194
      %p353 = pneg %p191
      %p354 = pneg %p215
      %p355 = pneg %p212
      %p356 = pneg %p236
      %p357 = pneg %p233
      %p358 = pneg %p262
      %p359 = pneg %p259
      %p360 = scmp.lt.s32.totalorder %s21, 1
      %s361 = scalar_select %p360, %s21, 1
      %s362 = smul.addr %s361, 8
      %s363 = smul.addr %s362, 8
      %s364 = scalar_lea.vmem %s10, %s363
      %p365 = scmp.lt.s32.totalorder %s21, 1
      %s366 = scalar_select %p365, %s21, 1
      %s367 = smul.addr %s366, 8
      %s368 = smul.addr %s367, 4
      %s369 = scalar_lea.vmem %s0, %s368
      %p370 = scmp.lt.s32.totalorder %s21, 1
      %s371 = scalar_select %p370, %s21, 1
      %s372 = smul.addr %s371, 8
      %s373 = smul.addr %s372, 4
      %s374 = scalar_lea.vmem %s5, %s373
      %p375 = scmp.lt.s32.totalorder %s21, 1
      %s376 = scalar_select %p375, %s21, 1
      %s377 = smul.addr %s376, 8
      %s378 = smul.addr %s377, 8
      %s379 = scalar_lea.vmem %s10, %s378
      %v380 = vld [vmem:[%s1] sm:$0x1]
      %v381 = vmul.f32 %v380, 0.0078125
      %v382 = vld [vmem:[%s2] sm:$0x1]
      %v383 = vmul.f32 %v382, 0.0078125
      %v384 = vmul.f32 %v381, %v381
      %v385 = vsub.f32 %v383, %v384
      %v386 = vmax.f32 %v385, 0.0
      %v387 = vadd.f32 %v386, 1e-05
      %v388 = vrsqrt.pop %v387
      %v389 = vld [vmem:[%s3] sm:$0x1]
      %v390 = vmul.f32 %v388, %v389
      %v391 = vld [vmem:[%s4] sm:$0x1]
      %v392 = vmul.f32 %v381, %v390
      %v393 = vsub.f32 %v391, %v392
      %v394 = vld [vmem:[%s369] sm:$0xf]
      %v395 = vld [vmem:[%s369 + $0x4] sm:$0xf]
      %v396 = vld [vmem:[%s369 + $0x8] sm:$0xf]
      %v397 = vld [vmem:[%s369 + $0xc] sm:$0xf]
      %v398 = vld [vmem:[%s369 + $0x10] sm:$0xf]
      %v399 = vld [vmem:[%s369 + $0x14] sm:$0xf]
      %v400 = vld [vmem:[%s369 + $0x18] sm:$0xf]
      %v401 = vld [vmem:[%s369 + $0x1c] sm:$0xf]
      %v402 = vunpack.c.l.bf16 %v394
      %v403 = vunpack.c.l.bf16 %v395
      %v404 = vunpack.c.l.bf16 %v396
      %v405 = vunpack.c.l.bf16 %v397
      %v406 = vunpack.c.l.bf16 %v398
      %v407 = vunpack.c.l.bf16 %v399
      %v408 = vunpack.c.l.bf16 %v400
      %v409 = vunpack.c.l.bf16 %v401
      %v411 = vlaneseq
      %v412 = vshrl.u32 %v411, 7
      %v413 = vsub.s32 0, %v412
      %v414 = vrot.slane %v390, %v413
      %v416 = vmul.f32 %v402, %v414
      %v417 = vmul.f32 %v403, %v414
      %v418 = vmul.f32 %v404, %v414
      %v419 = vmul.f32 %v405, %v414
      %v420 = vmul.f32 %v406, %v414
      %v421 = vmul.f32 %v407, %v414
      %v422 = vmul.f32 %v408, %v414
      %v423 = vmul.f32 %v409, %v414
      %v425 = vlaneseq
      %v426 = vshrl.u32 %v425, 7
      %v427 = vsub.s32 0, %v426
      %v428 = vrot.slane %v393, %v427
      %v430 = vadd.f32 %v416, %v428
      %v431 = vadd.f32 %v417, %v428
      %v432 = vadd.f32 %v418, %v428
      %v433 = vadd.f32 %v419, %v428
      %v434 = vadd.f32 %v420, %v428
      %v435 = vadd.f32 %v421, %v428
      %v436 = vadd.f32 %v422, %v428
      %v437 = vadd.f32 %v423, %v428
      %v438 = vld [vmem:[%s6] sm:$0x1]
      %v439 = vmul.f32 %v438, 0.0078125
      %v440 = vld [vmem:[%s7] sm:$0x1]
      %v441 = vmul.f32 %v440, 0.0078125
      %v442 = vmul.f32 %v439, %v439
      %v443 = vsub.f32 %v441, %v442
      %v444 = vmax.f32 %v443, 0.0
      %v445 = vadd.f32 %v444, 1e-05
      %v446 = vrsqrt.pop %v445
      %v447 = vld [vmem:[%s8] sm:$0x1]
      %v448 = vmul.f32 %v446, %v447
      %v449 = vld [vmem:[%s9] sm:$0x1]
      %v450 = vmul.f32 %v439, %v448
      %v451 = vsub.f32 %v449, %v450
      %v452 = vld [vmem:[%s374] sm:$0xf]
      %v453 = vld [vmem:[%s374 + $0x4] sm:$0xf]
      %v454 = vld [vmem:[%s374 + $0x8] sm:$0xf]
      %v455 = vld [vmem:[%s374 + $0xc] sm:$0xf]
      %v456 = vld [vmem:[%s374 + $0x10] sm:$0xf]
      %v457 = vld [vmem:[%s374 + $0x14] sm:$0xf]
      %v458 = vld [vmem:[%s374 + $0x18] sm:$0xf]
      %v459 = vld [vmem:[%s374 + $0x1c] sm:$0xf]
      %v460 = vunpack.c.l.bf16 %v452
      %v461 = vunpack.c.l.bf16 %v453
      %v462 = vunpack.c.l.bf16 %v454
      %v463 = vunpack.c.l.bf16 %v455
      %v464 = vunpack.c.l.bf16 %v456
      %v465 = vunpack.c.l.bf16 %v457
      %v466 = vunpack.c.l.bf16 %v458
      %v467 = vunpack.c.l.bf16 %v459
      %v469 = vlaneseq
      %v470 = vshrl.u32 %v469, 7
      %v471 = vsub.s32 0, %v470
      %v472 = vrot.slane %v448, %v471
      %v474 = vmul.f32 %v460, %v472
      %v475 = vmul.f32 %v461, %v472
      %v476 = vmul.f32 %v462, %v472
      %v477 = vmul.f32 %v463, %v472
      %v478 = vmul.f32 %v464, %v472
      %v479 = vmul.f32 %v465, %v472
      %v480 = vmul.f32 %v466, %v472
      %v481 = vmul.f32 %v467, %v472
      %v482 = vadd.f32 %v430, %v474
      %v483 = vadd.f32 %v431, %v475
      %v484 = vadd.f32 %v432, %v476
      %v485 = vadd.f32 %v433, %v477
      %v486 = vadd.f32 %v434, %v478
      %v487 = vadd.f32 %v435, %v479
      %v488 = vadd.f32 %v436, %v480
      %v489 = vadd.f32 %v437, %v481
      %v491 = vlaneseq
      %v492 = vshrl.u32 %v491, 7
      %v493 = vsub.s32 0, %v492
      %v494 = vrot.slane %v451, %v493
      %v496 = vadd.f32 %v482, %v494
      %v497 = vadd.f32 %v483, %v494
      %v498 = vadd.f32 %v484, %v494
      %v499 = vadd.f32 %v485, %v494
      %v500 = vadd.f32 %v486, %v494
      %v501 = vadd.f32 %v487, %v494
      %v502 = vadd.f32 %v488, %v494
      %v503 = vadd.f32 %v489, %v494
      %v504 = vmax.f32 %v496, 0.0
      %v505 = vmax.f32 %v497, 0.0
      %v506 = vmax.f32 %v498, 0.0
      %v507 = vmax.f32 %v499, 0.0
      %v508 = vmax.f32 %v500, 0.0
      %v509 = vmax.f32 %v501, 0.0
      %v510 = vmax.f32 %v502, 0.0
      %v511 = vmax.f32 %v503, 0.0
      %512 = vst [vmem:[%s379] sm:$0xff] %v504
      %513 = vst [vmem:[%s379 + $0x8] sm:$0xff] %v505
      %514 = vst [vmem:[%s379 + $0x10] sm:$0xff] %v506
      %515 = vst [vmem:[%s379 + $0x18] sm:$0xff] %v507
      %516 = vst [vmem:[%s379 + $0x20] sm:$0xff] %v508
      %517 = vst [vmem:[%s379 + $0x28] sm:$0xff] %v509
      %518 = vst [vmem:[%s379 + $0x30] sm:$0xff] %v510
      %519 = vst [vmem:[%s379 + $0x38] sm:$0xff] %v511
      %p520 = scmp.lt.s32.totalorder %s21, 1
      %s521 = scalar_select %p520, %s21, 1
      %s522 = smul.addr %s521, 8
      %s523 = smul.addr %s522, 8
      %s524 = scalar_lea.vmem %s10, %s523
      // Predicated region
      $region61: #{basic_block_forward.5} parent=59 // pred_check
        %p525 = pneg %p259
      $region62: #{basic_block_forward.5} parent=59 // pred_check_branch
        %527 = sbr.rel (%p525) target = $region64
      $region63: #{basic_block_forward.5} parent=59 // pred_region
        _
      $region64: #{basic_block_forward.5} parent=59 // pred_fallthru
        _
    $region60: #{basic_block_forward.5} parent=5 // pred_fallthru
      _
    %p528 = scmp.le.s32.totalorder 2, %s16
    // Predicated region
    $region65: #{basic_block_forward.5} parent=5 // pred_check
      %p529 = pneg %p528
    $region66: #{basic_block_forward.5} parent=5 // pred_check_branch
      %531 = sbr.rel (%p529) target = $region68
    $region67: #{basic_block_forward.5} parent=5 // pred_region
      %s532 = ssub.s32 %s16, 2
      // Predicated region
      $region69: #{basic_block_forward.5} parent=67 // pred_check
        %p533 = pneg %p265
      $region70: #{basic_block_forward.5} parent=67 // pred_check_branch
        %535 = sbr.rel (%p533) target = $region72
      $region71: #{basic_block_forward.5} parent=67 // pred_region
        %p536 = scmp.lt.s32.totalorder %s22, 1
        %s537 = scalar_select %p536, %s22, 1
        %s538 = smul.addr %s537, 8
        %s539 = smul.addr %s538, 8
        %s540 = scalar_lea.vmem %s10, %s539
      $region72: #{basic_block_forward.5} parent=67 // pred_fallthru
        _
    $region68: #{basic_block_forward.5} parent=5 // pred_fallthru
      _
  $region6: #{basic_block_forward.5} parent=0 // loop_footer
    %s20 = sadd.s32 1, %s16
  $region7: #{basic_block_forward.5} parent=0 // loop_footer_branch
    %15 = sbr.rel target = $region3
  $region8: #{basic_block_forward.5} parent=0 // loop_exit
    _

// kernel: basic_block_forward.3
$region0: #{basic_block_forward.3}
  #allocation0 [shape = 'u32[]', space=smem, size = 0x4, offset = 0x4, fixed_abs, tag = 'smem constant byte address 0x4 - core index']
  #allocation1 [shape = 'u32[144,128]{1,0:T(1,128)}', space=vmem, size = 0x12000, scoped, tag = 'internal scratch']
  %s0 = inlined_call_operand.vmem [shape: bf16[2,9,9,128], index: 0, kind: input, shape index: {}]
  %s1 = inlined_call_operand.vmem [shape: bf16[512,128], index: 1, kind: input, shape index: {}]
  %s2 = inlined_call_operand.vmem [shape: bf16[128,128], index: 2, kind: input, shape index: {}]
  %s3 = inlined_call_operand.vmem [shape: bf16[2,64,128], index: 3, kind: output, shape index: {0}]
  %s4 = inlined_call_operand.vmem [shape: f32[2,1,128], index: 4, kind: output, shape index: {1}]
  %s5 = inlined_call_operand.vmem [shape: f32[2,1,128], index: 5, kind: output, shape index: {2}]
  %s6 = inlined_call_operand.vmem [shape: bf16[2,64,128], index: 6, kind: output, shape index: {3}]
  %s7 = inlined_call_operand.vmem [shape: f32[2,1,128], index: 7, kind: output, shape index: {4}]
  %s8 = inlined_call_operand.vmem [shape: f32[2,1,128], index: 8, kind: output, shape index: {5}]
  %9 = xla_tuple %s3, %s4, %s5, %s6, %s7, %s8
  %s10 = sld [smem:[#allocation0]]
  $region85: #{basic_block_forward.3} parent=0
    _
  %s12 = ssub.s32 1, %s10
  %s13 = scalar_select 0, %s12, %s10
  loop: start=0, step=1, limit=4
  $region2: #{basic_block_forward.3} parent=0 // loop_pre_header
    _
  $region3: #{basic_block_forward.3} parent=0 // loop_header
    %s15 = sphi 0, %s19
    %p16 = scmp.ge.s32.totalorder %s15, 4
    %s25 = sphi 0, %s27
    %s28 = sphi 0, %s25
    %s29 = sphi 0, %s28
    %s45 = sphi 0, %s29
    %s49 = sphi 0, %s49
    %s51 = sphi 0, %s49
    %s52 = sphi 0, %s51
    %s66 = sphi 0, %s52
    %s70 = sphi 0, %s70
    %s72 = sphi 0, %s70
    %s73 = sphi 0, %s72
    %s87 = sphi 0, %s73
    %s93 = sphi 0, %s95
    %s96 = sphi 0, %s93
    %s97 = sphi 0, %s96
    %s113 = sphi 0, %s97
    %s119 = sphi 0, %s121
    %s122 = sphi 0, %s119
    %s123 = sphi 0, %s122
    %s139 = sphi 0, %s123
    %s145 = sphi 0, %s147
    %s148 = sphi 0, %s145
    %s149 = sphi 0, %s148
    %s165 = sphi 0, %s149
    %s171 = sphi 0, %s173
    %s174 = sphi 0, %s171
    %s175 = sphi 0, %s174
    %s191 = sphi 0, %s175
    %s197 = sphi 0, %s199
    %s200 = sphi 0, %s197
    %s201 = sphi 0, %s200
    %s217 = sphi 0, %s201
    %s223 = sphi 0, %s225
    %s226 = sphi 0, %s223
    %s227 = sphi 0, %s226
    %s243 = sphi 0, %s227
  $region4: #{basic_block_forward.3} parent=0 // loop_header_branch
    %18 = sbr.rel (%p16) target = $region8
  $region5: #{basic_block_forward.3} parent=0 // loop_body
    %s20 = ssub.s32 %s15, 1
    %s21 = ssub.s32 %s15, 2
    %s22 = sadd.s32 %s15, 1
    %s23 = ssub.s32 %s15, %s22
    %p24 = scmp.eq.s32.totalorder %s23, 0
    %s26 = sadd.s32 %s25, 1
    %s27 = scalar_select %p24, %s25, %s26
    %p30 = pneg %p24
    %p31 = scmp.eq.s32.totalorder %s15, 1
    %p32 = por %p30, %p31
    %p33 = scmp.ne.s32.totalorder %s25, %s28
    %p34 = scmp.eq.s32.totalorder %s15, 0
    %p35 = por %p33, %p34
    %p36 = scmp.ne.s32.totalorder %s25, %s28
    %p37 = scmp.eq.s32.totalorder %s20, 1
    %p38 = por %p36, %p37
    %p39 = scmp.ne.s32.totalorder %s28, %s29
    %p40 = scmp.eq.s32.totalorder %s20, 0
    %p41 = por %p39, %p40
    %p42 = scmp.ne.s32.totalorder %s28, %s29
    %p43 = scmp.eq.s32.totalorder %s21, 1
    %p44 = por %p42, %p43
    %p46 = scmp.ne.s32.totalorder %s29, %s45
    %p47 = scmp.eq.s32.totalorder %s21, 0
    %p48 = por %p46, %p47
    %s50 = sadd.s32 %s49, 1
    %p53 = scmp.eq.s32.totalorder %s15, 1
    %p54 = scmp.ne.s32.totalorder %s49, %s51
    %p55 = scmp.eq.s32.totalorder %s15, 0
    %p56 = por %p54, %p55
    %p57 = scmp.ne.s32.totalorder %s49, %s51
    %p58 = scmp.eq.s32.totalorder %s20, 1
    %p59 = por %p57, %p58
    %p60 = scmp.ne.s32.totalorder %s51, %s52
    %p61 = scmp.eq.s32.totalorder %s20, 0
    %p62 = por %p60, %p61
    %p63 = scmp.ne.s32.totalorder %s51, %s52
    %p64 = scmp.eq.s32.totalorder %s21, 1
    %p65 = por %p63, %p64
    %p67 = scmp.ne.s32.totalorder %s52, %s66
    %p68 = scmp.eq.s32.totalorder %s21, 0
    %p69 = por %p67, %p68
    %s71 = sadd.s32 %s70, 1
    %p74 = scmp.eq.s32.totalorder %s15, 1
    %p75 = scmp.ne.s32.totalorder %s70, %s72
    %p76 = scmp.eq.s32.totalorder %s15, 0
    %p77 = por %p75, %p76
    %p78 = scmp.ne.s32.totalorder %s70, %s72
    %p79 = scmp.eq.s32.totalorder %s20, 1
    %p80 = por %p78, %p79
    %p81 = scmp.ne.s32.totalorder %s72, %s73
    %p82 = scmp.eq.s32.totalorder %s20, 0
    %p83 = por %p81, %p82
    %p84 = scmp.ne.s32.totalorder %s72, %s73
    %p85 = scmp.eq.s32.totalorder %s21, 1
    %p86 = por %p84, %p85
    %p88 = scmp.ne.s32.totalorder %s73, %s87
    %p89 = scmp.eq.s32.totalorder %s21, 0
    %p90 = por %p88, %p89
    %s91 = ssub.s32 %s15, %s22
    %p92 = scmp.eq.s32.totalorder %s91, 0
    %s94 = sadd.s32 %s93, 1
    %s95 = scalar_select %p92, %s93, %s94
    %p98 = pneg %p92
    %p99 = scmp.eq.s32.totalorder %s15, 1
    %p100 = por %p98, %p99
    %p101 = scmp.ne.s32.totalorder %s93, %s96
    %p102 = scmp.eq.s32.totalorder %s15, 0
    %p103 = por %p101, %p102
    %p104 = scmp.ne.s32.totalorder %s93, %s96
    %p105 = scmp.eq.s32.totalorder %s20, 1
    %p106 = por %p104, %p105
    %p107 = scmp.ne.s32.totalorder %s96, %s97
    %p108 = scmp.eq.s32.totalorder %s20, 0
    %p109 = por %p107, %p108
    %p110 = scmp.ne.s32.totalorder %s96, %s97
    %p111 = scmp.eq.s32.totalorder %s21, 1
    %p112 = por %p110, %p111
    %p114 = scmp.ne.s32.totalorder %s97, %s113
    %p115 = scmp.eq.s32.totalorder %s21, 0
    %p116 = por %p114, %p115
    %s117 = ssub.s32 %s15, %s22
    %p118 = scmp.eq.s32.totalorder %s117, 0
    %s120 = sadd.s32 %s119, 1
    %s121 = scalar_select %p118, %s119, %s120
    %p124 = pneg %p118
    %p125 = scmp.eq.s32.totalorder %s15, 1
    %p126 = por %p124, %p125
    %p127 = scmp.ne.s32.totalorder %s119, %s122
    %p128 = scmp.eq.s32.totalorder %s15, 0
    %p129 = por %p127, %p128
    %p130 = scmp.ne.s32.totalorder %s119, %s122
    %p131 = scmp.eq.s32.totalorder %s20, 1
    %p132 = por %p130, %p131
    %p133 = scmp.ne.s32.totalorder %s122, %s123
    %p134 = scmp.eq.s32.totalorder %s20, 0
    %p135 = por %p133, %p134
    %p136 = scmp.ne.s32.totalorder %s122, %s123
    %p137 = scmp.eq.s32.totalorder %s21, 1
    %p138 = por %p136, %p137
    %p140 = scmp.ne.s32.totalorder %s123, %s139
    %p141 = scmp.eq.s32.totalorder %s21, 0
    %p142 = por %p140, %p141
    %s143 = ssub.s32 %s15, %s22
    %p144 = scmp.eq.s32.totalorder %s143, 0
    %s146 = sadd.s32 %s145, 1
    %s147 = scalar_select %p144, %s145, %s146
    %p150 = pneg %p144
    %p151 = scmp.eq.s32.totalorder %s15, 1
    %p152 = por %p150, %p151
    %p153 = scmp.ne.s32.totalorder %s145, %s148
    %p154 = scmp.eq.s32.totalorder %s15, 0
    %p155 = por %p153, %p154
    %p156 = scmp.ne.s32.totalorder %s145, %s148
    %p157 = scmp.eq.s32.totalorder %s20, 1
    %p158 = por %p156, %p157
    %p159 = scmp.ne.s32.totalorder %s148, %s149
    %p160 = scmp.eq.s32.totalorder %s20, 0
    %p161 = por %p159, %p160
    %p162 = scmp.ne.s32.totalorder %s148, %s149
    %p163 = scmp.eq.s32.totalorder %s21, 1
    %p164 = por %p162, %p163
    %p166 = scmp.ne.s32.totalorder %s149, %s165
    %p167 = scmp.eq.s32.totalorder %s21, 0
    %p168 = por %p166, %p167
    %s169 = ssub.s32 %s15, %s22
    %p170 = scmp.eq.s32.totalorder %s169, 0
    %s172 = sadd.s32 %s171, 1
    %s173 = scalar_select %p170, %s171, %s172
    %p176 = pneg %p170
    %p177 = scmp.eq.s32.totalorder %s15, 1
    %p178 = por %p176, %p177
    %p179 = scmp.ne.s32.totalorder %s171, %s174
    %p180 = scmp.eq.s32.totalorder %s15, 0
    %p181 = por %p179, %p180
    %p182 = scmp.ne.s32.totalorder %s171, %s174
    %p183 = scmp.eq.s32.totalorder %s20, 1
    %p184 = por %p182, %p183
    %p185 = scmp.ne.s32.totalorder %s174, %s175
    %p186 = scmp.eq.s32.totalorder %s20, 0
    %p187 = por %p185, %p186
    %p188 = scmp.ne.s32.totalorder %s174, %s175
    %p189 = scmp.eq.s32.totalorder %s21, 1
    %p190 = por %p188, %p189
    %p192 = scmp.ne.s32.totalorder %s175, %s191
    %p193 = scmp.eq.s32.totalorder %s21, 0
    %p194 = por %p192, %p193
    %s195 = ssub.s32 %s15, %s22
    %p196 = scmp.eq.s32.totalorder %s195, 0
    %s198 = sadd.s32 %s197, 1
    %s199 = scalar_select %p196, %s197, %s198
    %p202 = pneg %p196
    %p203 = scmp.eq.s32.totalorder %s15, 1
    %p204 = por %p202, %p203
    %p205 = scmp.ne.s32.totalorder %s197, %s200
    %p206 = scmp.eq.s32.totalorder %s15, 0
    %p207 = por %p205, %p206
    %p208 = scmp.ne.s32.totalorder %s197, %s200
    %p209 = scmp.eq.s32.totalorder %s20, 1
    %p210 = por %p208, %p209
    %p211 = scmp.ne.s32.totalorder %s200, %s201
    %p212 = scmp.eq.s32.totalorder %s20, 0
    %p213 = por %p211, %p212
    %p214 = scmp.ne.s32.totalorder %s200, %s201
    %p215 = scmp.eq.s32.totalorder %s21, 1
    %p216 = por %p214, %p215
    %p218 = scmp.ne.s32.totalorder %s201, %s217
    %p219 = scmp.eq.s32.totalorder %s21, 0
    %p220 = por %p218, %p219
    %s221 = ssub.s32 %s15, %s22
    %p222 = scmp.eq.s32.totalorder %s221, 0
    %s224 = sadd.s32 %s223, 1
    %s225 = scalar_select %p222, %s223, %s224
    %p228 = pneg %p222
    %p229 = scmp.eq.s32.totalorder %s15, 1
    %p230 = por %p228, %p229
    %p231 = scmp.ne.s32.totalorder %s223, %s226
    %p232 = scmp.eq.s32.totalorder %s15, 0
    %p233 = por %p231, %p232
    %p234 = scmp.ne.s32.totalorder %s223, %s226
    %p235 = scmp.eq.s32.totalorder %s20, 1
    %p236 = por %p234, %p235
    %p237 = scmp.ne.s32.totalorder %s226, %s227
    %p238 = scmp.eq.s32.totalorder %s20, 0
    %p239 = por %p237, %p238
    %p240 = scmp.ne.s32.totalorder %s226, %s227
    %p241 = scmp.eq.s32.totalorder %s21, 1
    %p242 = por %p240, %p241
    %p244 = scmp.ne.s32.totalorder %s227, %s243
    %p245 = scmp.eq.s32.totalorder %s21, 0
    %p246 = por %p244, %p245
    %p247 = scmp.le.s32.totalorder 1, %s15
    %p248 = scmp.lt.s32.totalorder %s15, 3
    %p249 = pnand %p247, %p248
    %p250 = pneg %p249
    // Predicated region
    $region9: #{basic_block_forward.3} parent=5 // pred_check
      _
    $region10: #{basic_block_forward.3} parent=5 // pred_check_branch
      %252 = sbr.rel (%p249) target = $region12
    $region11: #{basic_block_forward.3} parent=5 // pred_region
      %s253 = ssub.s32 %s15, 1
      // Predicated region
      $region13: #{basic_block_forward.3} parent=11 // pred_check
        %p254 = pneg %p62
      $region14: #{basic_block_forward.3} parent=11 // pred_check_branch
        %256 = sbr.rel (%p254) target = $region16
      $region15: #{basic_block_forward.3} parent=11 // pred_region
        _
      $region16: #{basic_block_forward.3} parent=11 // pred_fallthru
        _
      // Predicated region
      $region17: #{basic_block_forward.3} parent=11 // pred_check
        %p257 = pneg %p83
      $region18: #{basic_block_forward.3} parent=11 // pred_check_branch
        %259 = sbr.rel (%p257) target = $region20
      $region19: #{basic_block_forward.3} parent=11 // pred_region
        _
      $region20: #{basic_block_forward.3} parent=11 // pred_fallthru
        _
    $region12: #{basic_block_forward.3} parent=5 // pred_fallthru
      _
    %p260 = scmp.lt.s32.totalorder %s15, 2
    // Predicated region
    $region21: #{basic_block_forward.3} parent=5 // pred_check
      %p261 = pneg %p260
    $region22: #{basic_block_forward.3} parent=5 // pred_check_branch
      %263 = sbr.rel (%p261) target = $region24
    $region23: #{basic_block_forward.3} parent=5 // pred_region
      // Predicated region
      $region25: #{basic_block_forward.3} parent=23 // pred_check
        %p264 = pneg %p35
      $region26: #{basic_block_forward.3} parent=23 // pred_check_branch
        %266 = sbr.rel (%p264) target = $region28
      $region27: #{basic_block_forward.3} parent=23 // pred_region
        %p267 = scmp.lt.s32.totalorder %s15, 1
        %s268 = scalar_select %p267, %s15, 1
        %s269 = smul.addr %s268, 18
        %s270 = smul.addr %s269, 4
        %s271 = scalar_lea.vmem %s0, %s270
      $region28: #{basic_block_forward.3} parent=23 // pred_fallthru
        _
    $region24: #{basic_block_forward.3} parent=5 // pred_fallthru
      _
    %p272 = scmp.le.s32.totalorder 1, %s15
    %p273 = scmp.lt.s32.totalorder %s15, 3
    %p274 = pnand %p272, %p273
    %p275 = pneg %p274
    // Predicated region
    $region29: #{basic_block_forward.3} parent=5 // pred_check
      _
    $region30: #{basic_block_forward.3} parent=5 // pred_check_branch
      %277 = sbr.rel (%p274) target = $region32
    $region31: #{basic_block_forward.3} parent=5 // pred_region
      %s278 = ssub.s32 %s15, 1
      %p279 = scmp.lt.s32.totalorder %s20, 1
      %s280 = scalar_select %p279, %s20, 1
      %s281 = smul.addr %s280, 18
      %s282 = smul.addr %s281, 4
      %s283 = scalar_lea.vmem %s0, %s282
      %p284 = pneg %p41
      %p285 = pneg %p38
      %p286 = pneg %p62
      %p287 = pneg %p59
      %p288 = pneg %p83
      %p289 = pneg %p80
      %p290 = pneg %p109
      %p291 = pneg %p106
      %p292 = scmp.lt.s32.totalorder %s20, 1
      %s293 = scalar_select %p292, %s20, 1
      %s294 = smul.addr %s293, 8
      %s295 = smul.addr %s294, 4
      %s296 = scalar_lea.vmem %s3, %s295
      %p297 = pneg %p135
      %p298 = pneg %p132
      %p299 = scmp.lt.s32.totalorder %s20, 1
      %s300 = scalar_select %p299, %s20, 1
      %s301 = scalar_lea.vmem %s4, %s300
      %p302 = pneg %p161
      %p303 = pneg %p158
      %p304 = scmp.lt.s32.totalorder %s20, 1
      %s305 = scalar_select %p304, %s20, 1
      %s306 = scalar_lea.vmem %s5, %s305
      %p307 = pneg %p187
      %p308 = pneg %p184
      %p309 = scmp.lt.s32.totalorder %s20, 1
      %s310 = scalar_select %p309, %s20, 1
      %s311 = smul.addr %s310, 8
      %s312 = smul.addr %s311, 4
      %s313 = scalar_lea.vmem %s6, %s312
      %p314 = pneg %p213
      %p315 = pneg %p210
      %p316 = scmp.lt.s32.totalorder %s20, 1
      %s317 = scalar_select %p316, %s20, 1
      %s318 = scalar_lea.vmem %s7, %s317
      %p319 = pneg %p239
      %p320 = pneg %p236
      %p321 = scmp.lt.s32.totalorder %s20, 1
      %s322 = scalar_select %p321, %s20, 1
      %s323 = scalar_lea.vmem %s8, %s322
      %p324 = scmp.lt.s32.totalorder %s20, 1
      %s325 = scalar_select %p324, %s20, 1
      %s326 = smul.addr %s325, 18
      %s327 = smul.addr %s326, 4
      %s328 = scalar_lea.vmem %s0, %s327
      %p329 = scmp.lt.s32.totalorder %s20, 1
      %s330 = scalar_select %p329, %s20, 1
      %s331 = smul.addr %s330, 8
      %s332 = smul.addr %s331, 4
      %s333 = scalar_lea.vmem %s3, %s332
      %p334 = scmp.lt.s32.totalorder %s20, 1
      %s335 = scalar_select %p334, %s20, 1
      %s336 = scalar_lea.vmem %s4, %s335
      %p337 = scmp.lt.s32.totalorder %s20, 1
      %s338 = scalar_select %p337, %s20, 1
      %s339 = scalar_lea.vmem %s5, %s338
      %p340 = scmp.lt.s32.totalorder %s20, 1
      %s341 = scalar_select %p340, %s20, 1
      %s342 = smul.addr %s341, 8
      %s343 = smul.addr %s342, 4
      %s344 = scalar_lea.vmem %s6, %s343
      %p345 = scmp.lt.s32.totalorder %s20, 1
      %s346 = scalar_select %p345, %s20, 1
      %s347 = scalar_lea.vmem %s7, %s346
      %p348 = scmp.lt.s32.totalorder %s20, 1
      %s349 = scalar_select %p348, %s20, 1
      %s350 = scalar_lea.vmem %s8, %s349
      %v352 = vld [vmem:[%s328] sm:$0xf]
      %v353 = vld [vmem:[%s328 + $0x8] sm:$0xf]
      %v354 = vld [vmem:[%s328 + $0x10] sm:$0xf]
      %v355 = vld [vmem:[%s328 + $0x18] sm:$0xf]
      %v356 = vld [vmem:[%s328 + $0x20] sm:$0xf]
      %v357 = vld [vmem:[%s328 + $0x28] sm:$0xf]
      %v358 = vld [vmem:[%s328 + $0x30] sm:$0xf]
      %v359 = vld [vmem:[%s328 + $0x38] sm:$0xf]
      %v360 = vld [vmem:[%s328 + $0x4] sm:$0x1]
      %v361 = vld [vmem:[%s328 + $0xc] sm:$0x1]
      %v362 = vld [vmem:[%s328 + $0x14] sm:$0x1]
      %v363 = vld [vmem:[%s328 + $0x1c] sm:$0x1]
      %v364 = vld [vmem:[%s328 + $0x24] sm:$0x1]
      %v365 = vld [vmem:[%s328 + $0x2c] sm:$0x1]
      %v366 = vld [vmem:[%s328 + $0x34] sm:$0x1]
      %v367 = vld [vmem:[%s328 + $0x3c] sm:$0x1]
      %s368 = scalar_lea.vmem %s328, 8
      %v369 = vld [vmem:[%s368] sm:$0xf]
      %v370 = vld [vmem:[%s368 + $0x8] sm:$0xf]
      %v371 = vld [vmem:[%s368 + $0x10] sm:$0xf]
      %v372 = vld [vmem:[%s368 + $0x18] sm:$0xf]
      %v373 = vld [vmem:[%s368 + $0x20] sm:$0xf]
      %v374 = vld [vmem:[%s368 + $0x28] sm:$0xf]
      %v375 = vld [vmem:[%s368 + $0x30] sm:$0xf]
      %v376 = vld [vmem:[%s368 + $0x38] sm:$0xf]
      %v377 = vld [vmem:[%s368 + $0x4] sm:$0x1]
      %v378 = vld [vmem:[%s368 + $0xc] sm:$0x1]
      %v379 = vld [vmem:[%s368 + $0x14] sm:$0x1]
      %v380 = vld [vmem:[%s368 + $0x1c] sm:$0x1]
      %v381 = vld [vmem:[%s368 + $0x24] sm:$0x1]
      %v382 = vld [vmem:[%s368 + $0x2c] sm:$0x1]
      %v383 = vld [vmem:[%s368 + $0x34] sm:$0x1]
      %v384 = vld [vmem:[%s368 + $0x3c] sm:$0x1]
      %v401 = vunpack.c.l.b16 %v352
      %v402 = vunpack.c.l.b16 %v360
      %v403 = vunpack.c.l.b16 %v353
      %v404 = vunpack.c.l.b16 %v361
      %v405 = vunpack.c.l.b16 %v354
      %v406 = vunpack.c.l.b16 %v362
      %v407 = vunpack.c.l.b16 %v355
      %v408 = vunpack.c.l.b16 %v363
      %v409 = vunpack.c.l.b16 %v356
      %v410 = vunpack.c.l.b16 %v364
      %v411 = vunpack.c.l.b16 %v357
      %v412 = vunpack.c.l.b16 %v365
      %v413 = vunpack.c.l.b16 %v358
      %v414 = vunpack.c.l.b16 %v366
      %v415 = vunpack.c.l.b16 %v359
      %v416 = vunpack.c.l.b16 %v367
      %v417 = vpack.c.b16 %v402, %v401
      %v418 = vpack.c.b16 %v404, %v403
      %v419 = vpack.c.b16 %v406, %v405
      %v420 = vpack.c.b16 %v408, %v407
      %v421 = vpack.c.b16 %v410, %v409
      %v422 = vpack.c.b16 %v412, %v411
      %v423 = vpack.c.b16 %v414, %v413
      %v424 = vpack.c.b16 %v416, %v415
      %v426 = vshrl.u32 %v417, 16
      %v428 = vshll.u32 %v417, 16
      %v430 = vrot.slane %v428, 1
      %v431 = vor.u32 %v426, %v430
      %v433 = vshrl.u32 %v418, 16
      %v435 = vshll.u32 %v418, 16
      %v437 = vrot.slane %v435, 1
      %v438 = vor.u32 %v433, %v437
      %v440 = vshrl.u32 %v419, 16
      %v442 = vshll.u32 %v419, 16
      %v444 = vrot.slane %v442, 1
      %v445 = vor.u32 %v440, %v444
      %v447 = vshrl.u32 %v420, 16
      %v449 = vshll.u32 %v420, 16
      %v451 = vrot.slane %v449, 1
      %v452 = vor.u32 %v447, %v451
      %v454 = vshrl.u32 %v421, 16
      %v456 = vshll.u32 %v421, 16
      %v458 = vrot.slane %v456, 1
      %v459 = vor.u32 %v454, %v458
      %v461 = vshrl.u32 %v422, 16
      %v463 = vshll.u32 %v422, 16
      %v465 = vrot.slane %v463, 1
      %v466 = vor.u32 %v461, %v465
      %v468 = vshrl.u32 %v423, 16
      %v470 = vshll.u32 %v423, 16
      %v472 = vrot.slane %v470, 1
      %v473 = vor.u32 %v468, %v472
      %v475 = vshrl.u32 %v424, 16
      %v477 = vshll.u32 %v424, 16
      %v479 = vrot.slane %v477, 1
      %v480 = vor.u32 %v475, %v479
      %v497 = vunpack.c.l.b16 %v369
      %v498 = vunpack.c.l.b16 %v377
      %v499 = vunpack.c.l.b16 %v370
      %v500 = vunpack.c.l.b16 %v378
      %v501 = vunpack.c.l.b16 %v371
      %v502 = vunpack.c.l.b16 %v379
      %v503 = vunpack.c.l.b16 %v372
      %v504 = vunpack.c.l.b16 %v380
      %v505 = vunpack.c.l.b16 %v373
      %v506 = vunpack.c.l.b16 %v381
      %v507 = vunpack.c.l.b16 %v374
      %v508 = vunpack.c.l.b16 %v382
      %v509 = vunpack.c.l.b16 %v375
      %v510 = vunpack.c.l.b16 %v383
      %v511 = vunpack.c.l.b16 %v376
      %v512 = vunpack.c.l.b16 %v384
      %v513 = vpack.c.b16 %v498, %v497
      %v514 = vpack.c.b16 %v500, %v499
      %v515 = vpack.c.b16 %v502, %v501
      %v516 = vpack.c.b16 %v504, %v503
      %v517 = vpack.c.b16 %v506, %v505
      %v518 = vpack.c.b16 %v508, %v507
      %v519 = vpack.c.b16 %v510, %v509
      %v520 = vpack.c.b16 %v512, %v511
      %v522 = vshrl.u32 %v513, 16
      %v524 = vshll.u32 %v513, 16
      %v526 = vrot.slane %v524, 1
      %v527 = vor.u32 %v522, %v526
      %v529 = vshrl.u32 %v514, 16
      %v531 = vshll.u32 %v514, 16
      %v533 = vrot.slane %v531, 1
      %v534 = vor.u32 %v529, %v533
      %v536 = vshrl.u32 %v515, 16
      %v538 = vshll.u32 %v515, 16
      %v540 = vrot.slane %v538, 1
      %v541 = vor.u32 %v536, %v540
      %v543 = vshrl.u32 %v516, 16
      %v545 = vshll.u32 %v516, 16
      %v547 = vrot.slane %v545, 1
      %v548 = vor.u32 %v543, %v547
      %v550 = vshrl.u32 %v517, 16
      %v552 = vshll.u32 %v517, 16
      %v554 = vrot.slane %v552, 1
      %v555 = vor.u32 %v550, %v554
      %v557 = vshrl.u32 %v518, 16
      %v559 = vshll.u32 %v518, 16
      %v561 = vrot.slane %v559, 1
      %v562 = vor.u32 %v557, %v561
      %v564 = vshrl.u32 %v519, 16
      %v566 = vshll.u32 %v519, 16
      %v568 = vrot.slane %v566, 1
      %v569 = vor.u32 %v564, %v568
      %v571 = vshrl.u32 %v520, 16
      %v573 = vshll.u32 %v520, 16
      %v575 = vrot.slane %v573, 1
      %v576 = vor.u32 %v571, %v575
      %v577 = vunpack.c.l.b16 %v431
      %v578 = vunpack.c.l.b16 %v527
      %v579 = vunpack.c.l.b16 %v438
      %v580 = vunpack.c.l.b16 %v534
      %v581 = vunpack.c.l.b16 %v445
      %v582 = vunpack.c.l.b16 %v541
      %v583 = vunpack.c.l.b16 %v452
      %v584 = vunpack.c.l.b16 %v548
      %v585 = vunpack.c.l.b16 %v459
      %v586 = vunpack.c.l.b16 %v555
      %v587 = vunpack.c.l.b16 %v466
      %v588 = vunpack.c.l.b16 %v562
      %v589 = vunpack.c.l.b16 %v473
      %v590 = vunpack.c.l.b16 %v569
      %v591 = vunpack.c.l.b16 %v480
      %v592 = vunpack.c.l.b16 %v576
      %v593 = vld [vmem:[%s1] sm:$0xf]
      %v594 = vld [vmem:[%s1 + $0x4] sm:$0xf]
      %v595 = vld [vmem:[%s1 + $0x8] sm:$0xf]
      %v596 = vld [vmem:[%s1 + $0xc] sm:$0xf]
      %v597 = vld [vmem:[%s1 + $0x10] sm:$0xf]
      %v598 = vld [vmem:[%s1 + $0x14] sm:$0xf]
      %v599 = vld [vmem:[%s1 + $0x18] sm:$0xf]
      %v600 = vld [vmem:[%s1 + $0x1c] sm:$0xf]
      %v601 = vld [vmem:[%s1 + $0x20] sm:$0xf]
      %v602 = vld [vmem:[%s1 + $0x24] sm:$0xf]
      %v603 = vld [vmem:[%s1 + $0x28] sm:$0xf]
      %v604 = vld [vmem:[%s1 + $0x2c] sm:$0xf]
      %v605 = vld [vmem:[%s1 + $0x30] sm:$0xf]
      %v606 = vld [vmem:[%s1 + $0x34] sm:$0xf]
      %v607 = vld [vmem:[%s1 + $0x38] sm:$0xf]
      %v608 = vld [vmem:[%s1 + $0x3c] sm:$0xf]
      %v609 = vld [vmem:[%s1 + $0x40] sm:$0xf]
      %v610 = vld [vmem:[%s1 + $0x44] sm:$0xf]
      %v611 = vld [vmem:[%s1 + $0x48] sm:$0xf]
      %v612 = vld [vmem:[%s1 + $0x4c] sm:$0xf]
      %v613 = vld [vmem:[%s1 + $0x50] sm:$0xf]
      %v614 = vld [vmem:[%s1 + $0x54] sm:$0xf]
      %v615 = vld [vmem:[%s1 + $0x58] sm:$0xf]
      %v616 = vld [vmem:[%s1 + $0x5c] sm:$0xf]
      %v617 = vld [vmem:[%s1 + $0x60] sm:$0xf]
      %v618 = vld [vmem:[%s1 + $0x64] sm:$0xf]
      %v619 = vld [vmem:[%s1 + $0x68] sm:$0xf]
      %v620 = vld [vmem:[%s1 + $0x6c] sm:$0xf]
      %v621 = vld [vmem:[%s1 + $0x70] sm:$0xf]
      %v622 = vld [vmem:[%s1 + $0x74] sm:$0xf]
      %v623 = vld [vmem:[%s1 + $0x78] sm:$0xf]
      %v624 = vld [vmem:[%s1 + $0x7c] sm:$0xf]
      %v625 = vld [vmem:[%s1 + $0x80] sm:$0xf]
      %v626 = vld [vmem:[%s1 + $0x84] sm:$0xf]
      %v627 = vld [vmem:[%s1 + $0x88] sm:$0xf]
      %v628 = vld [vmem:[%s1 + $0x8c] sm:$0xf]
      %v629 = vld [vmem:[%s1 + $0x90] sm:$0xf]
      %v630 = vld [vmem:[%s1 + $0x94] sm:$0xf]
      %v631 = vld [vmem:[%s1 + $0x98] sm:$0xf]
      %v632 = vld [vmem:[%s1 + $0x9c] sm:$0xf]
      %v633 = vld [vmem:[%s1 + $0xa0] sm:$0xf]
      %v634 = vld [vmem:[%s1 + $0xa4] sm:$0xf]
      %v635 = vld [vmem:[%s1 + $0xa8] sm:$0xf]
      %v636 = vld [vmem:[%s1 + $0xac] sm:$0xf]
      %v637 = vld [vmem:[%s1 + $0xb0] sm:$0xf]
      %v638 = vld [vmem:[%s1 + $0xb4] sm:$0xf]
      %v639 = vld [vmem:[%s1 + $0xb8] sm:$0xf]
      %v640 = vld [vmem:[%s1 + $0xbc] sm:$0xf]
      %v641 = vld [vmem:[%s1 + $0xc0] sm:$0xf]
      %v642 = vld [vmem:[%s1 + $0xc4] sm:$0xf]
      %v643 = vld [vmem:[%s1 + $0xc8] sm:$0xf]
      %v644 = vld [vmem:[%s1 + $0xcc] sm:$0xf]
      %v645 = vld [vmem:[%s1 + $0xd0] sm:$0xf]
      %v646 = vld [vmem:[%s1 + $0xd4] sm:$0xf]
      %v647 = vld [vmem:[%s1 + $0xd8] sm:$0xf]
      %v648 = vld [vmem:[%s1 + $0xdc] sm:$0xf]
      %v649 = vld [vmem:[%s1 + $0xe0] sm:$0xf]
      %v650 = vld [vmem:[%s1 + $0xe4] sm:$0xf]
      %v651 = vld [vmem:[%s1 + $0xe8] sm:$0xf]
      %v652 = vld [vmem:[%s1 + $0xec] sm:$0xf]
      %v653 = vld [vmem:[%s1 + $0xf0] sm:$0xf]
      %v654 = vld [vmem:[%s1 + $0xf4] sm:$0xf]
      %v655 = vld [vmem:[%s1 + $0xf8] sm:$0xf]
      %v656 = vld [vmem:[%s1 + $0xfc] sm:$0xf]
      %v657 = vpack.c.b16 %v403, %v401
      %v658 = vpack.c.b16 %v579, %v577
      %v659 = vpack.c.b16 %v499, %v497
      %v660 = vpack.c.b16 %v580, %v578
      %v661 = vpack.c.b16 %v407, %v405
      %v662 = vpack.c.b16 %v583, %v581
      %v663 = vpack.c.b16 %v503, %v501
      %v664 = vpack.c.b16 %v584, %v582
      %v665 = vpack.c.b16 %v411, %v409
      %v666 = vpack.c.b16 %v587, %v585
      %v667 = vpack.c.b16 %v507, %v505
      %v668 = vpack.c.b16 %v588, %v586
      %v669 = vpack.c.b16 %v415, %v413
      %v670 = vpack.c.b16 %v591, %v589
      %v671 = vpack.c.b16 %v511, %v509
      %v672 = vpack.c.b16 %v592, %v590
      %v753 = vunpack.c.l.b16 %v593
      %v754 = vunpack.c.l.b16 %v594
      %v755 = vunpack.c.l.b16 %v595
      %v756 = vunpack.c.l.b16 %v596
      %v757 = vunpack.c.l.b16 %v597
      %v758 = vunpack.c.l.b16 %v598
      %v759 = vunpack.c.l.b16 %v599
      %v760 = vunpack.c.l.b16 %v600
      %v761 = vunpack.c.l.b16 %v601
      %v762 = vunpack.c.l.b16 %v602
      %v763 = vunpack.c.l.b16 %v603
      %v764 = vunpack.c.l.b16 %v604
      %v765 = vunpack.c.l.b16 %v605
      %v766 = vunpack.c.l.b16 %v606
      %v767 = vunpack.c.l.b16 %v607
      %v768 = vunpack.c.l.b16 %v608
      %v769 = vunpack.c.l.b16 %v609
      %v770 = vunpack.c.l.b16 %v610
      %v771 = vunpack.c.l.b16 %v611
      %v772 = vunpack.c.l.b16 %v612
      %v773 = vunpack.c.l.b16 %v613
      %v774 = vunpack.c.l.b16 %v614
      %v775 = vunpack.c.l.b16 %v615
      %v776 = vunpack.c.l.b16 %v616
      %v777 = vunpack.c.l.b16 %v617
      %v778 = vunpack.c.l.b16 %v618
      %v779 = vunpack.c.l.b16 %v619
      %v780 = vunpack.c.l.b16 %v620
      %v781 = vunpack.c.l.b16 %v621
      %v782 = vunpack.c.l.b16 %v622
      %v783 = vunpack.c.l.b16 %v623
      %v784 = vunpack.c.l.b16 %v624
      %v785 = vunpack.c.l.b16 %v625
      %v786 = vunpack.c.l.b16 %v626
      %v787 = vunpack.c.l.b16 %v627
      %v788 = vunpack.c.l.b16 %v628
      %v789 = vunpack.c.l.b16 %v629
      %v790 = vunpack.c.l.b16 %v630
      %v791 = vunpack.c.l.b16 %v631
      %v792 = vunpack.c.l.b16 %v632
      %v793 = vunpack.c.l.b16 %v633
      %v794 = vunpack.c.l.b16 %v634
      %v795 = vunpack.c.l.b16 %v635
      %v796 = vunpack.c.l.b16 %v636
      %v797 = vunpack.c.l.b16 %v637
      %v798 = vunpack.c.l.b16 %v638
      %v799 = vunpack.c.l.b16 %v639
      %v800 = vunpack.c.l.b16 %v640
      %v801 = vunpack.c.l.b16 %v641
      %v802 = vunpack.c.l.b16 %v642
      %v803 = vunpack.c.l.b16 %v643
      %v804 = vunpack.c.l.b16 %v644
      %v805 = vunpack.c.l.b16 %v645
      %v806 = vunpack.c.l.b16 %v646
      %v807 = vunpack.c.l.b16 %v647
      %v808 = vunpack.c.l.b16 %v648
      %v809 = vunpack.c.l.b16 %v649
      %v810 = vunpack.c.l.b16 %v650
      %v811 = vunpack.c.l.b16 %v651
      %v812 = vunpack.c.l.b16 %v652
      %v813 = vunpack.c.l.b16 %v653
      %v814 = vunpack.c.l.b16 %v654
      %v815 = vunpack.c.l.b16 %v655
      %v816 = vunpack.c.l.b16 %v656
      %v817 = vpack.c.b16 %v754, %v753
      %v818 = vpack.c.b16 %v756, %v755
      %v819 = vpack.c.b16 %v758, %v757
      %v820 = vpack.c.b16 %v760, %v759
      %v821 = vpack.c.b16 %v762, %v761
      %v822 = vpack.c.b16 %v764, %v763
      %v823 = vpack.c.b16 %v766, %v765
      %v824 = vpack.c.b16 %v768, %v767
      %v825 = vpack.c.b16 %v770, %v769
      %v826 = vpack.c.b16 %v772, %v771
      %v827 = vpack.c.b16 %v774, %v773
      %v828 = vpack.c.b16 %v776, %v775
      %v829 = vpack.c.b16 %v778, %v777
      %v830 = vpack.c.b16 %v780, %v779
      %v831 = vpack.c.b16 %v782, %v781
      %v832 = vpack.c.b16 %v784, %v783
      %v833 = vpack.c.b16 %v786, %v785
      %v834 = vpack.c.b16 %v788, %v787
      %v835 = vpack.c.b16 %v790, %v789
      %v836 = vpack.c.b16 %v792, %v791
      %v837 = vpack.c.b16 %v794, %v793
      %v838 = vpack.c.b16 %v796, %v795
      %v839 = vpack.c.b16 %v798, %v797
      %v840 = vpack.c.b16 %v800, %v799
      %v841 = vpack.c.b16 %v802, %v801
      %v842 = vpack.c.b16 %v804, %v803
      %v843 = vpack.c.b16 %v806, %v805
      %v844 = vpack.c.b16 %v808, %v807
      %v845 = vpack.c.b16 %v810, %v809
      %v846 = vpack.c.b16 %v812, %v811
      %v847 = vpack.c.b16 %v814, %v813
      %v848 = vpack.c.b16 %v816, %v815
      %881 = vmatprep.subr.bf16.mxu0 0
      %882 = vmatpush1.bf16.msra.mxu0 %v824
      %883 = vmatprep.subr.bf16.mxu0 0
      %884 = vmatpush1.bf16.msra.mxu0 %v823
      %885 = vmatprep.subr.bf16.mxu0 0
      %886 = vmatpush1.bf16.msra.mxu0 %v822
      %887 = vmatprep.subr.bf16.mxu0 0
      %888 = vmatpush1.bf16.msra.mxu0 %v821
      %889 = vmatprep.subr.bf16.mxu0 0
      %890 = vmatpush1.bf16.msra.mxu0 %v820
      %891 = vmatprep.subr.bf16.mxu0 0
      %892 = vmatpush1.bf16.msra.mxu0 %v819
      %893 = vmatprep.subr.bf16.mxu0 0
      %894 = vmatpush1.bf16.msra.mxu0 %v818
      %895 = vmatprep.subr.bf16.mxu0 0
      %896 = vmatpush1.bf16.msra.mxu0 %v817
      %897 = vmatprep.subr.bf16.mxu0 0
      %898 = vmatpush2.bf16.msra.mxu0 %v832
      %899 = vmatprep.subr.bf16.mxu0 0
      %900 = vmatpush2.bf16.msra.mxu0 %v831
      %901 = vmatprep.subr.bf16.mxu0 0
      %902 = vmatpush2.bf16.msra.mxu0 %v830
      %903 = vmatprep.subr.bf16.mxu0 0
      %904 = vmatpush2.bf16.msra.mxu0 %v829
      %905 = vmatprep.subr.bf16.mxu0 0
      %906 = vmatpush2.bf16.msra.mxu0 %v828
      %907 = vmatprep.subr.bf16.mxu0 0
      %908 = vmatpush2.bf16.msra.mxu0 %v827
      %909 = vmatprep.subr.bf16.mxu0 0
      %910 = vmatpush2.bf16.msra.mxu0 %v826
      %911 = vmatprep.subr.bf16.mxu0 0
      %912 = vmatpush2.bf16.msra.mxu0 %v825
      %913 = vmatprep.mubr.bf16.mxu0 %v658
      %914 = vmatmul.mubr.bf16.gmra.mxu0 %v657
      %v915 = vpop.f32.mrf.mxu0
      %v916 = vadd.f32 0.0, %v915
      %v917 = vpop.f32.mrf.mxu0
      %v918 = vpop.f32.mrf.mxu0
      %v919 = vadd.f32 0.0, %v918
      %v920 = vpop.f32.mrf.mxu0
      %921 = vmatprep.mubr.bf16.mxu0 %v662
      %922 = vmatmul.mubr.bf16.gmra.mxu0 %v661
      %v923 = vpop.f32.mrf.mxu0
      %v924 = vadd.f32 0.0, %v923
      %v925 = vpop.f32.mrf.mxu0
      %v926 = vpop.f32.mrf.mxu0
      %v927 = vadd.f32 0.0, %v926
      %v928 = vpop.f32.mrf.mxu0
      %929 = vmatprep.mubr.bf16.mxu0 %v666
      %930 = vmatmul.mubr.bf16.gmra.mxu0 %v665
      %v931 = vpop.f32.mrf.mxu0
      %v932 = vadd.f32 0.0, %v931
      %v933 = vpop.f32.mrf.mxu0
      %v934 = vpop.f32.mrf.mxu0
      %v935 = vadd.f32 0.0, %v934
      %v936 = vpop.f32.mrf.mxu0
      %937 = vmatprep.mubr.bf16.mxu0 %v670
      %938 = vmatmul.mubr.bf16.gmra.mxu0 %v669
      %v939 = vpop.f32.mrf.mxu0
      %v940 = vadd.f32 0.0, %v939
      %v941 = vpop.f32.mrf.mxu0
      %v942 = vpop.f32.mrf.mxu0
      %v943 = vadd.f32 0.0, %v942
      %v944 = vpop.f32.mrf.mxu0
      %945 = vdwg.mxu0
      %946 = vmatprep.subr.bf16.mxu0 0
      %947 = vmatpush1.bf16.msra.mxu0 %v840
      %948 = vmatprep.subr.bf16.mxu0 0
      %949 = vmatpush1.bf16.msra.mxu0 %v839
      %950 = vmatprep.subr.bf16.mxu0 0
      %951 = vmatpush1.bf16.msra.mxu0 %v838
      %952 = vmatprep.subr.bf16.mxu0 0
      %953 = vmatpush1.bf16.msra.mxu0 %v837
      %954 = vmatprep.subr.bf16.mxu0 0
      %955 = vmatpush1.bf16.msra.mxu0 %v836
      %956 = vmatprep.subr.bf16.mxu0 0
      %957 = vmatpush1.bf16.msra.mxu0 %v835
      %958 = vmatprep.subr.bf16.mxu0 0
      %959 = vmatpush1.bf16.msra.mxu0 %v834
      %960 = vmatprep.subr.bf16.mxu0 0
      %961 = vmatpush1.bf16.msra.mxu0 %v833
      %962 = vmatprep.subr.bf16.mxu0 0
      %963 = vmatpush2.bf16.msra.mxu0 %v848
      %964 = vmatprep.subr.bf16.mxu0 0
      %965 = vmatpush2.bf16.msra.mxu0 %v847
      %966 = vmatprep.subr.bf16.mxu0 0
      %967 = vmatpush2.bf16.msra.mxu0 %v846
      %968 = vmatprep.subr.bf16.mxu0 0
      %969 = vmatpush2.bf16.msra.mxu0 %v845
      %970 = vmatprep.subr.bf16.mxu0 0
      %971 = vmatpush2.bf16.msra.mxu0 %v844
      %972 = vmatprep.subr.bf16.mxu0 0
      %973 = vmatpush2.bf16.msra.mxu0 %v843
      %974 = vmatprep.subr.bf16.mxu0 0
      %975 = vmatpush2.bf16.msra.mxu0 %v842
      %976 = vmatprep.subr.bf16.mxu0 0
      %977 = vmatpush2.bf16.msra.mxu0 %v841
      %978 = vmatprep.mubr.bf16.mxu0 %v660
      %979 = vmatmul.mubr.bf16.gmra.mxu0 %v659
      %v980 = vpop.f32.mrf.mxu0
      %v981 = vadd.f32 %v916, %v980
      %v982 = vpop.f32.mrf.mxu0
      %v983 = vpop.f32.mrf.mxu0
      %v984 = vadd.f32 %v919, %v983
      %v985 = vpop.f32.mrf.mxu0
      %986 = vmatprep.mubr.bf16.mxu0 %v664
      %987 = vmatmul.mubr.bf16.gmra.mxu0 %v663
      %v988 = vpop.f32.mrf.mxu0
      %v989 = vadd.f32 %v924, %v988
      %v990 = vpop.f32.mrf.mxu0
      %v991 = vpop.f32.mrf.mxu0
      %v992 = vadd.f32 %v927, %v991
      %v993 = vpop.f32.mrf.mxu0
      %994 = vmatprep.mubr.bf16.mxu0 %v668
      %995 = vmatmul.mubr.bf16.gmra.mxu0 %v667
      %v996 = vpop.f32.mrf.mxu0
      %v997 = vadd.f32 %v932, %v996
      %v998 = vpop.f32.mrf.mxu0
      %v999 = vpop.f32.mrf.mxu0
      %v1000 = vadd.f32 %v935, %v999
      %v1001 = vpop.f32.mrf.mxu0
      %1002 = vmatprep.mubr.bf16.mxu0 %v672
      %1003 = vmatmul.mubr.bf16.gmra.mxu0 %v671
      %v1004 = vpop.f32.mrf.mxu0
      %v1005 = vadd.f32 %v940, %v1004
      %v1006 = vpop.f32.mrf.mxu0
      %v1007 = vpop.f32.mrf.mxu0
      %v1008 = vadd.f32 %v943, %v1007
      %v1009 = vpop.f32.mrf.mxu0
      %1010 = vdwg.mxu0
      %v1011 = vpack.c.bf16 %v984, %v981
      %v1012 = vpack.c.bf16 %v992, %v989
      %v1013 = vpack.c.bf16 %v1000, %v997
      %v1014 = vpack.c.bf16 %v1008, %v1005
      %v1019 = vunpack.c.l.b16 %v1011
      %v1020 = vunpack.c.h.b16 %v1011
      %v1021 = vunpack.c.l.b16 %v1012
      %v1022 = vunpack.c.h.b16 %v1012
      %v1023 = vunpack.c.l.b16 %v1013
      %v1024 = vunpack.c.h.b16 %v1013
      %v1025 = vunpack.c.l.b16 %v1014
      %v1026 = vunpack.c.h.b16 %v1014
      %v1027 = vpack.c.b16 %v1019, %v1019
      %v1028 = vpack.c.b16 %v1020, %v1020
      %v1029 = vpack.c.b16 %v1021, %v1021
      %v1030 = vpack.c.b16 %v1022, %v1022
      %v1031 = vpack.c.b16 %v1023, %v1023
      %v1032 = vpack.c.b16 %v1024, %v1024
      %v1033 = vpack.c.b16 %v1025, %v1025
      %v1034 = vpack.c.b16 %v1026, %v1026
      %1043 = vst [vmem:[%s333] sm:$0xf] %v1027
      %1044 = vst [vmem:[%s333 + $0x4] sm:$0xf] %v1028
      %1045 = vst [vmem:[%s333 + $0x8] sm:$0xf] %v1029
      %1046 = vst [vmem:[%s333 + $0xc] sm:$0xf] %v1030
      %1047 = vst [vmem:[%s333 + $0x10] sm:$0xf] %v1031
      %1048 = vst [vmem:[%s333 + $0x14] sm:$0xf] %v1032
      %1049 = vst [vmem:[%s333 + $0x18] sm:$0xf] %v1033
      %1050 = vst [vmem:[%s333 + $0x1c] sm:$0xf] %v1034
      %v1051 = vadd.f32 %v981, %v984
      %v1052 = vadd.f32 %v1051, %v989
      %v1053 = vadd.f32 %v1052, %v992
      %v1054 = vadd.f32 %v1053, %v997
      %v1055 = vadd.f32 %v1054, %v1000
      %v1056 = vadd.f32 %v1055, %v1005
      %v1057 = vadd.f32 %v1056, %v1008
      %v1058 = vrot.slane %v1057, 4
      %v1059 = vadd.f32 %v1057, %v1058
      %v1060 = vrot.slane %v1059, 2
      %v1061 = vadd.f32 %v1059, %v1060
      %v1062 = vrot.slane %v1061, 1
      %v1063 = vadd.f32 %v1061, %v1062
      %1064 = vst [vmem:[%s336] sm:$0x1] %v1063
      %v1065 = vmul.f32 %v981, %v981
      %v1066 = vmul.f32 %v984, %v984
      %v1067 = vmul.f32 %v989, %v989
      %v1068 = vmul.f32 %v992, %v992
      %v1069 = vmul.f32 %v997, %v997
      %v1070 = vmul.f32 %v1000, %v1000
      %v1071 = vmul.f32 %v1005, %v1005
      %v1072 = vmul.f32 %v1008, %v1008
      %v1073 = vadd.f32 %v1065, %v1066
      %v1074 = vadd.f32 %v1073, %v1067
      %v1075 = vadd.f32 %v1074, %v1068
      %v1076 = vadd.f32 %v1075, %v1069
      %v1077 = vadd.f32 %v1076, %v1070
      %v1078 = vadd.f32 %v1077, %v1071
      %v1079 = vadd.f32 %v1078, %v1072
      %v1080 = vrot.slane %v1079, 4
      %v1081 = vadd.f32 %v1079, %v1080
      %v1082 = vrot.slane %v1081, 2
      %v1083 = vadd.f32 %v1081, %v1082
      %v1084 = vrot.slane %v1083, 1
      %v1085 = vadd.f32 %v1083, %v1084
      %1086 = vst [vmem:[%s339] sm:$0x1] %v1085
      %v1087 = vld [vmem:[%s328] sm:$0xf]
      %v1088 = vld [vmem:[%s328 + $0x8] sm:$0xf]
      %v1089 = vld [vmem:[%s328 + $0x10] sm:$0xf]
      %v1090 = vld [vmem:[%s328 + $0x18] sm:$0xf]
      %v1091 = vld [vmem:[%s328 + $0x20] sm:$0xf]
      %v1092 = vld [vmem:[%s328 + $0x28] sm:$0xf]
      %v1093 = vld [vmem:[%s328 + $0x30] sm:$0xf]
      %v1094 = vld [vmem:[%s328 + $0x38] sm:$0xf]
      %v1095 = vld [vmem:[%s2] sm:$0xf]
      %v1096 = vld [vmem:[%s2 + $0x4] sm:$0xf]
      %v1097 = vld [vmem:[%s2 + $0x8] sm:$0xf]
      %v1098 = vld [vmem:[%s2 + $0xc] sm:$0xf]
      %v1099 = vld [vmem:[%s2 + $0x10] sm:$0xf]
      %v1100 = vld [vmem:[%s2 + $0x14] sm:$0xf]
      %v1101 = vld [vmem:[%s2 + $0x18] sm:$0xf]
      %v1102 = vld [vmem:[%s2 + $0x1c] sm:$0xf]
      %v1103 = vld [vmem:[%s2 + $0x20] sm:$0xf]
      %v1104 = vld [vmem:[%s2 + $0x24] sm:$0xf]
      %v1105 = vld [vmem:[%s2 + $0x28] sm:$0xf]
      %v1106 = vld [vmem:[%s2 + $0x2c] sm:$0xf]
      %v1107 = vld [vmem:[%s2 + $0x30] sm:$0xf]
      %v1108 = vld [vmem:[%s2 + $0x34] sm:$0xf]
      %v1109 = vld [vmem:[%s2 + $0x38] sm:$0xf]
      %v1110 = vld [vmem:[%s2 + $0x3c] sm:$0xf]
      %v1119 = vunpack.c.l.b16 %v1087
      %v1120 = vunpack.c.l.b16 %v1088
      %v1121 = vunpack.c.l.b16 %v1089
      %v1122 = vunpack.c.l.b16 %v1090
      %v1123 = vunpack.c.l.b16 %v1091
      %v1124 = vunpack.c.l.b16 %v1092
      %v1125 = vunpack.c.l.b16 %v1093
      %v1126 = vunpack.c.l.b16 %v1094
      %v1127 = vpack.c.b16 %v1120, %v1119
      %v1128 = vpack.c.b16 %v1122, %v1121
      %v1129 = vpack.c.b16 %v1124, %v1123
      %v1130 = vpack.c.b16 %v1126, %v1125
      %v1151 = vunpack.c.l.b16 %v1095
      %v1152 = vunpack.c.l.b16 %v1096
      %v1153 = vunpack.c.l.b16 %v1097
      %v1154 = vunpack.c.l.b16 %v1098
      %v1155 = vunpack.c.l.b16 %v1099
      %v1156 = vunpack.c.l.b16 %v1100
      %v1157 = vunpack.c.l.b16 %v1101
      %v1158 = vunpack.c.l.b16 %v1102
      %v1159 = vunpack.c.l.b16 %v1103
      %v1160 = vunpack.c.l.b16 %v1104
      %v1161 = vunpack.c.l.b16 %v1105
      %v1162 = vunpack.c.l.b16 %v1106
      %v1163 = vunpack.c.l.b16 %v1107
      %v1164 = vunpack.c.l.b16 %v1108
      %v1165 = vunpack.c.l.b16 %v1109
      %v1166 = vunpack.c.l.b16 %v1110
      %v1167 = vpack.c.b16 %v1152, %v1151
      %v1168 = vpack.c.b16 %v1154, %v1153
      %v1169 = vpack.c.b16 %v1156, %v1155
      %v1170 = vpack.c.b16 %v1158, %v1157
      %v1171 = vpack.c.b16 %v1160, %v1159
      %v1172 = vpack.c.b16 %v1162, %v1161
      %v1173 = vpack.c.b16 %v1164, %v1163
      %v1174 = vpack.c.b16 %v1166, %v1165
      %1183 = vmatprep.subr.bf16.mxu0 0
      %1184 = vmatpush1.bf16.msra.mxu0 %v1174
      %1185 = vmatprep.subr.bf16.mxu0 0
      %1186 = vmatpush1.bf16.msra.mxu0 %v1173
      %1187 = vmatprep.subr.bf16.mxu0 0
      %1188 = vmatpush1.bf16.msra.mxu0 %v1172
      %1189 = vmatprep.subr.bf16.mxu0 0
      %1190 = vmatpush1.bf16.msra.mxu0 %v1171
      %1191 = vmatprep.subr.bf16.mxu0 0
      %1192 = vmatpush1.bf16.msra.mxu0 %v1170
      %1193 = vmatprep.subr.bf16.mxu0 0
      %1194 = vmatpush1.bf16.msra.mxu0 %v1169
      %1195 = vmatprep.subr.bf16.mxu0 0
      %1196 = vmatpush1.bf16.msra.mxu0 %v1168
      %1197 = vmatprep.subr.bf16.mxu0 0
      %1198 = vmatpush1.bf16.msra.mxu0 %v1167
      %1199 = vmatprep.subr.bf16.mxu0 0
      %1200 = vmatpush2.bf16.msra.mxu0 0
      %1201 = vmatprep.subr.bf16.mxu0 0
      %1202 = vmatpush2.bf16.msra.mxu0 0
      %1203 = vmatprep.subr.bf16.mxu0 0
      %1204 = vmatpush2.bf16.msra.mxu0 0
      %1205 = vmatprep.subr.bf16.mxu0 0
      %1206 = vmatpush2.bf16.msra.mxu0 0
      %1207 = vmatprep.subr.bf16.mxu0 0
      %1208 = vmatpush2.bf16.msra.mxu0 0
      %1209 = vmatprep.subr.bf16.mxu0 0
      %1210 = vmatpush2.bf16.msra.mxu0 0
      %1211 = vmatprep.subr.bf16.mxu0 0
      %1212 = vmatpush2.bf16.msra.mxu0 0
      %1213 = vmatprep.subr.bf16.mxu0 0
      %1214 = vmatpush2.bf16.msra.mxu0 0
      %1215 = vmatprep.mubr.bf16.mxu0 0
      %1216 = vmatmul.mubr.bf16.gmra.mxu0 %v1127
      %v1217 = vpop.f32.mrf.mxu0
      %v1218 = vadd.f32 0.0, %v1217
      %v1219 = vpop.f32.mrf.mxu0
      %v1220 = vpop.f32.mrf.mxu0
      %v1221 = vadd.f32 0.0, %v1220
      %v1222 = vpop.f32.mrf.mxu0
      %1223 = vmatprep.mubr.bf16.mxu0 0
      %1224 = vmatmul.mubr.bf16.gmra.mxu0 %v1128
      %v1225 = vpop.f32.mrf.mxu0
      %v1226 = vadd.f32 0.0, %v1225
      %v1227 = vpop.f32.mrf.mxu0
      %v1228 = vpop.f32.mrf.mxu0
      %v1229 = vadd.f32 0.0, %v1228
      %v1230 = vpop.f32.mrf.mxu0
      %1231 = vmatprep.mubr.bf16.mxu0 0
      %1232 = vmatmul.mubr.bf16.gmra.mxu0 %v1129
      %v1233 = vpop.f32.mrf.mxu0
      %v1234 = vadd.f32 0.0, %v1233
      %v1235 = vpop.f32.mrf.mxu0
      %v1236 = vpop.f32.mrf.mxu0
      %v1237 = vadd.f32 0.0, %v1236
      %v1238 = vpop.f32.mrf.mxu0
      %1239 = vmatprep.mubr.bf16.mxu0 0
      %1240 = vmatmul.mubr.bf16.gmra.mxu0 %v1130
      %v1241 = vpop.f32.mrf.mxu0
      %v1242 = vadd.f32 0.0, %v1241
      %v1243 = vpop.f32.mrf.mxu0
      %v1244 = vpop.f32.mrf.mxu0
      %v1245 = vadd.f32 0.0, %v1244
      %v1246 = vpop.f32.mrf.mxu0
      %1247 = vdwg.mxu0
      %v1248 = vpack.c.bf16 %v1221, %v1218
      %v1249 = vpack.c.bf16 %v1229, %v1226
      %v1250 = vpack.c.bf16 %v1237, %v1234
      %v1251 = vpack.c.bf16 %v1245, %v1242
      %v1256 = vunpack.c.l.b16 %v1248
      %v1257 = vunpack.c.h.b16 %v1248
      %v1258 = vunpack.c.l.b16 %v1249
      %v1259 = vunpack.c.h.b16 %v1249
      %v1260 = vunpack.c.l.b16 %v1250
      %v1261 = vunpack.c.h.b16 %v1250
      %v1262 = vunpack.c.l.b16 %v1251
      %v1263 = vunpack.c.h.b16 %v1251
      %v1264 = vpack.c.b16 %v1256, %v1256
      %v1265 = vpack.c.b16 %v1257, %v1257
      %v1266 = vpack.c.b16 %v1258, %v1258
      %v1267 = vpack.c.b16 %v1259, %v1259
      %v1268 = vpack.c.b16 %v1260, %v1260
      %v1269 = vpack.c.b16 %v1261, %v1261
      %v1270 = vpack.c.b16 %v1262, %v1262
      %v1271 = vpack.c.b16 %v1263, %v1263
      %1280 = vst [vmem:[%s344] sm:$0xf] %v1264
      %1281 = vst [vmem:[%s344 + $0x4] sm:$0xf] %v1265
      %1282 = vst [vmem:[%s344 + $0x8] sm:$0xf] %v1266
      %1283 = vst [vmem:[%s344 + $0xc] sm:$0xf] %v1267
      %1284 = vst [vmem:[%s344 + $0x10] sm:$0xf] %v1268
      %1285 = vst [vmem:[%s344 + $0x14] sm:$0xf] %v1269
      %1286 = vst [vmem:[%s344 + $0x18] sm:$0xf] %v1270
      %1287 = vst [vmem:[%s344 + $0x1c] sm:$0xf] %v1271
      %v1288 = vadd.f32 %v1218, %v1221
      %v1289 = vadd.f32 %v1288, %v1226
      %v1290 = vadd.f32 %v1289, %v1229
      %v1291 = vadd.f32 %v1290, %v1234
      %v1292 = vadd.f32 %v1291, %v1237
      %v1293 = vadd.f32 %v1292, %v1242
      %v1294 = vadd.f32 %v1293, %v1245
      %v1295 = vrot.slane %v1294, 4
      %v1296 = vadd.f32 %v1294, %v1295
      %v1297 = vrot.slane %v1296, 2
      %v1298 = vadd.f32 %v1296, %v1297
      %v1299 = vrot.slane %v1298, 1
      %v1300 = vadd.f32 %v1298, %v1299
      %1301 = vst [vmem:[%s347] sm:$0x1] %v1300
      %v1302 = vmul.f32 %v1218, %v1218
      %v1303 = vmul.f32 %v1221, %v1221
      %v1304 = vmul.f32 %v1226, %v1226
      %v1305 = vmul.f32 %v1229, %v1229
      %v1306 = vmul.f32 %v1234, %v1234
      %v1307 = vmul.f32 %v1237, %v1237
      %v1308 = vmul.f32 %v1242, %v1242
      %v1309 = vmul.f32 %v1245, %v1245
      %v1310 = vadd.f32 %v1302, %v1303
      %v1311 = vadd.f32 %v1310, %v1304
      %v1312 = vadd.f32 %v1311, %v1305
      %v1313 = vadd.f32 %v1312, %v1306
      %v1314 = vadd.f32 %v1313, %v1307
      %v1315 = vadd.f32 %v1314, %v1308
      %v1316 = vadd.f32 %v1315, %v1309
      %v1317 = vrot.slane %v1316, 4
      %v1318 = vadd.f32 %v1316, %v1317
      %v1319 = vrot.slane %v1318, 2
      %v1320 = vadd.f32 %v1318, %v1319
      %v1321 = vrot.slane %v1320, 1
      %v1322 = vadd.f32 %v1320, %v1321
      %1323 = vst [vmem:[%s350] sm:$0x1] %v1322
      %p1324 = scmp.lt.s32.totalorder %s20, 1
      %s1325 = scalar_select %p1324, %s20, 1
      %s1326 = smul.addr %s1325, 8
      %s1327 = smul.addr %s1326, 4
      %s1328 = scalar_lea.vmem %s3, %s1327
      %p1329 = scmp.lt.s32.totalorder %s20, 1
      %s1330 = scalar_select %p1329, %s20, 1
      %s1331 = scalar_lea.vmem %s4, %s1330
      %p1332 = scmp.lt.s32.totalorder %s20, 1
      %s1333 = scalar_select %p1332, %s20, 1
      %s1334 = scalar_lea.vmem %s5, %s1333
      %p1335 = scmp.lt.s32.totalorder %s20, 1
      %s1336 = scalar_select %p1335, %s20, 1
      %s1337 = smul.addr %s1336, 8
      %s1338 = smul.addr %s1337, 4
      %s1339 = scalar_lea.vmem %s6, %s1338
      %p1340 = scmp.lt.s32.totalorder %s20, 1
      %s1341 = scalar_select %p1340, %s20, 1
      %s1342 = scalar_lea.vmem %s7, %s1341
      %p1343 = scmp.lt.s32.totalorder %s20, 1
      %s1344 = scalar_select %p1343, %s20, 1
      %s1345 = scalar_lea.vmem %s8, %s1344
      // Predicated region
      $region33: #{basic_block_forward.3} parent=31 // pred_check
        %p1346 = pneg %p106
      $region34: #{basic_block_forward.3} parent=31 // pred_check_branch
        %1348 = sbr.rel (%p1346) target = $region36
      $region35: #{basic_block_forward.3} parent=31 // pred_region
        _
      $region36: #{basic_block_forward.3} parent=31 // pred_fallthru
        _
      // Predicated region
      $region37: #{basic_block_forward.3} parent=31 // pred_check
        %p1349 = pneg %p132
      $region38: #{basic_block_forward.3} parent=31 // pred_check_branch
        %1351 = sbr.rel (%p1349) target = $region40
      $region39: #{basic_block_forward.3} parent=31 // pred_region
        _
      $region40: #{basic_block_forward.3} parent=31 // pred_fallthru
        _
      // Predicated region
      $region41: #{basic_block_forward.3} parent=31 // pred_check
        %p1352 = pneg %p158
      $region42: #{basic_block_forward.3} parent=31 // pred_check_branch
        %1354 = sbr.rel (%p1352) target = $region44
      $region43: #{basic_block_forward.3} parent=31 // pred_region
        _
      $region44: #{basic_block_forward.3} parent=31 // pred_fallthru
        _
      // Predicated region
      $region45: #{basic_block_forward.3} parent=31 // pred_check
        %p1355 = pneg %p184
      $region46: #{basic_block_forward.3} parent=31 // pred_check_branch
        %1357 = sbr.rel (%p1355) target = $region48
      $region47: #{basic_block_forward.3} parent=31 // pred_region
        _
      $region48: #{basic_block_forward.3} parent=31 // pred_fallthru
        _
      // Predicated region
      $region49: #{basic_block_forward.3} parent=31 // pred_check
        %p1358 = pneg %p210
      $region50: #{basic_block_forward.3} parent=31 // pred_check_branch
        %1360 = sbr.rel (%p1358) target = $region52
      $region51: #{basic_block_forward.3} parent=31 // pred_region
        _
      $region52: #{basic_block_forward.3} parent=31 // pred_fallthru
        _
      // Predicated region
      $region53: #{basic_block_forward.3} parent=31 // pred_check
        %p1361 = pneg %p236
      $region54: #{basic_block_forward.3} parent=31 // pred_check_branch
        %1363 = sbr.rel (%p1361) target = $region56
      $region55: #{basic_block_forward.3} parent=31 // pred_region
        _
      $region56: #{basic_block_forward.3} parent=31 // pred_fallthru
        _
    $region32: #{basic_block_forward.3} parent=5 // pred_fallthru
      _
    %p1364 = scmp.le.s32.totalorder 2, %s15
    // Predicated region
    $region57: #{basic_block_forward.3} parent=5 // pred_check
      %p1365 = pneg %p1364
    $region58: #{basic_block_forward.3} parent=5 // pred_check_branch
      %1367 = sbr.rel (%p1365) target = $region60
    $region59: #{basic_block_forward.3} parent=5 // pred_region
      %s1368 = ssub.s32 %s15, 2
      // Predicated region
      $region61: #{basic_block_forward.3} parent=59 // pred_check
        %p1369 = pneg %p112
      $region62: #{basic_block_forward.3} parent=59 // pred_check_branch
        %1371 = sbr.rel (%p1369) target = $region64
      $region63: #{basic_block_forward.3} parent=59 // pred_region
        %p1372 = scmp.lt.s32.totalorder %s21, 1
        %s1373 = scalar_select %p1372, %s21, 1
        %s1374 = smul.addr %s1373, 8
        %s1375 = smul.addr %s1374, 4
        %s1376 = scalar_lea.vmem %s3, %s1375
      $region64: #{basic_block_forward.3} parent=59 // pred_fallthru
        _
      // Predicated region
      $region65: #{basic_block_forward.3} parent=59 // pred_check
        %p1377 = pneg %p138
      $region66: #{basic_block_forward.3} parent=59 // pred_check_branch
        %1379 = sbr.rel (%p1377) target = $region68
      $region67: #{basic_block_forward.3} parent=59 // pred_region
        %p1380 = scmp.lt.s32.totalorder %s21, 1
        %s1381 = scalar_select %p1380, %s21, 1
        %s1382 = scalar_lea.vmem %s4, %s1381
      $region68: #{basic_block_forward.3} parent=59 // pred_fallthru
        _
      // Predicated region
      $region69: #{basic_block_forward.3} parent=59 // pred_check
        %p1383 = pneg %p164
      $region70: #{basic_block_forward.3} parent=59 // pred_check_branch
        %1385 = sbr.rel (%p1383) target = $region72
      $region71: #{basic_block_forward.3} parent=59 // pred_region
        %p1386 = scmp.lt.s32.totalorder %s21, 1
        %s1387 = scalar_select %p1386, %s21, 1
        %s1388 = scalar_lea.vmem %s5, %s1387
      $region72: #{basic_block_forward.3} parent=59 // pred_fallthru
        _
      // Predicated region
      $region73: #{basic_block_forward.3} parent=59 // pred_check
        %p1389 = pneg %p190
      $region74: #{basic_block_forward.3} parent=59 // pred_check_branch
        %1391 = sbr.rel (%p1389) target = $region76
      $region75: #{basic_block_forward.3} parent=59 // pred_region
        %p1392 = scmp.lt.s32.totalorder %s21, 1
        %s1393 = scalar_select %p1392, %s21, 1
        %s1394 = smul.addr %s1393, 8
        %s1395 = smul.addr %s1394, 4
        %s1396 = scalar_lea.vmem %s6, %s1395
      $region76: #{basic_block_forward.3} parent=59 // pred_fallthru
        _
      // Predicated region
      $region77: #{basic_block_forward.3} parent=59 // pred_check
        %p1397 = pneg %p216
      $region78: #{basic_block_forward.3} parent=59 // pred_check_branch
        %1399 = sbr.rel (%p1397) target = $region80
      $region79: #{basic_block_forward.3} parent=59 // pred_region
        %p1400 = scmp.lt.s32.totalorder %s21, 1
        %s1401 = scalar_select %p1400, %s21, 1
        %s1402 = scalar_lea.vmem %s7, %s1401
      $region80: #{basic_block_forward.3} parent=59 // pred_fallthru
        _
      // Predicated region
      $region81: #{basic_block_forward.3} parent=59 // pred_check
        %p1403 = pneg %p242
      $region82: #{basic_block_forward.3} parent=59 // pred_check_branch
        %1405 = sbr.rel (%p1403) target = $region84
      $region83: #{basic_block_forward.3} parent=59 // pred_region
        %p1406 = scmp.lt.s32.totalorder %s21, 1
        %s1407 = scalar_select %p1406, %s21, 1
        %s1408 = scalar_lea.vmem %s8, %s1407
      $region84: #{basic_block_forward.3} parent=59 // pred_fallthru
        _
    $region60: #{basic_block_forward.3} parent=5 // pred_fallthru
      _
  $region6: #{basic_block_forward.3} parent=0 // loop_footer
    %s19 = sadd.s32 1, %s15
  $region7: #{basic_block_forward.3} parent=0 // loop_footer_branch
    %14 = sbr.rel target = $region3
  $region8: #{basic_block_forward.3} parent=0 // loop_exit
    _

// kernel: basic_block_forward.4
$region0: #{basic_block_forward.4}
  #allocation0 [shape = 'u32[]', space=smem, size = 0x4, offset = 0x4, fixed_abs, tag = 'smem constant byte address 0x4 - core index']
  #allocation1 [shape = 'u32[144,128]{1,0:T(1,128)}', space=vmem, size = 0x12000, scoped, tag = 'internal scratch']
  #allocation2 [shape = 'bf16[10,10,128]{2,1,0:T(8,128)(2,1)}', space=vmem, size = 0xa000, scoped, tag = 'scratch operand']
  %s0 = inlined_call_operand.vmem [shape: bf16[2,64,128], index: 0, kind: input, shape index: {}]
  %s1 = inlined_call_operand.vmem [shape: f32[1,128], index: 1, kind: input, shape index: {}]
  %s2 = inlined_call_operand.vmem [shape: f32[1,128], index: 2, kind: input, shape index: {}]
  %s3 = inlined_call_operand.vmem [shape: f32[1,128], index: 3, kind: input, shape index: {}]
  %s4 = inlined_call_operand.vmem [shape: f32[1,128], index: 4, kind: input, shape index: {}]
  %s5 = inlined_call_operand.vmem [shape: bf16[1152,128], index: 5, kind: input, shape index: {}]
  %s6 = inlined_call_operand.vmem [shape: bf16[2,64,128], index: 6, kind: output, shape index: {0}]
  %s7 = inlined_call_operand.vmem [shape: f32[2,1,128], index: 7, kind: output, shape index: {1}]
  %s8 = inlined_call_operand.vmem [shape: f32[2,1,128], index: 8, kind: output, shape index: {2}]
  %9 = xla_tuple %s6, %s7, %s8
  %s10 = sld [smem:[#allocation0]]
  $region73: #{basic_block_forward.4} parent=0
    _
  %s12 = ssub.s32 1, %s10
  %s13 = scalar_select 0, %s12, %s10
  loop: start=0, step=1, limit=4
  $region2: #{basic_block_forward.4} parent=0 // loop_pre_header
    _
  $region3: #{basic_block_forward.4} parent=0 // loop_header
    %s15 = sphi 0, %s19
    %p16 = scmp.ge.s32.totalorder %s15, 4
    %s25 = sphi 0, %s27
    %s28 = sphi 0, %s25
    %s29 = sphi 0, %s28
    %s45 = sphi 0, %s29
    %s49 = sphi 0, %s49
    %s51 = sphi 0, %s49
    %s52 = sphi 0, %s51
    %s66 = sphi 0, %s52
    %s70 = sphi 0, %s70
    %s72 = sphi 0, %s70
    %s73 = sphi 0, %s72
    %s87 = sphi 0, %s73
    %s91 = sphi 0, %s91
    %s93 = sphi 0, %s91
    %s94 = sphi 0, %s93
    %s108 = sphi 0, %s94
    %s112 = sphi 0, %s112
    %s114 = sphi 0, %s112
    %s115 = sphi 0, %s114
    %s129 = sphi 0, %s115
    %s133 = sphi 0, %s133
    %s135 = sphi 0, %s133
    %s136 = sphi 0, %s135
    %s150 = sphi 0, %s136
    %s156 = sphi 0, %s158
    %s159 = sphi 0, %s156
    %s160 = sphi 0, %s159
    %s176 = sphi 0, %s160
    %s182 = sphi 0, %s184
    %s185 = sphi 0, %s182
    %s186 = sphi 0, %s185
    %s202 = sphi 0, %s186
    %s208 = sphi 0, %s210
    %s211 = sphi 0, %s208
    %s212 = sphi 0, %s211
    %s228 = sphi 0, %s212
  $region4: #{basic_block_forward.4} parent=0 // loop_header_branch
    %18 = sbr.rel (%p16) target = $region8
  $region5: #{basic_block_forward.4} parent=0 // loop_body
    %s20 = ssub.s32 %s15, 1
    %s21 = ssub.s32 %s15, 2
    %s22 = sadd.s32 %s15, 1
    %s23 = ssub.s32 %s15, %s22
    %p24 = scmp.eq.s32.totalorder %s23, 0
    %s26 = sadd.s32 %s25, 1
    %s27 = scalar_select %p24, %s25, %s26
    %p30 = pneg %p24
    %p31 = scmp.eq.s32.totalorder %s15, 1
    %p32 = por %p30, %p31
    %p33 = scmp.ne.s32.totalorder %s25, %s28
    %p34 = scmp.eq.s32.totalorder %s15, 0
    %p35 = por %p33, %p34
    %p36 = scmp.ne.s32.totalorder %s25, %s28
    %p37 = scmp.eq.s32.totalorder %s20, 1
    %p38 = por %p36, %p37
    %p39 = scmp.ne.s32.totalorder %s28, %s29
    %p40 = scmp.eq.s32.totalorder %s20, 0
    %p41 = por %p39, %p40
    %p42 = scmp.ne.s32.totalorder %s28, %s29
    %p43 = scmp.eq.s32.totalorder %s21, 1
    %p44 = por %p42, %p43
    %p46 = scmp.ne.s32.totalorder %s29, %s45
    %p47 = scmp.eq.s32.totalorder %s21, 0
    %p48 = por %p46, %p47
    %s50 = sadd.s32 %s49, 1
    %p53 = scmp.eq.s32.totalorder %s15, 1
    %p54 = scmp.ne.s32.totalorder %s49, %s51
    %p55 = scmp.eq.s32.totalorder %s15, 0
    %p56 = por %p54, %p55
    %p57 = scmp.ne.s32.totalorder %s49, %s51
    %p58 = scmp.eq.s32.totalorder %s20, 1
    %p59 = por %p57, %p58
    %p60 = scmp.ne.s32.totalorder %s51, %s52
    %p61 = scmp.eq.s32.totalorder %s20, 0
    %p62 = por %p60, %p61
    %p63 = scmp.ne.s32.totalorder %s51, %s52
    %p64 = scmp.eq.s32.totalorder %s21, 1
    %p65 = por %p63, %p64
    %p67 = scmp.ne.s32.totalorder %s52, %s66
    %p68 = scmp.eq.s32.totalorder %s21, 0
    %p69 = por %p67, %p68
    %s71 = sadd.s32 %s70, 1
    %p74 = scmp.eq.s32.totalorder %s15, 1
    %p75 = scmp.ne.s32.totalorder %s70, %s72
    %p76 = scmp.eq.s32.totalorder %s15, 0
    %p77 = por %p75, %p76
    %p78 = scmp.ne.s32.totalorder %s70, %s72
    %p79 = scmp.eq.s32.totalorder %s20, 1
    %p80 = por %p78, %p79
    %p81 = scmp.ne.s32.totalorder %s72, %s73
    %p82 = scmp.eq.s32.totalorder %s20, 0
    %p83 = por %p81, %p82
    %p84 = scmp.ne.s32.totalorder %s72, %s73
    %p85 = scmp.eq.s32.totalorder %s21, 1
    %p86 = por %p84, %p85
    %p88 = scmp.ne.s32.totalorder %s73, %s87
    %p89 = scmp.eq.s32.totalorder %s21, 0
    %p90 = por %p88, %p89
    %s92 = sadd.s32 %s91, 1
    %p95 = scmp.eq.s32.totalorder %s15, 1
    %p96 = scmp.ne.s32.totalorder %s91, %s93
    %p97 = scmp.eq.s32.totalorder %s15, 0
    %p98 = por %p96, %p97
    %p99 = scmp.ne.s32.totalorder %s91, %s93
    %p100 = scmp.eq.s32.totalorder %s20, 1
    %p101 = por %p99, %p100
    %p102 = scmp.ne.s32.totalorder %s93, %s94
    %p103 = scmp.eq.s32.totalorder %s20, 0
    %p104 = por %p102, %p103
    %p105 = scmp.ne.s32.totalorder %s93, %s94
    %p106 = scmp.eq.s32.totalorder %s21, 1
    %p107 = por %p105, %p106
    %p109 = scmp.ne.s32.totalorder %s94, %s108
    %p110 = scmp.eq.s32.totalorder %s21, 0
    %p111 = por %p109, %p110
    %s113 = sadd.s32 %s112, 1
    %p116 = scmp.eq.s32.totalorder %s15, 1
    %p117 = scmp.ne.s32.totalorder %s112, %s114
    %p118 = scmp.eq.s32.totalorder %s15, 0
    %p119 = por %p117, %p118
    %p120 = scmp.ne.s32.totalorder %s112, %s114
    %p121 = scmp.eq.s32.totalorder %s20, 1
    %p122 = por %p120, %p121
    %p123 = scmp.ne.s32.totalorder %s114, %s115
    %p124 = scmp.eq.s32.totalorder %s20, 0
    %p125 = por %p123, %p124
    %p126 = scmp.ne.s32.totalorder %s114, %s115
    %p127 = scmp.eq.s32.totalorder %s21, 1
    %p128 = por %p126, %p127
    %p130 = scmp.ne.s32.totalorder %s115, %s129
    %p131 = scmp.eq.s32.totalorder %s21, 0
    %p132 = por %p130, %p131
    %s134 = sadd.s32 %s133, 1
    %p137 = scmp.eq.s32.totalorder %s15, 1
    %p138 = scmp.ne.s32.totalorder %s133, %s135
    %p139 = scmp.eq.s32.totalorder %s15, 0
    %p140 = por %p138, %p139
    %p141 = scmp.ne.s32.totalorder %s133, %s135
    %p142 = scmp.eq.s32.totalorder %s20, 1
    %p143 = por %p141, %p142
    %p144 = scmp.ne.s32.totalorder %s135, %s136
    %p145 = scmp.eq.s32.totalorder %s20, 0
    %p146 = por %p144, %p145
    %p147 = scmp.ne.s32.totalorder %s135, %s136
    %p148 = scmp.eq.s32.totalorder %s21, 1
    %p149 = por %p147, %p148
    %p151 = scmp.ne.s32.totalorder %s136, %s150
    %p152 = scmp.eq.s32.totalorder %s21, 0
    %p153 = por %p151, %p152
    %s154 = ssub.s32 %s15, %s22
    %p155 = scmp.eq.s32.totalorder %s154, 0
    %s157 = sadd.s32 %s156, 1
    %s158 = scalar_select %p155, %s156, %s157
    %p161 = pneg %p155
    %p162 = scmp.eq.s32.totalorder %s15, 1
    %p163 = por %p161, %p162
    %p164 = scmp.ne.s32.totalorder %s156, %s159
    %p165 = scmp.eq.s32.totalorder %s15, 0
    %p166 = por %p164, %p165
    %p167 = scmp.ne.s32.totalorder %s156, %s159
    %p168 = scmp.eq.s32.totalorder %s20, 1
    %p169 = por %p167, %p168
    %p170 = scmp.ne.s32.totalorder %s159, %s160
    %p171 = scmp.eq.s32.totalorder %s20, 0
    %p172 = por %p170, %p171
    %p173 = scmp.ne.s32.totalorder %s159, %s160
    %p174 = scmp.eq.s32.totalorder %s21, 1
    %p175 = por %p173, %p174
    %p177 = scmp.ne.s32.totalorder %s160, %s176
    %p178 = scmp.eq.s32.totalorder %s21, 0
    %p179 = por %p177, %p178
    %s180 = ssub.s32 %s15, %s22
    %p181 = scmp.eq.s32.totalorder %s180, 0
    %s183 = sadd.s32 %s182, 1
    %s184 = scalar_select %p181, %s182, %s183
    %p187 = pneg %p181
    %p188 = scmp.eq.s32.totalorder %s15, 1
    %p189 = por %p187, %p188
    %p190 = scmp.ne.s32.totalorder %s182, %s185
    %p191 = scmp.eq.s32.totalorder %s15, 0
    %p192 = por %p190, %p191
    %p193 = scmp.ne.s32.totalorder %s182, %s185
    %p194 = scmp.eq.s32.totalorder %s20, 1
    %p195 = por %p193, %p194
    %p196 = scmp.ne.s32.totalorder %s185, %s186
    %p197 = scmp.eq.s32.totalorder %s20, 0
    %p198 = por %p196, %p197
    %p199 = scmp.ne.s32.totalorder %s185, %s186
    %p200 = scmp.eq.s32.totalorder %s21, 1
    %p201 = por %p199, %p200
    %p203 = scmp.ne.s32.totalorder %s186, %s202
    %p204 = scmp.eq.s32.totalorder %s21, 0
    %p205 = por %p203, %p204
    %s206 = ssub.s32 %s15, %s22
    %p207 = scmp.eq.s32.totalorder %s206, 0
    %s209 = sadd.s32 %s208, 1
    %s210 = scalar_select %p207, %s208, %s209
    %p213 = pneg %p207
    %p214 = scmp.eq.s32.totalorder %s15, 1
    %p215 = por %p213, %p214
    %p216 = scmp.ne.s32.totalorder %s208, %s211
    %p217 = scmp.eq.s32.totalorder %s15, 0
    %p218 = por %p216, %p217
    %p219 = scmp.ne.s32.totalorder %s208, %s211
    %p220 = scmp.eq.s32.totalorder %s20, 1
    %p221 = por %p219, %p220
    %p222 = scmp.ne.s32.totalorder %s211, %s212
    %p223 = scmp.eq.s32.totalorder %s20, 0
    %p224 = por %p222, %p223
    %p225 = scmp.ne.s32.totalorder %s211, %s212
    %p226 = scmp.eq.s32.totalorder %s21, 1
    %p227 = por %p225, %p226
    %p229 = scmp.ne.s32.totalorder %s212, %s228
    %p230 = scmp.eq.s32.totalorder %s21, 0
    %p231 = por %p229, %p230
    %p232 = scmp.le.s32.totalorder 1, %s15
    %p233 = scmp.lt.s32.totalorder %s15, 3
    %p234 = pnand %p232, %p233
    %p235 = pneg %p234
    // Predicated region
    $region9: #{basic_block_forward.4} parent=5 // pred_check
      _
    $region10: #{basic_block_forward.4} parent=5 // pred_check_branch
      %237 = sbr.rel (%p234) target = $region12
    $region11: #{basic_block_forward.4} parent=5 // pred_region
      %s238 = ssub.s32 %s15, 1
      // Predicated region
      $region13: #{basic_block_forward.4} parent=11 // pred_check
        %p239 = pneg %p62
      $region14: #{basic_block_forward.4} parent=11 // pred_check_branch
        %241 = sbr.rel (%p239) target = $region16
      $region15: #{basic_block_forward.4} parent=11 // pred_region
        _
      $region16: #{basic_block_forward.4} parent=11 // pred_fallthru
        _
      // Predicated region
      $region17: #{basic_block_forward.4} parent=11 // pred_check
        %p242 = pneg %p83
      $region18: #{basic_block_forward.4} parent=11 // pred_check_branch
        %244 = sbr.rel (%p242) target = $region20
      $region19: #{basic_block_forward.4} parent=11 // pred_region
        _
      $region20: #{basic_block_forward.4} parent=11 // pred_fallthru
        _
      // Predicated region
      $region21: #{basic_block_forward.4} parent=11 // pred_check
        %p245 = pneg %p104
      $region22: #{basic_block_forward.4} parent=11 // pred_check_branch
        %247 = sbr.rel (%p245) target = $region24
      $region23: #{basic_block_forward.4} parent=11 // pred_region
        _
      $region24: #{basic_block_forward.4} parent=11 // pred_fallthru
        _
      // Predicated region
      $region25: #{basic_block_forward.4} parent=11 // pred_check
        %p248 = pneg %p125
      $region26: #{basic_block_forward.4} parent=11 // pred_check_branch
        %250 = sbr.rel (%p248) target = $region28
      $region27: #{basic_block_forward.4} parent=11 // pred_region
        _
      $region28: #{basic_block_forward.4} parent=11 // pred_fallthru
        _
      // Predicated region
      $region29: #{basic_block_forward.4} parent=11 // pred_check
        %p251 = pneg %p146
      $region30: #{basic_block_forward.4} parent=11 // pred_check_branch
        %253 = sbr.rel (%p251) target = $region32
      $region31: #{basic_block_forward.4} parent=11 // pred_region
        _
      $region32: #{basic_block_forward.4} parent=11 // pred_fallthru
        _
    $region12: #{basic_block_forward.4} parent=5 // pred_fallthru
      _
    %p254 = scmp.lt.s32.totalorder %s15, 2
    // Predicated region
    $region33: #{basic_block_forward.4} parent=5 // pred_check
      %p255 = pneg %p254
    $region34: #{basic_block_forward.4} parent=5 // pred_check_branch
      %257 = sbr.rel (%p255) target = $region36
    $region35: #{basic_block_forward.4} parent=5 // pred_region
      // Predicated region
      $region37: #{basic_block_forward.4} parent=35 // pred_check
        %p258 = pneg %p35
      $region38: #{basic_block_forward.4} parent=35 // pred_check_branch
        %260 = sbr.rel (%p258) target = $region40
      $region39: #{basic_block_forward.4} parent=35 // pred_region
        %p261 = scmp.lt.s32.totalorder %s15, 1
        %s262 = scalar_select %p261, %s15, 1
        %s263 = smul.addr %s262, 8
        %s264 = smul.addr %s263, 4
        %s265 = scalar_lea.vmem %s0, %s264
      $region40: #{basic_block_forward.4} parent=35 // pred_fallthru
        _
    $region36: #{basic_block_forward.4} parent=5 // pred_fallthru
      _
    %p266 = scmp.le.s32.totalorder 1, %s15
    %p267 = scmp.lt.s32.totalorder %s15, 3
    %p268 = pnand %p266, %p267
    %p269 = pneg %p268
    // Predicated region
    $region41: #{basic_block_forward.4} parent=5 // pred_check
      _
    $region42: #{basic_block_forward.4} parent=5 // pred_check_branch
      %271 = sbr.rel (%p268) target = $region44
    $region43: #{basic_block_forward.4} parent=5 // pred_region
      %s272 = ssub.s32 %s15, 1
      %p273 = scmp.lt.s32.totalorder %s20, 1
      %s274 = scalar_select %p273, %s20, 1
      %s275 = smul.addr %s274, 8
      %s276 = smul.addr %s275, 4
      %s277 = scalar_lea.vmem %s0, %s276
      %p278 = pneg %p41
      %p279 = pneg %p38
      %p280 = pneg %p62
      %p281 = pneg %p59
      %p282 = pneg %p83
      %p283 = pneg %p80
      %p284 = pneg %p104
      %p285 = pneg %p101
      %p286 = pneg %p125
      %p287 = pneg %p122
      %p288 = pneg %p146
      %p289 = pneg %p143
      %p290 = pneg %p172
      %p291 = pneg %p169
      %p292 = scmp.lt.s32.totalorder %s20, 1
      %s293 = scalar_select %p292, %s20, 1
      %s294 = smul.addr %s293, 8
      %s295 = smul.addr %s294, 4
      %s296 = scalar_lea.vmem %s6, %s295
      %p297 = pneg %p198
      %p298 = pneg %p195
      %p299 = scmp.lt.s32.totalorder %s20, 1
      %s300 = scalar_select %p299, %s20, 1
      %s301 = scalar_lea.vmem %s7, %s300
      %p302 = pneg %p224
      %p303 = pneg %p221
      %p304 = scmp.lt.s32.totalorder %s20, 1
      %s305 = scalar_select %p304, %s20, 1
      %s306 = scalar_lea.vmem %s8, %s305
      %p307 = scmp.lt.s32.totalorder %s20, 1
      %s308 = scalar_select %p307, %s20, 1
      %s309 = smul.addr %s308, 8
      %s310 = smul.addr %s309, 4
      %s311 = scalar_lea.vmem %s0, %s310
      %p312 = scmp.lt.s32.totalorder %s20, 1
      %s313 = scalar_select %p312, %s20, 1
      %s314 = smul.addr %s313, 8
      %s315 = smul.addr %s314, 4
      %s316 = scalar_lea.vmem %s6, %s315
      %p317 = scmp.lt.s32.totalorder %s20, 1
      %s318 = scalar_select %p317, %s20, 1
      %s319 = scalar_lea.vmem %s7, %s318
      %p320 = scmp.lt.s32.totalorder %s20, 1
      %s321 = scalar_select %p320, %s20, 1
      %s322 = scalar_lea.vmem %s8, %s321
      %v324 = vld [vmem:[%s1] sm:$0x1]
      %v325 = vmul.f32 %v324, 0.0078125
      %v326 = vld [vmem:[%s2] sm:$0x1]
      %v327 = vmul.f32 %v326, 0.0078125
      %v328 = vmul.f32 %v325, %v325
      %v329 = vsub.f32 %v327, %v328
      %v330 = vmax.f32 %v329, 0.0
      %v331 = vadd.f32 %v330, 1e-05
      %v332 = vrsqrt.pop %v331
      %v333 = vld [vmem:[%s3] sm:$0x1]
      %v334 = vmul.f32 %v332, %v333
      %v335 = vld [vmem:[%s4] sm:$0x1]
      %v336 = vmul.f32 %v325, %v334
      %v337 = vsub.f32 %v335, %v336
      %v338 = vld [vmem:[%s311] sm:$0xf]
      %v339 = vld [vmem:[%s311 + $0x4] sm:$0xf]
      %v340 = vld [vmem:[%s311 + $0x8] sm:$0xf]
      %v341 = vld [vmem:[%s311 + $0xc] sm:$0xf]
      %v342 = vld [vmem:[%s311 + $0x10] sm:$0xf]
      %v343 = vld [vmem:[%s311 + $0x14] sm:$0xf]
      %v344 = vld [vmem:[%s311 + $0x18] sm:$0xf]
      %v345 = vld [vmem:[%s311 + $0x1c] sm:$0xf]
      %v346 = vunpack.c.l.bf16 %v338
      %v347 = vunpack.c.l.bf16 %v339
      %v348 = vunpack.c.l.bf16 %v340
      %v349 = vunpack.c.l.bf16 %v341
      %v350 = vunpack.c.l.bf16 %v342
      %v351 = vunpack.c.l.bf16 %v343
      %v352 = vunpack.c.l.bf16 %v344
      %v353 = vunpack.c.l.bf16 %v345
      %v355 = vlaneseq
      %v356 = vshrl.u32 %v355, 7
      %v357 = vsub.s32 0, %v356
      %v358 = vrot.slane %v334, %v357
      %v360 = vmul.f32 %v346, %v358
      %v361 = vmul.f32 %v347, %v358
      %v362 = vmul.f32 %v348, %v358
      %v363 = vmul.f32 %v349, %v358
      %v364 = vmul.f32 %v350, %v358
      %v365 = vmul.f32 %v351, %v358
      %v366 = vmul.f32 %v352, %v358
      %v367 = vmul.f32 %v353, %v358
      %v369 = vlaneseq
      %v370 = vshrl.u32 %v369, 7
      %v371 = vsub.s32 0, %v370
      %v372 = vrot.slane %v337, %v371
      %v374 = vadd.f32 %v360, %v372
      %v375 = vadd.f32 %v361, %v372
      %v376 = vadd.f32 %v362, %v372
      %v377 = vadd.f32 %v363, %v372
      %v378 = vadd.f32 %v364, %v372
      %v379 = vadd.f32 %v365, %v372
      %v380 = vadd.f32 %v366, %v372
      %v381 = vadd.f32 %v367, %v372
      %v382 = vmax.f32 %v374, 0.0
      %v383 = vmax.f32 %v375, 0.0
      %v384 = vmax.f32 %v376, 0.0
      %v385 = vmax.f32 %v377, 0.0
      %v386 = vmax.f32 %v378, 0.0
      %v387 = vmax.f32 %v379, 0.0
      %v388 = vmax.f32 %v380, 0.0
      %v389 = vmax.f32 %v381, 0.0
      %390 = vst [vmem:[#allocation2] sm:$0xf] 0
      %391 = vst [vmem:[#allocation2 + $0x4] sm:$0x1] 0
      %s392 = scalar_lea.vmem [#allocation2], 72
      %393 = vst [vmem:[%s392] sm:$0xf] 0
      %394 = vst [vmem:[%s392 + $0x4] sm:$0x1] 0
      %vm395 = vcmask 1040384
      %vm396 = vsmask.f32 256
      %vm397 = vmand %vm395, %vm396
      %v398 = vld [vmem:[#allocation2] sm:$0x1]
      %v399 = vsel %vm397, 0, %v398
      %400 = vst [vmem:[#allocation2] sm:$0x1] %v399
      %v401 = vld [vmem:[#allocation2 + $0x8] sm:$0x1]
      %v402 = vsel %vm397, 0, %v401
      %403 = vst [vmem:[#allocation2 + $0x8] sm:$0x1] %v402
      %v404 = vld [vmem:[#allocation2 + $0x10] sm:$0x1]
      %v405 = vsel %vm397, 0, %v404
      %406 = vst [vmem:[#allocation2 + $0x10] sm:$0x1] %v405
      %v407 = vld [vmem:[#allocation2 + $0x18] sm:$0x1]
      %v408 = vsel %vm397, 0, %v407
      %409 = vst [vmem:[#allocation2 + $0x18] sm:$0x1] %v408
      %v410 = vld [vmem:[#allocation2 + $0x20] sm:$0x1]
      %v411 = vsel %vm397, 0, %v410
      %412 = vst [vmem:[#allocation2 + $0x20] sm:$0x1] %v411
      %v413 = vld [vmem:[#allocation2 + $0x28] sm:$0x1]
      %v414 = vsel %vm397, 0, %v413
      %415 = vst [vmem:[#allocation2 + $0x28] sm:$0x1] %v414
      %v416 = vld [vmem:[#allocation2 + $0x30] sm:$0x1]
      %v417 = vsel %vm397, 0, %v416
      %418 = vst [vmem:[#allocation2 + $0x30] sm:$0x1] %v417
      %v419 = vld [vmem:[#allocation2 + $0x38] sm:$0x1]
      %v420 = vsel %vm397, 0, %v419
      %421 = vst [vmem:[#allocation2 + $0x38] sm:$0x1] %v420
      %v422 = vld [vmem:[#allocation2 + $0x40] sm:$0x1]
      %v423 = vsel %vm397, 0, %v422
      %424 = vst [vmem:[#allocation2 + $0x40] sm:$0x1] %v423
      %v425 = vld [vmem:[#allocation2 + $0x48] sm:$0x1]
      %v426 = vsel %vm397, 0, %v425
      %427 = vst [vmem:[#allocation2 + $0x48] sm:$0x1] %v426
      %vm428 = vsmask.f32 7938
      %vm429 = vmand %vm395, %vm428
      %v430 = vld [vmem:[#allocation2 + $0x4] sm:$0x1]
      %v431 = vsel %vm429, 0, %v430
      %432 = vst [vmem:[#allocation2 + $0x4] sm:$0x1] %v431
      %v433 = vld [vmem:[#allocation2 + $0xc] sm:$0x1]
      %v434 = vsel %vm429, 0, %v433
      %435 = vst [vmem:[#allocation2 + $0xc] sm:$0x1] %v434
      %v436 = vld [vmem:[#allocation2 + $0x14] sm:$0x1]
      %v437 = vsel %vm429, 0, %v436
      %438 = vst [vmem:[#allocation2 + $0x14] sm:$0x1] %v437
      %v439 = vld [vmem:[#allocation2 + $0x1c] sm:$0x1]
      %v440 = vsel %vm429, 0, %v439
      %441 = vst [vmem:[#allocation2 + $0x1c] sm:$0x1] %v440
      %v442 = vld [vmem:[#allocation2 + $0x24] sm:$0x1]
      %v443 = vsel %vm429, 0, %v442
      %444 = vst [vmem:[#allocation2 + $0x24] sm:$0x1] %v443
      %v445 = vld [vmem:[#allocation2 + $0x2c] sm:$0x1]
      %v446 = vsel %vm429, 0, %v445
      %447 = vst [vmem:[#allocation2 + $0x2c] sm:$0x1] %v446
      %v448 = vld [vmem:[#allocation2 + $0x34] sm:$0x1]
      %v449 = vsel %vm429, 0, %v448
      %450 = vst [vmem:[#allocation2 + $0x34] sm:$0x1] %v449
      %v451 = vld [vmem:[#allocation2 + $0x3c] sm:$0x1]
      %v452 = vsel %vm429, 0, %v451
      %453 = vst [vmem:[#allocation2 + $0x3c] sm:$0x1] %v452
      %v454 = vld [vmem:[#allocation2 + $0x44] sm:$0x1]
      %v455 = vsel %vm429, 0, %v454
      %456 = vst [vmem:[#allocation2 + $0x44] sm:$0x1] %v455
      %v457 = vld [vmem:[#allocation2 + $0x4c] sm:$0x1]
      %v458 = vsel %vm429, 0, %v457
      %459 = vst [vmem:[#allocation2 + $0x4c] sm:$0x1] %v458
      %v460 = vpack.c.bf16 %v382, %v382
      %v461 = vpack.c.bf16 %v383, %v383
      %v462 = vpack.c.bf16 %v384, %v384
      %v463 = vpack.c.bf16 %v385, %v385
      %v464 = vpack.c.bf16 %v386, %v386
      %v465 = vpack.c.bf16 %v387, %v387
      %v466 = vpack.c.bf16 %v388, %v388
      %v467 = vpack.c.bf16 %v389, %v389
      %v476 = vunpack.c.l.b16 %v460
      %v477 = vunpack.c.l.b16 %v461
      %v478 = vunpack.c.l.b16 %v462
      %v479 = vunpack.c.l.b16 %v463
      %v480 = vunpack.c.l.b16 %v464
      %v481 = vunpack.c.l.b16 %v465
      %v482 = vunpack.c.l.b16 %v466
      %v483 = vunpack.c.l.b16 %v467
      %v484 = vpack.c.b16 %v476, %v476
      %v485 = vpack.c.b16 %v477, %v477
      %v486 = vpack.c.b16 %v478, %v478
      %v487 = vpack.c.b16 %v479, %v479
      %v488 = vpack.c.b16 %v480, %v480
      %v489 = vpack.c.b16 %v481, %v481
      %v490 = vpack.c.b16 %v482, %v482
      %v491 = vpack.c.b16 %v483, %v483
      %v493 = vshrl.u32 %v484, 16
      %v495 = vrot.slane %v493, 7
      %v496 = vshll.u32 %v484, 16
      %v498 = vor.u32 %v495, %v496
      %v499 = vrot.slane %v495, 4
      %v501 = vshrl.u32 %v485, 16
      %v503 = vrot.slane %v501, 7
      %v504 = vshll.u32 %v485, 16
      %v506 = vor.u32 %v503, %v504
      %v507 = vrot.slane %v503, 4
      %v509 = vshrl.u32 %v486, 16
      %v511 = vrot.slane %v509, 7
      %v512 = vshll.u32 %v486, 16
      %v514 = vor.u32 %v511, %v512
      %v515 = vrot.slane %v511, 4
      %v517 = vshrl.u32 %v487, 16
      %v519 = vrot.slane %v517, 7
      %v520 = vshll.u32 %v487, 16
      %v522 = vor.u32 %v519, %v520
      %v523 = vrot.slane %v519, 4
      %v525 = vshrl.u32 %v488, 16
      %v527 = vrot.slane %v525, 7
      %v528 = vshll.u32 %v488, 16
      %v530 = vor.u32 %v527, %v528
      %v531 = vrot.slane %v527, 4
      %v533 = vshrl.u32 %v489, 16
      %v535 = vrot.slane %v533, 7
      %v536 = vshll.u32 %v489, 16
      %v538 = vor.u32 %v535, %v536
      %v539 = vrot.slane %v535, 4
      %v541 = vshrl.u32 %v490, 16
      %v543 = vrot.slane %v541, 7
      %v544 = vshll.u32 %v490, 16
      %v546 = vor.u32 %v543, %v544
      %v547 = vrot.slane %v543, 4
      %v549 = vshrl.u32 %v491, 16
      %v551 = vrot.slane %v549, 7
      %v552 = vshll.u32 %v491, 16
      %v554 = vor.u32 %v551, %v552
      %v555 = vrot.slane %v551, 4
      %s572 = scalar_lea.vmem [#allocation2], 8
      %vm573 = vcmask 1043456
      %vm574 = vmand %vm573, %vm428
      %v575 = vld [vmem:[%s572] sm:$0xf]
      %v576 = vsel %vm574, %v498, %v575
      %577 = vst [vmem:[%s572] sm:$0xf] %v576
      %v578 = vld [vmem:[%s572 + $0x4] sm:$0x1]
      %v579 = vsel %vm397, %v499, %v578
      %580 = vst [vmem:[%s572 + $0x4] sm:$0x1] %v579
      %v581 = vld [vmem:[%s572 + $0x8] sm:$0xf]
      %v582 = vsel %vm574, %v506, %v581
      %583 = vst [vmem:[%s572 + $0x8] sm:$0xf] %v582
      %v584 = vld [vmem:[%s572 + $0xc] sm:$0x1]
      %v585 = vsel %vm397, %v507, %v584
      %586 = vst [vmem:[%s572 + $0xc] sm:$0x1] %v585
      %v587 = vld [vmem:[%s572 + $0x10] sm:$0xf]
      %v588 = vsel %vm574, %v514, %v587
      %589 = vst [vmem:[%s572 + $0x10] sm:$0xf] %v588
      %v590 = vld [vmem:[%s572 + $0x14] sm:$0x1]
      %v591 = vsel %vm397, %v515, %v590
      %592 = vst [vmem:[%s572 + $0x14] sm:$0x1] %v591
      %v593 = vld [vmem:[%s572 + $0x18] sm:$0xf]
      %v594 = vsel %vm574, %v522, %v593
      %595 = vst [vmem:[%s572 + $0x18] sm:$0xf] %v594
      %v596 = vld [vmem:[%s572 + $0x1c] sm:$0x1]
      %v597 = vsel %vm397, %v523, %v596
      %598 = vst [vmem:[%s572 + $0x1c] sm:$0x1] %v597
      %v599 = vld [vmem:[%s572 + $0x20] sm:$0xf]
      %v600 = vsel %vm574, %v530, %v599
      %601 = vst [vmem:[%s572 + $0x20] sm:$0xf] %v600
      %v602 = vld [vmem:[%s572 + $0x24] sm:$0x1]
      %v603 = vsel %vm397, %v531, %v602
      %604 = vst [vmem:[%s572 + $0x24] sm:$0x1] %v603
      %v605 = vld [vmem:[%s572 + $0x28] sm:$0xf]
      %v606 = vsel %vm574, %v538, %v605
      %607 = vst [vmem:[%s572 + $0x28] sm:$0xf] %v606
      %v608 = vld [vmem:[%s572 + $0x2c] sm:$0x1]
      %v609 = vsel %vm397, %v539, %v608
      %610 = vst [vmem:[%s572 + $0x2c] sm:$0x1] %v609
      %v611 = vld [vmem:[%s572 + $0x30] sm:$0xf]
      %v612 = vsel %vm574, %v546, %v611
      %613 = vst [vmem:[%s572 + $0x30] sm:$0xf] %v612
      %v614 = vld [vmem:[%s572 + $0x34] sm:$0x1]
      %v615 = vsel %vm397, %v547, %v614
      %616 = vst [vmem:[%s572 + $0x34] sm:$0x1] %v615
      %v617 = vld [vmem:[%s572 + $0x38] sm:$0xf]
      %v618 = vsel %vm574, %v554, %v617
      %619 = vst [vmem:[%s572 + $0x38] sm:$0xf] %v618
      %v620 = vld [vmem:[%s572 + $0x3c] sm:$0x1]
      %v621 = vsel %vm397, %v555, %v620
      %622 = vst [vmem:[%s572 + $0x3c] sm:$0x1] %v621
      %v623 = vld [vmem:[#allocation2] sm:$0xf]
      %v624 = vld [vmem:[#allocation2 + $0x8] sm:$0xf]
      %v625 = vld [vmem:[#allocation2 + $0x10] sm:$0xf]
      %v626 = vld [vmem:[#allocation2 + $0x18] sm:$0xf]
      %v627 = vld [vmem:[#allocation2 + $0x20] sm:$0xf]
      %v628 = vld [vmem:[#allocation2 + $0x28] sm:$0xf]
      %v629 = vld [vmem:[#allocation2 + $0x30] sm:$0xf]
      %v630 = vld [vmem:[#allocation2 + $0x38] sm:$0xf]
      %v631 = vld [vmem:[#allocation2 + $0x4] sm:$0x1]
      %v632 = vld [vmem:[#allocation2 + $0xc] sm:$0x1]
      %v633 = vld [vmem:[#allocation2 + $0x14] sm:$0x1]
      %v634 = vld [vmem:[#allocation2 + $0x1c] sm:$0x1]
      %v635 = vld [vmem:[#allocation2 + $0x24] sm:$0x1]
      %v636 = vld [vmem:[#allocation2 + $0x2c] sm:$0x1]
      %v637 = vld [vmem:[#allocation2 + $0x34] sm:$0x1]
      %v638 = vld [vmem:[#allocation2 + $0x3c] sm:$0x1]
      %v639 = vld [vmem:[#allocation2] sm:$0xe]
      %v640 = vld [vmem:[#allocation2 + $0x8] sm:$0xe]
      %v641 = vld [vmem:[#allocation2 + $0x10] sm:$0xe]
      %v642 = vld [vmem:[#allocation2 + $0x18] sm:$0xe]
      %v643 = vld [vmem:[#allocation2 + $0x20] sm:$0xe]
      %v644 = vld [vmem:[#allocation2 + $0x28] sm:$0xe]
      %v645 = vld [vmem:[#allocation2 + $0x30] sm:$0xe]
      %v646 = vld [vmem:[#allocation2 + $0x38] sm:$0xe]
      %v647 = vld [vmem:[%s572] sm:$0xf]
      %v648 = vld [vmem:[%s572 + $0x8] sm:$0xf]
      %v649 = vld [vmem:[%s572 + $0x10] sm:$0xf]
      %v650 = vld [vmem:[%s572 + $0x18] sm:$0xf]
      %v651 = vld [vmem:[%s572 + $0x20] sm:$0xf]
      %v652 = vld [vmem:[%s572 + $0x28] sm:$0xf]
      %v653 = vld [vmem:[%s572 + $0x30] sm:$0xf]
      %v654 = vld [vmem:[%s572 + $0x38] sm:$0xf]
      %v655 = vld [vmem:[%s572 + $0x4] sm:$0x1]
      %v656 = vld [vmem:[%s572 + $0xc] sm:$0x1]
      %v657 = vld [vmem:[%s572 + $0x14] sm:$0x1]
      %v658 = vld [vmem:[%s572 + $0x1c] sm:$0x1]
      %v659 = vld [vmem:[%s572 + $0x24] sm:$0x1]
      %v660 = vld [vmem:[%s572 + $0x2c] sm:$0x1]
      %v661 = vld [vmem:[%s572 + $0x34] sm:$0x1]
      %v662 = vld [vmem:[%s572 + $0x3c] sm:$0x1]
      %v663 = vld [vmem:[%s572] sm:$0xe]
      %v664 = vld [vmem:[%s572 + $0x8] sm:$0xe]
      %v665 = vld [vmem:[%s572 + $0x10] sm:$0xe]
      %v666 = vld [vmem:[%s572 + $0x18] sm:$0xe]
      %v667 = vld [vmem:[%s572 + $0x20] sm:$0xe]
      %v668 = vld [vmem:[%s572 + $0x28] sm:$0xe]
      %v669 = vld [vmem:[%s572 + $0x30] sm:$0xe]
      %v670 = vld [vmem:[%s572 + $0x38] sm:$0xe]
      %s671 = scalar_lea.vmem [#allocation2], 16
      %v672 = vld [vmem:[%s671] sm:$0xf]
      %v673 = vld [vmem:[%s671 + $0x8] sm:$0xf]
      %v674 = vld [vmem:[%s671 + $0x10] sm:$0xf]
      %v675 = vld [vmem:[%s671 + $0x18] sm:$0xf]
      %v676 = vld [vmem:[%s671 + $0x20] sm:$0xf]
      %v677 = vld [vmem:[%s671 + $0x28] sm:$0xf]
      %v678 = vld [vmem:[%s671 + $0x30] sm:$0xf]
      %v679 = vld [vmem:[%s671 + $0x38] sm:$0xf]
      %v680 = vld [vmem:[%s671 + $0x4] sm:$0x1]
      %v681 = vld [vmem:[%s671 + $0xc] sm:$0x1]
      %v682 = vld [vmem:[%s671 + $0x14] sm:$0x1]
      %v683 = vld [vmem:[%s671 + $0x1c] sm:$0x1]
      %v684 = vld [vmem:[%s671 + $0x24] sm:$0x1]
      %v685 = vld [vmem:[%s671 + $0x2c] sm:$0x1]
      %v686 = vld [vmem:[%s671 + $0x34] sm:$0x1]
      %v687 = vld [vmem:[%s671 + $0x3c] sm:$0x1]
      %v688 = vld [vmem:[%s671] sm:$0xe]
      %v689 = vld [vmem:[%s671 + $0x8] sm:$0xe]
      %v690 = vld [vmem:[%s671 + $0x10] sm:$0xe]
      %v691 = vld [vmem:[%s671 + $0x18] sm:$0xe]
      %v692 = vld [vmem:[%s671 + $0x20] sm:$0xe]
      %v693 = vld [vmem:[%s671 + $0x28] sm:$0xe]
      %v694 = vld [vmem:[%s671 + $0x30] sm:$0xe]
      %v695 = vld [vmem:[%s671 + $0x38] sm:$0xe]
      %v712 = vunpack.c.l.b16 %v623
      %v713 = vunpack.c.l.b16 %v631
      %v714 = vunpack.c.l.b16 %v624
      %v715 = vunpack.c.l.b16 %v632
      %v716 = vunpack.c.l.b16 %v625
      %v717 = vunpack.c.l.b16 %v633
      %v718 = vunpack.c.l.b16 %v626
      %v719 = vunpack.c.l.b16 %v634
      %v720 = vunpack.c.l.b16 %v627
      %v721 = vunpack.c.l.b16 %v635
      %v722 = vunpack.c.l.b16 %v628
      %v723 = vunpack.c.l.b16 %v636
      %v724 = vunpack.c.l.b16 %v629
      %v725 = vunpack.c.l.b16 %v637
      %v726 = vunpack.c.l.b16 %v630
      %v727 = vunpack.c.l.b16 %v638
      %v728 = vpack.c.b16 %v713, %v712
      %v729 = vpack.c.b16 %v715, %v714
      %v730 = vpack.c.b16 %v717, %v716
      %v731 = vpack.c.b16 %v719, %v718
      %v732 = vpack.c.b16 %v721, %v720
      %v733 = vpack.c.b16 %v723, %v722
      %v734 = vpack.c.b16 %v725, %v724
      %v735 = vpack.c.b16 %v727, %v726
      %v737 = vshrl.u32 %v728, 16
      %v739 = vshll.u32 %v728, 16
      %v741 = vrot.slane %v739, 1
      %v742 = vor.u32 %v737, %v741
      %v744 = vshrl.u32 %v729, 16
      %v746 = vshll.u32 %v729, 16
      %v748 = vrot.slane %v746, 1
      %v749 = vor.u32 %v744, %v748
      %v751 = vshrl.u32 %v730, 16
      %v753 = vshll.u32 %v730, 16
      %v755 = vrot.slane %v753, 1
      %v756 = vor.u32 %v751, %v755
      %v758 = vshrl.u32 %v731, 16
      %v760 = vshll.u32 %v731, 16
      %v762 = vrot.slane %v760, 1
      %v763 = vor.u32 %v758, %v762
      %v765 = vshrl.u32 %v732, 16
      %v767 = vshll.u32 %v732, 16
      %v769 = vrot.slane %v767, 1
      %v770 = vor.u32 %v765, %v769
      %v772 = vshrl.u32 %v733, 16
      %v774 = vshll.u32 %v733, 16
      %v776 = vrot.slane %v774, 1
      %v777 = vor.u32 %v772, %v776
      %v779 = vshrl.u32 %v734, 16
      %v781 = vshll.u32 %v734, 16
      %v783 = vrot.slane %v781, 1
      %v784 = vor.u32 %v779, %v783
      %v786 = vshrl.u32 %v735, 16
      %v788 = vshll.u32 %v735, 16
      %v790 = vrot.slane %v788, 1
      %v791 = vor.u32 %v786, %v790
      %v800 = vunpack.c.l.b16 %v639
      %v801 = vunpack.c.l.b16 %v640
      %v802 = vunpack.c.l.b16 %v641
      %v803 = vunpack.c.l.b16 %v642
      %v804 = vunpack.c.l.b16 %v643
      %v805 = vunpack.c.l.b16 %v644
      %v806 = vunpack.c.l.b16 %v645
      %v807 = vunpack.c.l.b16 %v646
      %v808 = vpack.c.b16 %v713, %v800
      %v809 = vpack.c.b16 %v715, %v801
      %v810 = vpack.c.b16 %v717, %v802
      %v811 = vpack.c.b16 %v719, %v803
      %v812 = vpack.c.b16 %v721, %v804
      %v813 = vpack.c.b16 %v723, %v805
      %v814 = vpack.c.b16 %v725, %v806
      %v815 = vpack.c.b16 %v727, %v807
      %v816 = vrot.slane %v808, 1
      %v817 = vrot.slane %v809, 1
      %v818 = vrot.slane %v810, 1
      %v819 = vrot.slane %v811, 1
      %v820 = vrot.slane %v812, 1
      %v821 = vrot.slane %v813, 1
      %v822 = vrot.slane %v814, 1
      %v823 = vrot.slane %v815, 1
      %v840 = vunpack.c.l.b16 %v647
      %v841 = vunpack.c.l.b16 %v655
      %v842 = vunpack.c.l.b16 %v648
      %v843 = vunpack.c.l.b16 %v656
      %v844 = vunpack.c.l.b16 %v649
      %v845 = vunpack.c.l.b16 %v657
      %v846 = vunpack.c.l.b16 %v650
      %v847 = vunpack.c.l.b16 %v658
      %v848 = vunpack.c.l.b16 %v651
      %v849 = vunpack.c.l.b16 %v659
      %v850 = vunpack.c.l.b16 %v652
      %v851 = vunpack.c.l.b16 %v660
      %v852 = vunpack.c.l.b16 %v653
      %v853 = vunpack.c.l.b16 %v661
      %v854 = vunpack.c.l.b16 %v654
      %v855 = vunpack.c.l.b16 %v662
      %v856 = vpack.c.b16 %v841, %v840
      %v857 = vpack.c.b16 %v843, %v842
      %v858 = vpack.c.b16 %v845, %v844
      %v859 = vpack.c.b16 %v847, %v846
      %v860 = vpack.c.b16 %v849, %v848
      %v861 = vpack.c.b16 %v851, %v850
      %v862 = vpack.c.b16 %v853, %v852
      %v863 = vpack.c.b16 %v855, %v854
      %v865 = vshrl.u32 %v856, 16
      %v867 = vshll.u32 %v856, 16
      %v869 = vrot.slane %v867, 1
      %v870 = vor.u32 %v865, %v869
      %v872 = vshrl.u32 %v857, 16
      %v874 = vshll.u32 %v857, 16
      %v876 = vrot.slane %v874, 1
      %v877 = vor.u32 %v872, %v876
      %v879 = vshrl.u32 %v858, 16
      %v881 = vshll.u32 %v858, 16
      %v883 = vrot.slane %v881, 1
      %v884 = vor.u32 %v879, %v883
      %v886 = vshrl.u32 %v859, 16
      %v888 = vshll.u32 %v859, 16
      %v890 = vrot.slane %v888, 1
      %v891 = vor.u32 %v886, %v890
      %v893 = vshrl.u32 %v860, 16
      %v895 = vshll.u32 %v860, 16
      %v897 = vrot.slane %v895, 1
      %v898 = vor.u32 %v893, %v897
      %v900 = vshrl.u32 %v861, 16
      %v902 = vshll.u32 %v861, 16
      %v904 = vrot.slane %v902, 1
      %v905 = vor.u32 %v900, %v904
      %v907 = vshrl.u32 %v862, 16
      %v909 = vshll.u32 %v862, 16
      %v911 = vrot.slane %v909, 1
      %v912 = vor.u32 %v907, %v911
      %v914 = vshrl.u32 %v863, 16
      %v916 = vshll.u32 %v863, 16
      %v918 = vrot.slane %v916, 1
      %v919 = vor.u32 %v914, %v918
      %v928 = vunpack.c.l.b16 %v663
      %v929 = vunpack.c.l.b16 %v664
      %v930 = vunpack.c.l.b16 %v665
      %v931 = vunpack.c.l.b16 %v666
      %v932 = vunpack.c.l.b16 %v667
      %v933 = vunpack.c.l.b16 %v668
      %v934 = vunpack.c.l.b16 %v669
      %v935 = vunpack.c.l.b16 %v670
      %v936 = vpack.c.b16 %v841, %v928
      %v937 = vpack.c.b16 %v843, %v929
      %v938 = vpack.c.b16 %v845, %v930
      %v939 = vpack.c.b16 %v847, %v931
      %v940 = vpack.c.b16 %v849, %v932
      %v941 = vpack.c.b16 %v851, %v933
      %v942 = vpack.c.b16 %v853, %v934
      %v943 = vpack.c.b16 %v855, %v935
      %v944 = vrot.slane %v936, 1
      %v945 = vrot.slane %v937, 1
      %v946 = vrot.slane %v938, 1
      %v947 = vrot.slane %v939, 1
      %v948 = vrot.slane %v940, 1
      %v949 = vrot.slane %v941, 1
      %v950 = vrot.slane %v942, 1
      %v951 = vrot.slane %v943, 1
      %v968 = vunpack.c.l.b16 %v672
      %v969 = vunpack.c.l.b16 %v680
      %v970 = vunpack.c.l.b16 %v673
      %v971 = vunpack.c.l.b16 %v681
      %v972 = vunpack.c.l.b16 %v674
      %v973 = vunpack.c.l.b16 %v682
      %v974 = vunpack.c.l.b16 %v675
      %v975 = vunpack.c.l.b16 %v683
      %v976 = vunpack.c.l.b16 %v676
      %v977 = vunpack.c.l.b16 %v684
      %v978 = vunpack.c.l.b16 %v677
      %v979 = vunpack.c.l.b16 %v685
      %v980 = vunpack.c.l.b16 %v678
      %v981 = vunpack.c.l.b16 %v686
      %v982 = vunpack.c.l.b16 %v679
      %v983 = vunpack.c.l.b16 %v687
      %v984 = vpack.c.b16 %v969, %v968
      %v985 = vpack.c.b16 %v971, %v970
      %v986 = vpack.c.b16 %v973, %v972
      %v987 = vpack.c.b16 %v975, %v974
      %v988 = vpack.c.b16 %v977, %v976
      %v989 = vpack.c.b16 %v979, %v978
      %v990 = vpack.c.b16 %v981, %v980
      %v991 = vpack.c.b16 %v983, %v982
      %v993 = vshrl.u32 %v984, 16
      %v995 = vshll.u32 %v984, 16
      %v997 = vrot.slane %v995, 1
      %v998 = vor.u32 %v993, %v997
      %v1000 = vshrl.u32 %v985, 16
      %v1002 = vshll.u32 %v985, 16
      %v1004 = vrot.slane %v1002, 1
      %v1005 = vor.u32 %v1000, %v1004
      %v1007 = vshrl.u32 %v986, 16
      %v1009 = vshll.u32 %v986, 16
      %v1011 = vrot.slane %v1009, 1
      %v1012 = vor.u32 %v1007, %v1011
      %v1014 = vshrl.u32 %v987, 16
      %v1016 = vshll.u32 %v987, 16
      %v1018 = vrot.slane %v1016, 1
      %v1019 = vor.u32 %v1014, %v1018
      %v1021 = vshrl.u32 %v988, 16
      %v1023 = vshll.u32 %v988, 16
      %v1025 = vrot.slane %v1023, 1
      %v1026 = vor.u32 %v1021, %v1025
      %v1028 = vshrl.u32 %v989, 16
      %v1030 = vshll.u32 %v989, 16
      %v1032 = vrot.slane %v1030, 1
      %v1033 = vor.u32 %v1028, %v1032
      %v1035 = vshrl.u32 %v990, 16
      %v1037 = vshll.u32 %v990, 16
      %v1039 = vrot.slane %v1037, 1
      %v1040 = vor.u32 %v1035, %v1039
      %v1042 = vshrl.u32 %v991, 16
      %v1044 = vshll.u32 %v991, 16
      %v1046 = vrot.slane %v1044, 1
      %v1047 = vor.u32 %v1042, %v1046
      %v1056 = vunpack.c.l.b16 %v688
      %v1057 = vunpack.c.l.b16 %v689
      %v1058 = vunpack.c.l.b16 %v690
      %v1059 = vunpack.c.l.b16 %v691
      %v1060 = vunpack.c.l.b16 %v692
      %v1061 = vunpack.c.l.b16 %v693
      %v1062 = vunpack.c.l.b16 %v694
      %v1063 = vunpack.c.l.b16 %v695
      %v1064 = vpack.c.b16 %v969, %v1056
      %v1065 = vpack.c.b16 %v971, %v1057
      %v1066 = vpack.c.b16 %v973, %v1058
      %v1067 = vpack.c.b16 %v975, %v1059
      %v1068 = vpack.c.b16 %v977, %v1060
      %v1069 = vpack.c.b16 %v979, %v1061
      %v1070 = vpack.c.b16 %v981, %v1062
      %v1071 = vpack.c.b16 %v983, %v1063
      %v1072 = vrot.slane %v1064, 1
      %v1073 = vrot.slane %v1065, 1
      %v1074 = vrot.slane %v1066, 1
      %v1075 = vrot.slane %v1067, 1
      %v1076 = vrot.slane %v1068, 1
      %v1077 = vrot.slane %v1069, 1
      %v1078 = vrot.slane %v1070, 1
      %v1079 = vrot.slane %v1071, 1
      %v1080 = vunpack.c.l.b16 %v742
      %v1081 = vunpack.c.l.b16 %v816
      %v1082 = vunpack.c.l.b16 %v870
      %v1083 = vunpack.c.l.b16 %v944
      %v1084 = vunpack.c.l.b16 %v998
      %v1085 = vunpack.c.l.b16 %v1072
      %v1086 = vunpack.c.l.b16 %v749
      %v1087 = vunpack.c.l.b16 %v817
      %v1088 = vunpack.c.l.b16 %v877
      %v1089 = vunpack.c.l.b16 %v945
      %v1090 = vunpack.c.l.b16 %v1005
      %v1091 = vunpack.c.l.b16 %v1073
      %v1092 = vunpack.c.l.b16 %v756
      %v1093 = vunpack.c.l.b16 %v818
      %v1094 = vunpack.c.l.b16 %v884
      %v1095 = vunpack.c.l.b16 %v946
      %v1096 = vunpack.c.l.b16 %v1012
      %v1097 = vunpack.c.l.b16 %v1074
      %v1098 = vunpack.c.l.b16 %v763
      %v1099 = vunpack.c.l.b16 %v819
      %v1100 = vunpack.c.l.b16 %v891
      %v1101 = vunpack.c.l.b16 %v947
      %v1102 = vunpack.c.l.b16 %v1019
      %v1103 = vunpack.c.l.b16 %v1075
      %v1104 = vunpack.c.l.b16 %v770
      %v1105 = vunpack.c.l.b16 %v820
      %v1106 = vunpack.c.l.b16 %v898
      %v1107 = vunpack.c.l.b16 %v948
      %v1108 = vunpack.c.l.b16 %v1026
      %v1109 = vunpack.c.l.b16 %v1076
      %v1110 = vunpack.c.l.b16 %v777
      %v1111 = vunpack.c.l.b16 %v821
      %v1112 = vunpack.c.l.b16 %v905
      %v1113 = vunpack.c.l.b16 %v949
      %v1114 = vunpack.c.l.b16 %v1033
      %v1115 = vunpack.c.l.b16 %v1077
      %v1116 = vunpack.c.l.b16 %v784
      %v1117 = vunpack.c.l.b16 %v822
      %v1118 = vunpack.c.l.b16 %v912
      %v1119 = vunpack.c.l.b16 %v950
      %v1120 = vunpack.c.l.b16 %v1040
      %v1121 = vunpack.c.l.b16 %v1078
      %v1122 = vunpack.c.l.b16 %v791
      %v1123 = vunpack.c.l.b16 %v823
      %v1124 = vunpack.c.l.b16 %v919
      %v1125 = vunpack.c.l.b16 %v951
      %v1126 = vunpack.c.l.b16 %v1047
      %v1127 = vunpack.c.l.b16 %v1079
      %v1128 = vld [vmem:[%s5] sm:$0xf]
      %v1129 = vld [vmem:[%s5 + $0x4] sm:$0xf]
      %v1130 = vld [vmem:[%s5 + $0x8] sm:$0xf]
      %v1131 = vld [vmem:[%s5 + $0xc] sm:$0xf]
      %v1132 = vld [vmem:[%s5 + $0x10] sm:$0xf]
      %v1133 = vld [vmem:[%s5 + $0x14] sm:$0xf]
      %v1134 = vld [vmem:[%s5 + $0x18] sm:$0xf]
      %v1135 = vld [vmem:[%s5 + $0x1c] sm:$0xf]
      %v1136 = vld [vmem:[%s5 + $0x20] sm:$0xf]
      %v1137 = vld [vmem:[%s5 + $0x24] sm:$0xf]
      %v1138 = vld [vmem:[%s5 + $0x28] sm:$0xf]
      %v1139 = vld [vmem:[%s5 + $0x2c] sm:$0xf]
      %v1140 = vld [vmem:[%s5 + $0x30] sm:$0xf]
      %v1141 = vld [vmem:[%s5 + $0x34] sm:$0xf]
      %v1142 = vld [vmem:[%s5 + $0x38] sm:$0xf]
      %v1143 = vld [vmem:[%s5 + $0x3c] sm:$0xf]
      %v1144 = vld [vmem:[%s5 + $0x40] sm:$0xf]
      %v1145 = vld [vmem:[%s5 + $0x44] sm:$0xf]
      %v1146 = vld [vmem:[%s5 + $0x48] sm:$0xf]
      %v1147 = vld [vmem:[%s5 + $0x4c] sm:$0xf]
      %v1148 = vld [vmem:[%s5 + $0x50] sm:$0xf]
      %v1149 = vld [vmem:[%s5 + $0x54] sm:$0xf]
      %v1150 = vld [vmem:[%s5 + $0x58] sm:$0xf]
      %v1151 = vld [vmem:[%s5 + $0x5c] sm:$0xf]
      %v1152 = vld [vmem:[%s5 + $0x60] sm:$0xf]
      %v1153 = vld [vmem:[%s5 + $0x64] sm:$0xf]
      %v1154 = vld [vmem:[%s5 + $0x68] sm:$0xf]
      %v1155 = vld [vmem:[%s5 + $0x6c] sm:$0xf]
      %v1156 = vld [vmem:[%s5 + $0x70] sm:$0xf]
      %v1157 = vld [vmem:[%s5 + $0x74] sm:$0xf]
      %v1158 = vld [vmem:[%s5 + $0x78] sm:$0xf]
      %v1159 = vld [vmem:[%s5 + $0x7c] sm:$0xf]
      %v1160 = vld [vmem:[%s5 + $0x80] sm:$0xf]
      %v1161 = vld [vmem:[%s5 + $0x84] sm:$0xf]
      %v1162 = vld [vmem:[%s5 + $0x88] sm:$0xf]
      %v1163 = vld [vmem:[%s5 + $0x8c] sm:$0xf]
      %v1164 = vld [vmem:[%s5 + $0x90] sm:$0xf]
      %v1165 = vld [vmem:[%s5 + $0x94] sm:$0xf]
      %v1166 = vld [vmem:[%s5 + $0x98] sm:$0xf]
      %v1167 = vld [vmem:[%s5 + $0x9c] sm:$0xf]
      %v1168 = vld [vmem:[%s5 + $0xa0] sm:$0xf]
      %v1169 = vld [vmem:[%s5 + $0xa4] sm:$0xf]
      %v1170 = vld [vmem:[%s5 + $0xa8] sm:$0xf]
      %v1171 = vld [vmem:[%s5 + $0xac] sm:$0xf]
      %v1172 = vld [vmem:[%s5 + $0xb0] sm:$0xf]
      %v1173 = vld [vmem:[%s5 + $0xb4] sm:$0xf]
      %v1174 = vld [vmem:[%s5 + $0xb8] sm:$0xf]
      %v1175 = vld [vmem:[%s5 + $0xbc] sm:$0xf]
      %v1176 = vld [vmem:[%s5 + $0xc0] sm:$0xf]
      %v1177 = vld [vmem:[%s5 + $0xc4] sm:$0xf]
      %v1178 = vld [vmem:[%s5 + $0xc8] sm:$0xf]
      %v1179 = vld [vmem:[%s5 + $0xcc] sm:$0xf]
      %v1180 = vld [vmem:[%s5 + $0xd0] sm:$0xf]
      %v1181 = vld [vmem:[%s5 + $0xd4] sm:$0xf]
      %v1182 = vld [vmem:[%s5 + $0xd8] sm:$0xf]
      %v1183 = vld [vmem:[%s5 + $0xdc] sm:$0xf]
      %v1184 = vld [vmem:[%s5 + $0xe0] sm:$0xf]
      %v1185 = vld [vmem:[%s5 + $0xe4] sm:$0xf]
      %v1186 = vld [vmem:[%s5 + $0xe8] sm:$0xf]
      %v1187 = vld [vmem:[%s5 + $0xec] sm:$0xf]
      %v1188 = vld [vmem:[%s5 + $0xf0] sm:$0xf]
      %v1189 = vld [vmem:[%s5 + $0xf4] sm:$0xf]
      %v1190 = vld [vmem:[%s5 + $0xf8] sm:$0xf]
      %v1191 = vld [vmem:[%s5 + $0xfc] sm:$0xf]
      %v1192 = vld [vmem:[%s5 + $0x100] sm:$0xf]
      %v1193 = vld [vmem:[%s5 + $0x104] sm:$0xf]
      %v1194 = vld [vmem:[%s5 + $0x108] sm:$0xf]
      %v1195 = vld [vmem:[%s5 + $0x10c] sm:$0xf]
      %v1196 = vld [vmem:[%s5 + $0x110] sm:$0xf]
      %v1197 = vld [vmem:[%s5 + $0x114] sm:$0xf]
      %v1198 = vld [vmem:[%s5 + $0x118] sm:$0xf]
      %v1199 = vld [vmem:[%s5 + $0x11c] sm:$0xf]
      %v1200 = vld [vmem:[%s5 + $0x120] sm:$0xf]
      %v1201 = vld [vmem:[%s5 + $0x124] sm:$0xf]
      %v1202 = vld [vmem:[%s5 + $0x128] sm:$0xf]
      %v1203 = vld [vmem:[%s5 + $0x12c] sm:$0xf]
      %v1204 = vld [vmem:[%s5 + $0x130] sm:$0xf]
      %v1205 = vld [vmem:[%s5 + $0x134] sm:$0xf]
      %v1206 = vld [vmem:[%s5 + $0x138] sm:$0xf]
      %v1207 = vld [vmem:[%s5 + $0x13c] sm:$0xf]
      %v1208 = vld [vmem:[%s5 + $0x140] sm:$0xf]
      %v1209 = vld [vmem:[%s5 + $0x144] sm:$0xf]
      %v1210 = vld [vmem:[%s5 + $0x148] sm:$0xf]
      %v1211 = vld [vmem:[%s5 + $0x14c] sm:$0xf]
      %v1212 = vld [vmem:[%s5 + $0x150] sm:$0xf]
      %v1213 = vld [vmem:[%s5 + $0x154] sm:$0xf]
      %v1214 = vld [vmem:[%s5 + $0x158] sm:$0xf]
      %v1215 = vld [vmem:[%s5 + $0x15c] sm:$0xf]
      %v1216 = vld [vmem:[%s5 + $0x160] sm:$0xf]
      %v1217 = vld [vmem:[%s5 + $0x164] sm:$0xf]
      %v1218 = vld [vmem:[%s5 + $0x168] sm:$0xf]
      %v1219 = vld [vmem:[%s5 + $0x16c] sm:$0xf]
      %v1220 = vld [vmem:[%s5 + $0x170] sm:$0xf]
      %v1221 = vld [vmem:[%s5 + $0x174] sm:$0xf]
      %v1222 = vld [vmem:[%s5 + $0x178] sm:$0xf]
      %v1223 = vld [vmem:[%s5 + $0x17c] sm:$0xf]
      %v1224 = vld [vmem:[%s5 + $0x180] sm:$0xf]
      %v1225 = vld [vmem:[%s5 + $0x184] sm:$0xf]
      %v1226 = vld [vmem:[%s5 + $0x188] sm:$0xf]
      %v1227 = vld [vmem:[%s5 + $0x18c] sm:$0xf]
      %v1228 = vld [vmem:[%s5 + $0x190] sm:$0xf]
      %v1229 = vld [vmem:[%s5 + $0x194] sm:$0xf]
      %v1230 = vld [vmem:[%s5 + $0x198] sm:$0xf]
      %v1231 = vld [vmem:[%s5 + $0x19c] sm:$0xf]
      %v1232 = vld [vmem:[%s5 + $0x1a0] sm:$0xf]
      %v1233 = vld [vmem:[%s5 + $0x1a4] sm:$0xf]
      %v1234 = vld [vmem:[%s5 + $0x1a8] sm:$0xf]
      %v1235 = vld [vmem:[%s5 + $0x1ac] sm:$0xf]
      %v1236 = vld [vmem:[%s5 + $0x1b0] sm:$0xf]
      %v1237 = vld [vmem:[%s5 + $0x1b4] sm:$0xf]
      %v1238 = vld [vmem:[%s5 + $0x1b8] sm:$0xf]
      %v1239 = vld [vmem:[%s5 + $0x1bc] sm:$0xf]
      %v1240 = vld [vmem:[%s5 + $0x1c0] sm:$0xf]
      %v1241 = vld [vmem:[%s5 + $0x1c4] sm:$0xf]
      %v1242 = vld [vmem:[%s5 + $0x1c8] sm:$0xf]
      %v1243 = vld [vmem:[%s5 + $0x1cc] sm:$0xf]
      %v1244 = vld [vmem:[%s5 + $0x1d0] sm:$0xf]
      %v1245 = vld [vmem:[%s5 + $0x1d4] sm:$0xf]
      %v1246 = vld [vmem:[%s5 + $0x1d8] sm:$0xf]
      %v1247 = vld [vmem:[%s5 + $0x1dc] sm:$0xf]
      %v1248 = vld [vmem:[%s5 + $0x1e0] sm:$0xf]
      %v1249 = vld [vmem:[%s5 + $0x1e4] sm:$0xf]
      %v1250 = vld [vmem:[%s5 + $0x1e8] sm:$0xf]
      %v1251 = vld [vmem:[%s5 + $0x1ec] sm:$0xf]
      %v1252 = vld [vmem:[%s5 + $0x1f0] sm:$0xf]
      %v1253 = vld [vmem:[%s5 + $0x1f4] sm:$0xf]
      %v1254 = vld [vmem:[%s5 + $0x1f8] sm:$0xf]
      %v1255 = vld [vmem:[%s5 + $0x1fc] sm:$0xf]
      %v1256 = vld [vmem:[%s5 + $0x200] sm:$0xf]
      %v1257 = vld [vmem:[%s5 + $0x204] sm:$0xf]
      %v1258 = vld [vmem:[%s5 + $0x208] sm:$0xf]
      %v1259 = vld [vmem:[%s5 + $0x20c] sm:$0xf]
      %v1260 = vld [vmem:[%s5 + $0x210] sm:$0xf]
      %v1261 = vld [vmem:[%s5 + $0x214] sm:$0xf]
      %v1262 = vld [vmem:[%s5 + $0x218] sm:$0xf]
      %v1263 = vld [vmem:[%s5 + $0x21c] sm:$0xf]
      %v1264 = vld [vmem:[%s5 + $0x220] sm:$0xf]
      %v1265 = vld [vmem:[%s5 + $0x224] sm:$0xf]
      %v1266 = vld [vmem:[%s5 + $0x228] sm:$0xf]
      %v1267 = vld [vmem:[%s5 + $0x22c] sm:$0xf]
      %v1268 = vld [vmem:[%s5 + $0x230] sm:$0xf]
      %v1269 = vld [vmem:[%s5 + $0x234] sm:$0xf]
      %v1270 = vld [vmem:[%s5 + $0x238] sm:$0xf]
      %v1271 = vld [vmem:[%s5 + $0x23c] sm:$0xf]
      %v1272 = vpack.c.b16 %v714, %v712
      %v1273 = vpack.c.b16 %v1086, %v1080
      %v1274 = vpack.c.b16 %v1087, %v1081
      %v1275 = vpack.c.b16 %v842, %v840
      %v1276 = vpack.c.b16 %v1088, %v1082
      %v1277 = vpack.c.b16 %v1089, %v1083
      %v1278 = vpack.c.b16 %v970, %v968
      %v1279 = vpack.c.b16 %v1090, %v1084
      %v1280 = vpack.c.b16 %v1091, %v1085
      %v1281 = vpack.c.b16 %v718, %v716
      %v1282 = vpack.c.b16 %v1098, %v1092
      %v1283 = vpack.c.b16 %v1099, %v1093
      %v1284 = vpack.c.b16 %v846, %v844
      %v1285 = vpack.c.b16 %v1100, %v1094
      %v1286 = vpack.c.b16 %v1101, %v1095
      %v1287 = vpack.c.b16 %v974, %v972
      %v1288 = vpack.c.b16 %v1102, %v1096
      %v1289 = vpack.c.b16 %v1103, %v1097
      %v1290 = vpack.c.b16 %v722, %v720
      %v1291 = vpack.c.b16 %v1110, %v1104
      %v1292 = vpack.c.b16 %v1111, %v1105
      %v1293 = vpack.c.b16 %v850, %v848
      %v1294 = vpack.c.b16 %v1112, %v1106
      %v1295 = vpack.c.b16 %v1113, %v1107
      %v1296 = vpack.c.b16 %v978, %v976
      %v1297 = vpack.c.b16 %v1114, %v1108
      %v1298 = vpack.c.b16 %v1115, %v1109
      %v1299 = vpack.c.b16 %v726, %v724
      %v1300 = vpack.c.b16 %v1122, %v1116
      %v1301 = vpack.c.b16 %v1123, %v1117
      %v1302 = vpack.c.b16 %v854, %v852
      %v1303 = vpack.c.b16 %v1124, %v1118
      %v1304 = vpack.c.b16 %v1125, %v1119
      %v1305 = vpack.c.b16 %v982, %v980
      %v1306 = vpack.c.b16 %v1126, %v1120
      %v1307 = vpack.c.b16 %v1127, %v1121
      %v1488 = vunpack.c.l.b16 %v1128
      %v1489 = vunpack.c.l.b16 %v1129
      %v1490 = vunpack.c.l.b16 %v1130
      %v1491 = vunpack.c.l.b16 %v1131
      %v1492 = vunpack.c.l.b16 %v1132
      %v1493 = vunpack.c.l.b16 %v1133
      %v1494 = vunpack.c.l.b16 %v1134
      %v1495 = vunpack.c.l.b16 %v1135
      %v1496 = vunpack.c.l.b16 %v1136
      %v1497 = vunpack.c.l.b16 %v1137
      %v1498 = vunpack.c.l.b16 %v1138
      %v1499 = vunpack.c.l.b16 %v1139
      %v1500 = vunpack.c.l.b16 %v1140
      %v1501 = vunpack.c.l.b16 %v1141
      %v1502 = vunpack.c.l.b16 %v1142
      %v1503 = vunpack.c.l.b16 %v1143
      %v1504 = vunpack.c.l.b16 %v1144
      %v1505 = vunpack.c.l.b16 %v1145
      %v1506 = vunpack.c.l.b16 %v1146
      %v1507 = vunpack.c.l.b16 %v1147
      %v1508 = vunpack.c.l.b16 %v1148
      %v1509 = vunpack.c.l.b16 %v1149
      %v1510 = vunpack.c.l.b16 %v1150
      %v1511 = vunpack.c.l.b16 %v1151
      %v1512 = vunpack.c.l.b16 %v1152
      %v1513 = vunpack.c.l.b16 %v1153
      %v1514 = vunpack.c.l.b16 %v1154
      %v1515 = vunpack.c.l.b16 %v1155
      %v1516 = vunpack.c.l.b16 %v1156
      %v1517 = vunpack.c.l.b16 %v1157
      %v1518 = vunpack.c.l.b16 %v1158
      %v1519 = vunpack.c.l.b16 %v1159
      %v1520 = vunpack.c.l.b16 %v1160
      %v1521 = vunpack.c.l.b16 %v1161
      %v1522 = vunpack.c.l.b16 %v1162
      %v1523 = vunpack.c.l.b16 %v1163
      %v1524 = vunpack.c.l.b16 %v1164
      %v1525 = vunpack.c.l.b16 %v1165
      %v1526 = vunpack.c.l.b16 %v1166
      %v1527 = vunpack.c.l.b16 %v1167
      %v1528 = vunpack.c.l.b16 %v1168
      %v1529 = vunpack.c.l.b16 %v1169
      %v1530 = vunpack.c.l.b16 %v1170
      %v1531 = vunpack.c.l.b16 %v1171
      %v1532 = vunpack.c.l.b16 %v1172
      %v1533 = vunpack.c.l.b16 %v1173
      %v1534 = vunpack.c.l.b16 %v1174
      %v1535 = vunpack.c.l.b16 %v1175
      %v1536 = vunpack.c.l.b16 %v1176
      %v1537 = vunpack.c.l.b16 %v1177
      %v1538 = vunpack.c.l.b16 %v1178
      %v1539 = vunpack.c.l.b16 %v1179
      %v1540 = vunpack.c.l.b16 %v1180
      %v1541 = vunpack.c.l.b16 %v1181
      %v1542 = vunpack.c.l.b16 %v1182
      %v1543 = vunpack.c.l.b16 %v1183
      %v1544 = vunpack.c.l.b16 %v1184
      %v1545 = vunpack.c.l.b16 %v1185
      %v1546 = vunpack.c.l.b16 %v1186
      %v1547 = vunpack.c.l.b16 %v1187
      %v1548 = vunpack.c.l.b16 %v1188
      %v1549 = vunpack.c.l.b16 %v1189
      %v1550 = vunpack.c.l.b16 %v1190
      %v1551 = vunpack.c.l.b16 %v1191
      %v1552 = vunpack.c.l.b16 %v1192
      %v1553 = vunpack.c.l.b16 %v1193
      %v1554 = vunpack.c.l.b16 %v1194
      %v1555 = vunpack.c.l.b16 %v1195
      %v1556 = vunpack.c.l.b16 %v1196
      %v1557 = vunpack.c.l.b16 %v1197
      %v1558 = vunpack.c.l.b16 %v1198
      %v1559 = vunpack.c.l.b16 %v1199
      %v1560 = vunpack.c.l.b16 %v1200
      %v1561 = vunpack.c.l.b16 %v1201
      %v1562 = vunpack.c.l.b16 %v1202
      %v1563 = vunpack.c.l.b16 %v1203
      %v1564 = vunpack.c.l.b16 %v1204
      %v1565 = vunpack.c.l.b16 %v1205
      %v1566 = vunpack.c.l.b16 %v1206
      %v1567 = vunpack.c.l.b16 %v1207
      %v1568 = vunpack.c.l.b16 %v1208
      %v1569 = vunpack.c.l.b16 %v1209
      %v1570 = vunpack.c.l.b16 %v1210
      %v1571 = vunpack.c.l.b16 %v1211
      %v1572 = vunpack.c.l.b16 %v1212
      %v1573 = vunpack.c.l.b16 %v1213
      %v1574 = vunpack.c.l.b16 %v1214
      %v1575 = vunpack.c.l.b16 %v1215
      %v1576 = vunpack.c.l.b16 %v1216
      %v1577 = vunpack.c.l.b16 %v1217
      %v1578 = vunpack.c.l.b16 %v1218
      %v1579 = vunpack.c.l.b16 %v1219
      %v1580 = vunpack.c.l.b16 %v1220
      %v1581 = vunpack.c.l.b16 %v1221
      %v1582 = vunpack.c.l.b16 %v1222
      %v1583 = vunpack.c.l.b16 %v1223
      %v1584 = vunpack.c.l.b16 %v1224
      %v1585 = vunpack.c.l.b16 %v1225
      %v1586 = vunpack.c.l.b16 %v1226
      %v1587 = vunpack.c.l.b16 %v1227
      %v1588 = vunpack.c.l.b16 %v1228
      %v1589 = vunpack.c.l.b16 %v1229
      %v1590 = vunpack.c.l.b16 %v1230
      %v1591 = vunpack.c.l.b16 %v1231
      %v1592 = vunpack.c.l.b16 %v1232
      %v1593 = vunpack.c.l.b16 %v1233
      %v1594 = vunpack.c.l.b16 %v1234
      %v1595 = vunpack.c.l.b16 %v1235
      %v1596 = vunpack.c.l.b16 %v1236
      %v1597 = vunpack.c.l.b16 %v1237
      %v1598 = vunpack.c.l.b16 %v1238
      %v1599 = vunpack.c.l.b16 %v1239
      %v1600 = vunpack.c.l.b16 %v1240
      %v1601 = vunpack.c.l.b16 %v1241
      %v1602 = vunpack.c.l.b16 %v1242
      %v1603 = vunpack.c.l.b16 %v1243
      %v1604 = vunpack.c.l.b16 %v1244
      %v1605 = vunpack.c.l.b16 %v1245
      %v1606 = vunpack.c.l.b16 %v1246
      %v1607 = vunpack.c.l.b16 %v1247
      %v1608 = vunpack.c.l.b16 %v1248
      %v1609 = vunpack.c.l.b16 %v1249
      %v1610 = vunpack.c.l.b16 %v1250
      %v1611 = vunpack.c.l.b16 %v1251
      %v1612 = vunpack.c.l.b16 %v1252
      %v1613 = vunpack.c.l.b16 %v1253
      %v1614 = vunpack.c.l.b16 %v1254
      %v1615 = vunpack.c.l.b16 %v1255
      %v1616 = vunpack.c.l.b16 %v1256
      %v1617 = vunpack.c.l.b16 %v1257
      %v1618 = vunpack.c.l.b16 %v1258
      %v1619 = vunpack.c.l.b16 %v1259
      %v1620 = vunpack.c.l.b16 %v1260
      %v1621 = vunpack.c.l.b16 %v1261
      %v1622 = vunpack.c.l.b16 %v1262
      %v1623 = vunpack.c.l.b16 %v1263
      %v1624 = vunpack.c.l.b16 %v1264
      %v1625 = vunpack.c.l.b16 %v1265
      %v1626 = vunpack.c.l.b16 %v1266
      %v1627 = vunpack.c.l.b16 %v1267
      %v1628 = vunpack.c.l.b16 %v1268
      %v1629 = vunpack.c.l.b16 %v1269
      %v1630 = vunpack.c.l.b16 %v1270
      %v1631 = vunpack.c.l.b16 %v1271
      %v1632 = vpack.c.b16 %v1489, %v1488
      %v1633 = vpack.c.b16 %v1491, %v1490
      %v1634 = vpack.c.b16 %v1493, %v1492
      %v1635 = vpack.c.b16 %v1495, %v1494
      %v1636 = vpack.c.b16 %v1497, %v1496
      %v1637 = vpack.c.b16 %v1499, %v1498
      %v1638 = vpack.c.b16 %v1501, %v1500
      %v1639 = vpack.c.b16 %v1503, %v1502
      %v1640 = vpack.c.b16 %v1505, %v1504
      %v1641 = vpack.c.b16 %v1507, %v1506
      %v1642 = vpack.c.b16 %v1509, %v1508
      %v1643 = vpack.c.b16 %v1511, %v1510
      %v1644 = vpack.c.b16 %v1513, %v1512
      %v1645 = vpack.c.b16 %v1515, %v1514
      %v1646 = vpack.c.b16 %v1517, %v1516
      %v1647 = vpack.c.b16 %v1519, %v1518
      %v1648 = vpack.c.b16 %v1521, %v1520
      %v1649 = vpack.c.b16 %v1523, %v1522
      %v1650 = vpack.c.b16 %v1525, %v1524
      %v1651 = vpack.c.b16 %v1527, %v1526
      %v1652 = vpack.c.b16 %v1529, %v1528
      %v1653 = vpack.c.b16 %v1531, %v1530
      %v1654 = vpack.c.b16 %v1533, %v1532
      %v1655 = vpack.c.b16 %v1535, %v1534
      %v1656 = vpack.c.b16 %v1537, %v1536
      %v1657 = vpack.c.b16 %v1539, %v1538
      %v1658 = vpack.c.b16 %v1541, %v1540
      %v1659 = vpack.c.b16 %v1543, %v1542
      %v1660 = vpack.c.b16 %v1545, %v1544
      %v1661 = vpack.c.b16 %v1547, %v1546
      %v1662 = vpack.c.b16 %v1549, %v1548
      %v1663 = vpack.c.b16 %v1551, %v1550
      %v1664 = vpack.c.b16 %v1553, %v1552
      %v1665 = vpack.c.b16 %v1555, %v1554
      %v1666 = vpack.c.b16 %v1557, %v1556
      %v1667 = vpack.c.b16 %v1559, %v1558
      %v1668 = vpack.c.b16 %v1561, %v1560
      %v1669 = vpack.c.b16 %v1563, %v1562
      %v1670 = vpack.c.b16 %v1565, %v1564
      %v1671 = vpack.c.b16 %v1567, %v1566
      %v1672 = vpack.c.b16 %v1569, %v1568
      %v1673 = vpack.c.b16 %v1571, %v1570
      %v1674 = vpack.c.b16 %v1573, %v1572
      %v1675 = vpack.c.b16 %v1575, %v1574
      %v1676 = vpack.c.b16 %v1577, %v1576
      %v1677 = vpack.c.b16 %v1579, %v1578
      %v1678 = vpack.c.b16 %v1581, %v1580
      %v1679 = vpack.c.b16 %v1583, %v1582
      %v1680 = vpack.c.b16 %v1585, %v1584
      %v1681 = vpack.c.b16 %v1587, %v1586
      %v1682 = vpack.c.b16 %v1589, %v1588
      %v1683 = vpack.c.b16 %v1591, %v1590
      %v1684 = vpack.c.b16 %v1593, %v1592
      %v1685 = vpack.c.b16 %v1595, %v1594
      %v1686 = vpack.c.b16 %v1597, %v1596
      %v1687 = vpack.c.b16 %v1599, %v1598
      %v1688 = vpack.c.b16 %v1601, %v1600
      %v1689 = vpack.c.b16 %v1603, %v1602
      %v1690 = vpack.c.b16 %v1605, %v1604
      %v1691 = vpack.c.b16 %v1607, %v1606
      %v1692 = vpack.c.b16 %v1609, %v1608
      %v1693 = vpack.c.b16 %v1611, %v1610
      %v1694 = vpack.c.b16 %v1613, %v1612
      %v1695 = vpack.c.b16 %v1615, %v1614
      %v1696 = vpack.c.b16 %v1617, %v1616
      %v1697 = vpack.c.b16 %v1619, %v1618
      %v1698 = vpack.c.b16 %v1621, %v1620
      %v1699 = vpack.c.b16 %v1623, %v1622
      %v1700 = vpack.c.b16 %v1625, %v1624
      %v1701 = vpack.c.b16 %v1627, %v1626
      %v1702 = vpack.c.b16 %v1629, %v1628
      %v1703 = vpack.c.b16 %v1631, %v1630
      %1776 = vmatprep.subr.bf16.mxu0 0
      %1777 = vmatpush1.bf16.msra.mxu0 %v1639
      %1778 = vmatprep.subr.bf16.mxu0 0
      %1779 = vmatpush1.bf16.msra.mxu0 %v1638
      %1780 = vmatprep.subr.bf16.mxu0 0
      %1781 = vmatpush1.bf16.msra.mxu0 %v1637
      %1782 = vmatprep.subr.bf16.mxu0 0
      %1783 = vmatpush1.bf16.msra.mxu0 %v1636
      %1784 = vmatprep.subr.bf16.mxu0 0
      %1785 = vmatpush1.bf16.msra.mxu0 %v1635
      %1786 = vmatprep.subr.bf16.mxu0 0
      %1787 = vmatpush1.bf16.msra.mxu0 %v1634
      %1788 = vmatprep.subr.bf16.mxu0 0
      %1789 = vmatpush1.bf16.msra.mxu0 %v1633
      %1790 = vmatprep.subr.bf16.mxu0 0
      %1791 = vmatpush1.bf16.msra.mxu0 %v1632
      %1792 = vmatprep.subr.bf16.mxu0 0
      %1793 = vmatpush2.bf16.msra.mxu0 %v1647
      %1794 = vmatprep.subr.bf16.mxu0 0
      %1795 = vmatpush2.bf16.msra.mxu0 %v1646
      %1796 = vmatprep.subr.bf16.mxu0 0
      %1797 = vmatpush2.bf16.msra.mxu0 %v1645
      %1798 = vmatprep.subr.bf16.mxu0 0
      %1799 = vmatpush2.bf16.msra.mxu0 %v1644
      %1800 = vmatprep.subr.bf16.mxu0 0
      %1801 = vmatpush2.bf16.msra.mxu0 %v1643
      %1802 = vmatprep.subr.bf16.mxu0 0
      %1803 = vmatpush2.bf16.msra.mxu0 %v1642
      %1804 = vmatprep.subr.bf16.mxu0 0
      %1805 = vmatpush2.bf16.msra.mxu0 %v1641
      %1806 = vmatprep.subr.bf16.mxu0 0
      %1807 = vmatpush2.bf16.msra.mxu0 %v1640
      %1808 = vmatprep.mubr.bf16.mxu0 %v1273
      %1809 = vmatmul.mubr.bf16.gmra.mxu0 %v1272
      %v1810 = vpop.f32.mrf.mxu0
      %v1811 = vadd.f32 0.0, %v1810
      %v1812 = vpop.f32.mrf.mxu0
      %v1813 = vpop.f32.mrf.mxu0
      %v1814 = vadd.f32 0.0, %v1813
      %v1815 = vpop.f32.mrf.mxu0
      %1816 = vmatprep.mubr.bf16.mxu0 %v1282
      %1817 = vmatmul.mubr.bf16.gmra.mxu0 %v1281
      %v1818 = vpop.f32.mrf.mxu0
      %v1819 = vadd.f32 0.0, %v1818
      %v1820 = vpop.f32.mrf.mxu0
      %v1821 = vpop.f32.mrf.mxu0
      %v1822 = vadd.f32 0.0, %v1821
      %v1823 = vpop.f32.mrf.mxu0
      %1824 = vmatprep.mubr.bf16.mxu0 %v1291
      %1825 = vmatmul.mubr.bf16.gmra.mxu0 %v1290
      %v1826 = vpop.f32.mrf.mxu0
      %v1827 = vadd.f32 0.0, %v1826
      %v1828 = vpop.f32.mrf.mxu0
      %v1829 = vpop.f32.mrf.mxu0
      %v1830 = vadd.f32 0.0, %v1829
      %v1831 = vpop.f32.mrf.mxu0
      %1832 = vmatprep.mubr.bf16.mxu0 %v1300
      %1833 = vmatmul.mubr.bf16.gmra.mxu0 %v1299
      %v1834 = vpop.f32.mrf.mxu0
      %v1835 = vadd.f32 0.0, %v1834
      %v1836 = vpop.f32.mrf.mxu0
      %v1837 = vpop.f32.mrf.mxu0
      %v1838 = vadd.f32 0.0, %v1837
      %v1839 = vpop.f32.mrf.mxu0
      %1840 = vdwg.mxu0
      %1841 = vmatprep.subr.bf16.mxu0 0
      %1842 = vmatpush1.bf16.msra.mxu0 %v1655
      %1843 = vmatprep.subr.bf16.mxu0 0
      %1844 = vmatpush1.bf16.msra.mxu0 %v1654
      %1845 = vmatprep.subr.bf16.mxu0 0
      %1846 = vmatpush1.bf16.msra.mxu0 %v1653
      %1847 = vmatprep.subr.bf16.mxu0 0
      %1848 = vmatpush1.bf16.msra.mxu0 %v1652
      %1849 = vmatprep.subr.bf16.mxu0 0
      %1850 = vmatpush1.bf16.msra.mxu0 %v1651
      %1851 = vmatprep.subr.bf16.mxu0 0
      %1852 = vmatpush1.bf16.msra.mxu0 %v1650
      %1853 = vmatprep.subr.bf16.mxu0 0
      %1854 = vmatpush1.bf16.msra.mxu0 %v1649
      %1855 = vmatprep.subr.bf16.mxu0 0
      %1856 = vmatpush1.bf16.msra.mxu0 %v1648
      %1857 = vmatprep.subr.bf16.mxu0 0
      %1858 = vmatpush2.bf16.msra.mxu0 %v1663
      %1859 = vmatprep.subr.bf16.mxu0 0
      %1860 = vmatpush2.bf16.msra.mxu0 %v1662
      %1861 = vmatprep.subr.bf16.mxu0 0
      %1862 = vmatpush2.bf16.msra.mxu0 %v1661
      %1863 = vmatprep.subr.bf16.mxu0 0
      %1864 = vmatpush2.bf16.msra.mxu0 %v1660
      %1865 = vmatprep.subr.bf16.mxu0 0
      %1866 = vmatpush2.bf16.msra.mxu0 %v1659
      %1867 = vmatprep.subr.bf16.mxu0 0
      %1868 = vmatpush2.bf16.msra.mxu0 %v1658
      %1869 = vmatprep.subr.bf16.mxu0 0
      %1870 = vmatpush2.bf16.msra.mxu0 %v1657
      %1871 = vmatprep.subr.bf16.mxu0 0
      %1872 = vmatpush2.bf16.msra.mxu0 %v1656
      %1873 = vmatprep.mubr.bf16.mxu0 %v1275
      %1874 = vmatmul.mubr.bf16.gmra.mxu0 %v1274
      %v1875 = vpop.f32.mrf.mxu0
      %v1876 = vadd.f32 %v1811, %v1875
      %v1877 = vpop.f32.mrf.mxu0
      %v1878 = vpop.f32.mrf.mxu0
      %v1879 = vadd.f32 %v1814, %v1878
      %v1880 = vpop.f32.mrf.mxu0
      %1881 = vmatprep.mubr.bf16.mxu0 %v1284
      %1882 = vmatmul.mubr.bf16.gmra.mxu0 %v1283
      %v1883 = vpop.f32.mrf.mxu0
      %v1884 = vadd.f32 %v1819, %v1883
      %v1885 = vpop.f32.mrf.mxu0
      %v1886 = vpop.f32.mrf.mxu0
      %v1887 = vadd.f32 %v1822, %v1886
      %v1888 = vpop.f32.mrf.mxu0
      %1889 = vmatprep.mubr.bf16.mxu0 %v1293
      %1890 = vmatmul.mubr.bf16.gmra.mxu0 %v1292
      %v1891 = vpop.f32.mrf.mxu0
      %v1892 = vadd.f32 %v1827, %v1891
      %v1893 = vpop.f32.mrf.mxu0
      %v1894 = vpop.f32.mrf.mxu0
      %v1895 = vadd.f32 %v1830, %v1894
      %v1896 = vpop.f32.mrf.mxu0
      %1897 = vmatprep.mubr.bf16.mxu0 %v1302
      %1898 = vmatmul.mubr.bf16.gmra.mxu0 %v1301
      %v1899 = vpop.f32.mrf.mxu0
      %v1900 = vadd.f32 %v1835, %v1899
      %v1901 = vpop.f32.mrf.mxu0
      %v1902 = vpop.f32.mrf.mxu0
      %v1903 = vadd.f32 %v1838, %v1902
      %v1904 = vpop.f32.mrf.mxu0
      %1905 = vdwg.mxu0
      %1906 = vmatprep.subr.bf16.mxu0 0
      %1907 = vmatpush1.bf16.msra.mxu0 %v1671
      %1908 = vmatprep.subr.bf16.mxu0 0
      %1909 = vmatpush1.bf16.msra.mxu0 %v1670
      %1910 = vmatprep.subr.bf16.mxu0 0
      %1911 = vmatpush1.bf16.msra.mxu0 %v1669
      %1912 = vmatprep.subr.bf16.mxu0 0
      %1913 = vmatpush1.bf16.msra.mxu0 %v1668
      %1914 = vmatprep.subr.bf16.mxu0 0
      %1915 = vmatpush1.bf16.msra.mxu0 %v1667
      %1916 = vmatprep.subr.bf16.mxu0 0
      %1917 = vmatpush1.bf16.msra.mxu0 %v1666
      %1918 = vmatprep.subr.bf16.mxu0 0
      %1919 = vmatpush1.bf16.msra.mxu0 %v1665
      %1920 = vmatprep.subr.bf16.mxu0 0
      %1921 = vmatpush1.bf16.msra.mxu0 %v1664
      %1922 = vmatprep.subr.bf16.mxu0 0
      %1923 = vmatpush2.bf16.msra.mxu0 %v1679
      %1924 = vmatprep.subr.bf16.mxu0 0
      %1925 = vmatpush2.bf16.msra.mxu0 %v1678
      %1926 = vmatprep.subr.bf16.mxu0 0
      %1927 = vmatpush2.bf16.msra.mxu0 %v1677
      %1928 = vmatprep.subr.bf16.mxu0 0
      %1929 = vmatpush2.bf16.msra.mxu0 %v1676
      %1930 = vmatprep.subr.bf16.mxu0 0
      %1931 = vmatpush2.bf16.msra.mxu0 %v1675
      %1932 = vmatprep.subr.bf16.mxu0 0
      %1933 = vmatpush2.bf16.msra.mxu0 %v1674
      %1934 = vmatprep.subr.bf16.mxu0 0
      %1935 = vmatpush2.bf16.msra.mxu0 %v1673
      %1936 = vmatprep.subr.bf16.mxu0 0
      %1937 = vmatpush2.bf16.msra.mxu0 %v1672
      %1938 = vmatprep.mubr.bf16.mxu0 %v1277
      %1939 = vmatmul.mubr.bf16.gmra.mxu0 %v1276
      %v1940 = vpop.f32.mrf.mxu0
      %v1941 = vadd.f32 %v1876, %v1940
      %v1942 = vpop.f32.mrf.mxu0
      %v1943 = vpop.f32.mrf.mxu0
      %v1944 = vadd.f32 %v1879, %v1943
      %v1945 = vpop.f32.mrf.mxu0
      %1946 = vmatprep.mubr.bf16.mxu0 %v1286
      %1947 = vmatmul.mubr.bf16.gmra.mxu0 %v1285
      %v1948 = vpop.f32.mrf.mxu0
      %v1949 = vadd.f32 %v1884, %v1948
      %v1950 = vpop.f32.mrf.mxu0
      %v1951 = vpop.f32.mrf.mxu0
      %v1952 = vadd.f32 %v1887, %v1951
      %v1953 = vpop.f32.mrf.mxu0
      %1954 = vmatprep.mubr.bf16.mxu0 %v1295
      %1955 = vmatmul.mubr.bf16.gmra.mxu0 %v1294
      %v1956 = vpop.f32.mrf.mxu0
      %v1957 = vadd.f32 %v1892, %v1956
      %v1958 = vpop.f32.mrf.mxu0
      %v1959 = vpop.f32.mrf.mxu0
      %v1960 = vadd.f32 %v1895, %v1959
      %v1961 = vpop.f32.mrf.mxu0
      %1962 = vmatprep.mubr.bf16.mxu0 %v1304
      %1963 = vmatmul.mubr.bf16.gmra.mxu0 %v1303
      %v1964 = vpop.f32.mrf.mxu0
      %v1965 = vadd.f32 %v1900, %v1964
      %v1966 = vpop.f32.mrf.mxu0
      %v1967 = vpop.f32.mrf.mxu0
      %v1968 = vadd.f32 %v1903, %v1967
      %v1969 = vpop.f32.mrf.mxu0
      %1970 = vdwg.mxu0
      %1971 = vmatprep.subr.bf16.mxu0 0
      %1972 = vmatpush1.bf16.msra.mxu0 %v1687
      %1973 = vmatprep.subr.bf16.mxu0 0
      %1974 = vmatpush1.bf16.msra.mxu0 %v1686
      %1975 = vmatprep.subr.bf16.mxu0 0
      %1976 = vmatpush1.bf16.msra.mxu0 %v1685
      %1977 = vmatprep.subr.bf16.mxu0 0
      %1978 = vmatpush1.bf16.msra.mxu0 %v1684
      %1979 = vmatprep.subr.bf16.mxu0 0
      %1980 = vmatpush1.bf16.msra.mxu0 %v1683
      %1981 = vmatprep.subr.bf16.mxu0 0
      %1982 = vmatpush1.bf16.msra.mxu0 %v1682
      %1983 = vmatprep.subr.bf16.mxu0 0
      %1984 = vmatpush1.bf16.msra.mxu0 %v1681
      %1985 = vmatprep.subr.bf16.mxu0 0
      %1986 = vmatpush1.bf16.msra.mxu0 %v1680
      %1987 = vmatprep.subr.bf16.mxu0 0
      %1988 = vmatpush2.bf16.msra.mxu0 %v1695
      %1989 = vmatprep.subr.bf16.mxu0 0
      %1990 = vmatpush2.bf16.msra.mxu0 %v1694
      %1991 = vmatprep.subr.bf16.mxu0 0
      %1992 = vmatpush2.bf16.msra.mxu0 %v1693
      %1993 = vmatprep.subr.bf16.mxu0 0
      %1994 = vmatpush2.bf16.msra.mxu0 %v1692
      %1995 = vmatprep.subr.bf16.mxu0 0
      %1996 = vmatpush2.bf16.msra.mxu0 %v1691
      %1997 = vmatprep.subr.bf16.mxu0 0
      %1998 = vmatpush2.bf16.msra.mxu0 %v1690
      %1999 = vmatprep.subr.bf16.mxu0 0
      %2000 = vmatpush2.bf16.msra.mxu0 %v1689
      %2001 = vmatprep.subr.bf16.mxu0 0
      %2002 = vmatpush2.bf16.msra.mxu0 %v1688
      %2003 = vmatprep.mubr.bf16.mxu0 %v1279
      %2004 = vmatmul.mubr.bf16.gmra.mxu0 %v1278
      %v2005 = vpop.f32.mrf.mxu0
      %v2006 = vadd.f32 %v1941, %v2005
      %v2007 = vpop.f32.mrf.mxu0
      %v2008 = vpop.f32.mrf.mxu0
      %v2009 = vadd.f32 %v1944, %v2008
      %v2010 = vpop.f32.mrf.mxu0
      %2011 = vmatprep.mubr.bf16.mxu0 %v1288
      %2012 = vmatmul.mubr.bf16.gmra.mxu0 %v1287
      %v2013 = vpop.f32.mrf.mxu0
      %v2014 = vadd.f32 %v1949, %v2013
      %v2015 = vpop.f32.mrf.mxu0
      %v2016 = vpop.f32.mrf.mxu0
      %v2017 = vadd.f32 %v1952, %v2016
      %v2018 = vpop.f32.mrf.mxu0
      %2019 = vmatprep.mubr.bf16.mxu0 %v1297
      %2020 = vmatmul.mubr.bf16.gmra.mxu0 %v1296
      %v2021 = vpop.f32.mrf.mxu0
      %v2022 = vadd.f32 %v1957, %v2021
      %v2023 = vpop.f32.mrf.mxu0
      %v2024 = vpop.f32.mrf.mxu0
      %v2025 = vadd.f32 %v1960, %v2024
      %v2026 = vpop.f32.mrf.mxu0
      %2027 = vmatprep.mubr.bf16.mxu0 %v1306
      %2028 = vmatmul.mubr.bf16.gmra.mxu0 %v1305
      %v2029 = vpop.f32.mrf.mxu0
      %v2030 = vadd.f32 %v1965, %v2029
      %v2031 = vpop.f32.mrf.mxu0
      %v2032 = vpop.f32.mrf.mxu0
      %v2033 = vadd.f32 %v1968, %v2032
      %v2034 = vpop.f32.mrf.mxu0
      %2035 = vdwg.mxu0
      %2036 = vmatprep.subr.bf16.mxu0 0
      %2037 = vmatpush1.bf16.msra.mxu0 %v1703
      %2038 = vmatprep.subr.bf16.mxu0 0
      %2039 = vmatpush1.bf16.msra.mxu0 %v1702
      %2040 = vmatprep.subr.bf16.mxu0 0
      %2041 = vmatpush1.bf16.msra.mxu0 %v1701
      %2042 = vmatprep.subr.bf16.mxu0 0
      %2043 = vmatpush1.bf16.msra.mxu0 %v1700
      %2044 = vmatprep.subr.bf16.mxu0 0
      %2045 = vmatpush1.bf16.msra.mxu0 %v1699
      %2046 = vmatprep.subr.bf16.mxu0 0
      %2047 = vmatpush1.bf16.msra.mxu0 %v1698
      %2048 = vmatprep.subr.bf16.mxu0 0
      %2049 = vmatpush1.bf16.msra.mxu0 %v1697
      %2050 = vmatprep.subr.bf16.mxu0 0
      %2051 = vmatpush1.bf16.msra.mxu0 %v1696
      %2052 = vmatprep.subr.bf16.mxu0 0
      %2053 = vmatpush2.bf16.msra.mxu0 0
      %2054 = vmatprep.subr.bf16.mxu0 0
      %2055 = vmatpush2.bf16.msra.mxu0 0
      %2056 = vmatprep.subr.bf16.mxu0 0
      %2057 = vmatpush2.bf16.msra.mxu0 0
      %2058 = vmatprep.subr.bf16.mxu0 0
      %2059 = vmatpush2.bf16.msra.mxu0 0
      %2060 = vmatprep.subr.bf16.mxu0 0
      %2061 = vmatpush2.bf16.msra.mxu0 0
      %2062 = vmatprep.subr.bf16.mxu0 0
      %2063 = vmatpush2.bf16.msra.mxu0 0
      %2064 = vmatprep.subr.bf16.mxu0 0
      %2065 = vmatpush2.bf16.msra.mxu0 0
      %2066 = vmatprep.subr.bf16.mxu0 0
      %2067 = vmatpush2.bf16.msra.mxu0 0
      %2068 = vmatprep.mubr.bf16.mxu0 0
      %2069 = vmatmul.mubr.bf16.gmra.mxu0 %v1280
      %v2070 = vpop.f32.mrf.mxu0
      %v2071 = vadd.f32 %v2006, %v2070
      %v2072 = vpop.f32.mrf.mxu0
      %v2073 = vpop.f32.mrf.mxu0
      %v2074 = vadd.f32 %v2009, %v2073
      %v2075 = vpop.f32.mrf.mxu0
      %2076 = vmatprep.mubr.bf16.mxu0 0
      %2077 = vmatmul.mubr.bf16.gmra.mxu0 %v1289
      %v2078 = vpop.f32.mrf.mxu0
      %v2079 = vadd.f32 %v2014, %v2078
      %v2080 = vpop.f32.mrf.mxu0
      %v2081 = vpop.f32.mrf.mxu0
      %v2082 = vadd.f32 %v2017, %v2081
      %v2083 = vpop.f32.mrf.mxu0
      %2084 = vmatprep.mubr.bf16.mxu0 0
      %2085 = vmatmul.mubr.bf16.gmra.mxu0 %v1298
      %v2086 = vpop.f32.mrf.mxu0
      %v2087 = vadd.f32 %v2022, %v2086
      %v2088 = vpop.f32.mrf.mxu0
      %v2089 = vpop.f32.mrf.mxu0
      %v2090 = vadd.f32 %v2025, %v2089
      %v2091 = vpop.f32.mrf.mxu0
      %2092 = vmatprep.mubr.bf16.mxu0 0
      %2093 = vmatmul.mubr.bf16.gmra.mxu0 %v1307
      %v2094 = vpop.f32.mrf.mxu0
      %v2095 = vadd.f32 %v2030, %v2094
      %v2096 = vpop.f32.mrf.mxu0
      %v2097 = vpop.f32.mrf.mxu0
      %v2098 = vadd.f32 %v2033, %v2097
      %v2099 = vpop.f32.mrf.mxu0
      %2100 = vdwg.mxu0
      %v2101 = vpack.c.bf16 %v2074, %v2071
      %v2102 = vpack.c.bf16 %v2082, %v2079
      %v2103 = vpack.c.bf16 %v2090, %v2087
      %v2104 = vpack.c.bf16 %v2098, %v2095
      %v2109 = vunpack.c.l.b16 %v2101
      %v2110 = vunpack.c.h.b16 %v2101
      %v2111 = vunpack.c.l.b16 %v2102
      %v2112 = vunpack.c.h.b16 %v2102
      %v2113 = vunpack.c.l.b16 %v2103
      %v2114 = vunpack.c.h.b16 %v2103
      %v2115 = vunpack.c.l.b16 %v2104
      %v2116 = vunpack.c.h.b16 %v2104
      %v2117 = vpack.c.b16 %v2109, %v2109
      %v2118 = vpack.c.b16 %v2110, %v2110
      %v2119 = vpack.c.b16 %v2111, %v2111
      %v2120 = vpack.c.b16 %v2112, %v2112
      %v2121 = vpack.c.b16 %v2113, %v2113
      %v2122 = vpack.c.b16 %v2114, %v2114
      %v2123 = vpack.c.b16 %v2115, %v2115
      %v2124 = vpack.c.b16 %v2116, %v2116
      %2133 = vst [vmem:[%s316] sm:$0xf] %v2117
      %2134 = vst [vmem:[%s316 + $0x4] sm:$0xf] %v2118
      %2135 = vst [vmem:[%s316 + $0x8] sm:$0xf] %v2119
      %2136 = vst [vmem:[%s316 + $0xc] sm:$0xf] %v2120
      %2137 = vst [vmem:[%s316 + $0x10] sm:$0xf] %v2121
      %2138 = vst [vmem:[%s316 + $0x14] sm:$0xf] %v2122
      %2139 = vst [vmem:[%s316 + $0x18] sm:$0xf] %v2123
      %2140 = vst [vmem:[%s316 + $0x1c] sm:$0xf] %v2124
      %v2141 = vadd.f32 %v2071, %v2074
      %v2142 = vadd.f32 %v2141, %v2079
      %v2143 = vadd.f32 %v2142, %v2082
      %v2144 = vadd.f32 %v2143, %v2087
      %v2145 = vadd.f32 %v2144, %v2090
      %v2146 = vadd.f32 %v2145, %v2095
      %v2147 = vadd.f32 %v2146, %v2098
      %v2148 = vrot.slane %v2147, 4
      %v2149 = vadd.f32 %v2147, %v2148
      %v2150 = vrot.slane %v2149, 2
      %v2151 = vadd.f32 %v2149, %v2150
      %v2152 = vrot.slane %v2151, 1
      %v2153 = vadd.f32 %v2151, %v2152
      %2154 = vst [vmem:[%s319] sm:$0x1] %v2153
      %v2155 = vmul.f32 %v2071, %v2071
      %v2156 = vmul.f32 %v2074, %v2074
      %v2157 = vmul.f32 %v2079, %v2079
      %v2158 = vmul.f32 %v2082, %v2082
      %v2159 = vmul.f32 %v2087, %v2087
      %v2160 = vmul.f32 %v2090, %v2090
      %v2161 = vmul.f32 %v2095, %v2095
      %v2162 = vmul.f32 %v2098, %v2098
      %v2163 = vadd.f32 %v2155, %v2156
      %v2164 = vadd.f32 %v2163, %v2157
      %v2165 = vadd.f32 %v2164, %v2158
      %v2166 = vadd.f32 %v2165, %v2159
      %v2167 = vadd.f32 %v2166, %v2160
      %v2168 = vadd.f32 %v2167, %v2161
      %v2169 = vadd.f32 %v2168, %v2162
      %v2170 = vrot.slane %v2169, 4
      %v2171 = vadd.f32 %v2169, %v2170
      %v2172 = vrot.slane %v2171, 2
      %v2173 = vadd.f32 %v2171, %v2172
      %v2174 = vrot.slane %v2173, 1
      %v2175 = vadd.f32 %v2173, %v2174
      %2176 = vst [vmem:[%s322] sm:$0x1] %v2175
      %p2177 = scmp.lt.s32.totalorder %s20, 1
      %s2178 = scalar_select %p2177, %s20, 1
      %s2179 = smul.addr %s2178, 8
      %s2180 = smul.addr %s2179, 4
      %s2181 = scalar_lea.vmem %s6, %s2180
      %p2182 = scmp.lt.s32.totalorder %s20, 1
      %s2183 = scalar_select %p2182, %s20, 1
      %s2184 = scalar_lea.vmem %s7, %s2183
      %p2185 = scmp.lt.s32.totalorder %s20, 1
      %s2186 = scalar_select %p2185, %s20, 1
      %s2187 = scalar_lea.vmem %s8, %s2186
      // Predicated region
      $region45: #{basic_block_forward.4} parent=43 // pred_check
        %p2188 = pneg %p169
      $region46: #{basic_block_forward.4} parent=43 // pred_check_branch
        %2190 = sbr.rel (%p2188) target = $region48
      $region47: #{basic_block_forward.4} parent=43 // pred_region
        _
      $region48: #{basic_block_forward.4} parent=43 // pred_fallthru
        _
      // Predicated region
      $region49: #{basic_block_forward.4} parent=43 // pred_check
        %p2191 = pneg %p195
      $region50: #{basic_block_forward.4} parent=43 // pred_check_branch
        %2193 = sbr.rel (%p2191) target = $region52
      $region51: #{basic_block_forward.4} parent=43 // pred_region
        _
      $region52: #{basic_block_forward.4} parent=43 // pred_fallthru
        _
      // Predicated region
      $region53: #{basic_block_forward.4} parent=43 // pred_check
        %p2194 = pneg %p221
      $region54: #{basic_block_forward.4} parent=43 // pred_check_branch
        %2196 = sbr.rel (%p2194) target = $region56
      $region55: #{basic_block_forward.4} parent=43 // pred_region
        _
      $region56: #{basic_block_forward.4} parent=43 // pred_fallthru
        _
    $region44: #{basic_block_forward.4} parent=5 // pred_fallthru
      _
    %p2197 = scmp.le.s32.totalorder 2, %s15
    // Predicated region
    $region57: #{basic_block_forward.4} parent=5 // pred_check
      %p2198 = pneg %p2197
    $region58: #{basic_block_forward.4} parent=5 // pred_check_branch
      %2200 = sbr.rel (%p2198) target = $region60
    $region59: #{basic_block_forward.4} parent=5 // pred_region
      %s2201 = ssub.s32 %s15, 2
      // Predicated region
      $region61: #{basic_block_forward.4} parent=59 // pred_check
        %p2202 = pneg %p175
      $region62: #{basic_block_forward.4} parent=59 // pred_check_branch
        %2204 = sbr.rel (%p2202) target = $region64
      $region63: #{basic_block_forward.4} parent=59 // pred_region
        %p2205 = scmp.lt.s32.totalorder %s21, 1
        %s2206 = scalar_select %p2205, %s21, 1
        %s2207 = smul.addr %s2206, 8
        %s2208 = smul.addr %s2207, 4
        %s2209 = scalar_lea.vmem %s6, %s2208
      $region64: #{basic_block_forward.4} parent=59 // pred_fallthru
        _
      // Predicated region
      $region65: #{basic_block_forward.4} parent=59 // pred_check
        %p2210 = pneg %p201
      $region66: #{basic_block_forward.4} parent=59 // pred_check_branch
        %2212 = sbr.rel (%p2210) target = $region68
      $region67: #{basic_block_forward.4} parent=59 // pred_region
        %p2213 = scmp.lt.s32.totalorder %s21, 1
        %s2214 = scalar_select %p2213, %s21, 1
        %s2215 = scalar_lea.vmem %s7, %s2214
      $region68: #{basic_block_forward.4} parent=59 // pred_fallthru
        _
      // Predicated region
      $region69: #{basic_block_forward.4} parent=59 // pred_check
        %p2216 = pneg %p227
      $region70: #{basic_block_forward.4} parent=59 // pred_check_branch
        %2218 = sbr.rel (%p2216) target = $region72
      $region71: #{basic_block_forward.4} parent=59 // pred_region
        %p2219 = scmp.lt.s32.totalorder %s21, 1
        %s2220 = scalar_select %p2219, %s21, 1
        %s2221 = scalar_lea.vmem %s8, %s2220
      $region72: #{basic_block_forward.4} parent=59 // pred_fallthru
        _
    $region60: #{basic_block_forward.4} parent=5 // pred_fallthru
      _
  $region6: #{basic_block_forward.4} parent=0 // loop_footer
    %s19 = sadd.s32 1, %s15
  $region7: #{basic_block_forward.4} parent=0 // loop_footer_branch
    %14 = sbr.rel target = $region3
  $region8: #{basic_block_forward.4} parent=0 // loop_exit
    _

</llo_original>
